<compile_context>
chip_gen: v7x
topology: tpu7x:2x2x1
jax: 0.10.0
libtpu: 0.0.40
codegen_flags: <defaults>
</compile_context>

<pallas_src>
import jax
import jax.numpy as jnp
from jax import lax
from jax.experimental import pallas as pl
from jax.experimental.pallas import tpu as pltpu


def rnn_encoder_kernel(mask_ref, maskg_ref, x_ref,
                       wih_ref, bih_ref, whh_f_ref, whh_b_ref,
                       bhnf_ref, bhnb_ref,
                       waf_ref, wab_ref, battn_ref, vctx_ref,
                       rvw_ref, attn_ref,
                       gx_ref, outf_ref, outb_ref):
    T, Bb, E = x_ref.shape
    H = whh_f_ref.shape[0]
    H3 = 3 * H

    # ---- (1) hoisted input projection: one big matmul off the serial chain ----
    x2 = x_ref[...].reshape(T * Bb, E)
    gx = jnp.dot(x2, wih_ref[...], preferred_element_type=jnp.float32) + bih_ref[...]
    gx_ref[...] = gx.reshape(T, Bb, 2 * H3)          # [:, :, :3H] fwd, [:, :, 3H:] bwd

    whh_f = whh_f_ref[...]
    whh_b = whh_b_ref[...]
    # hoisted bias broadcasts (JAX does not CSE broadcast_in_dim inside loops)
    bhn_f = jnp.broadcast_to(bhnf_ref[...], (Bb, H))
    bhn_b = jnp.broadcast_to(bhnb_ref[...], (Bb, H))

    def gru_step(h, gx_t, m_t, whh, bhn):
        gh = jnp.dot(h, whh, preferred_element_type=jnp.float32)        # (Bb, 3H)
        r = jax.nn.sigmoid(gx_t[:, 0:H] + gh[:, 0:H])
        z = jax.nn.sigmoid(gx_t[:, H:2 * H] + gh[:, H:2 * H])
        n = jnp.tanh(gx_t[:, 2 * H:H3] + r * (gh[:, 2 * H:H3] + bhn))
        h_new = (1.0 - z) * n + z * h
        # mask-gated update: padded steps leave the hidden state unchanged.
        return m_t * h_new + (1.0 - m_t) * h

    # ---- (2) fused fwd/bwd recurrence, unrolled: 2 independent chains / iter --
    def body(i, carry):
        h_f, h_b = carry
        tb = T - 1 - i
        m_f = maskg_ref[i]                            # (Bb, 1)
        m_b = maskg_ref[tb]
        h_f = gru_step(h_f, gx_ref[i, :, 0:H3], m_f, whh_f, bhn_f)
        h_b = gru_step(h_b, gx_ref[tb, :, H3:2 * H3], m_b, whh_b, bhn_b)
        outf_ref[i] = h_f * m_f                       # zero padded outputs
        outb_ref[tb] = h_b * m_b
        return (h_f, h_b)

    h0 = jnp.zeros((Bb, H), jnp.float32)
    lax.fori_loop(0, T, body, (h0, h0), unroll=True)

    # ---- (3) inner attention: no 2H concat, no N=1 matmul ---------------------
    # Load the recurrence outputs from scratch exactly once; reuse below.
    out_f = outf_ref[...]                                                 # (T, Bb, H)
    out_b = outb_ref[...]
    u = jnp.tanh(jnp.dot(out_f.reshape(T * Bb, H), waf_ref[...],
                         preferred_element_type=jnp.float32)
                 + jnp.dot(out_b.reshape(T * Bb, H), wab_ref[...],
                           preferred_element_type=jnp.float32)
                 + battn_ref[...])                                        # (T*Bb, 2H)
    u3 = u.reshape(T, Bb, 2 * H)
    score = jnp.sum(u3 * vctx_ref[...], axis=-1)                          # (T, Bb)

    mask = mask_ref[...]                                                  # (T, Bb)
    score = jnp.where(mask > 0.0, score, -1e30)
    score = score - jnp.max(score, axis=0, keepdims=True)
    e = jnp.exp(score)
    attn = e / jnp.sum(e, axis=0, keepdims=True)                          # (T, Bb)

    # rvw_vcts[:, :H] + rvw_vcts[:, H:]  ==  sum_t attn_t * (h_fwd_t + h_bwd_t)
    rvw_ref[...] = jnp.sum(attn[:, :, None] * (out_f + out_b), axis=0)    # (Bb, H)
    attn_ref[...] = attn.T                                                # (Bb, T)


def rnn_encoder_forward(x, word_mask, params, *, b_block=None):
    """x: (T,B,E) f32, word_mask: (T,B) bool -> (rvw (B,H), word_attn (B,T))."""
    T, B, E = x.shape
    H = params["whh_f"].shape[0]

    if b_block is None or b_block >= B:
        b_block = B
    else:
        assert b_block % 8 == 0 and B % b_block == 0, "b_block must tile B in multiples of 8"
    nb = B // b_block

    # Lane-dense mask (T, B) for attention + a (T, B, 1) copy for gating the
    # recurrence (broadcasts directly against the (B, H) hidden states).
    mask_s = word_mask.astype(jnp.float32)                                # (T, B)
    mask_g = mask_s[..., None]                                            # (T, B, 1)

    # One-time prep: fuse both directions' input projections, fold biases.
    wih_all = jnp.concatenate([params["wih_f"], params["wih_b"]], axis=1)  # (E, 6H)
    b_f = jnp.concatenate([params["bih_f"][:, :2 * H] + params["bhh_f"][:, :2 * H],
                           params["bih_f"][:, 2 * H:]], axis=1)            # (1, 3H)
    b_b = jnp.concatenate([params["bih_b"][:, :2 * H] + params["bhh_b"][:, :2 * H],
                           params["bih_b"][:, 2 * H:]], axis=1)
    bih_all = jnp.concatenate([b_f, b_b], axis=1)                          # (1, 6H)
    bhn_f = params["bhh_f"][:, 2 * H:]                                     # (1, H)
    bhn_b = params["bhh_b"][:, 2 * H:]
    waf = params["wattn"][:H, :]                                           # (H, 2H)
    wab = params["wattn"][H:, :]                                           # (H, 2H)
    vctx_row = params["vctx"].reshape(1, 2 * H)                            # (1, 2H)

    def full_spec(shape):
        nd = len(shape)
        return pl.BlockSpec(tuple(shape), lambda b: (0,) * nd)

    in_specs = [
        pl.BlockSpec((T, b_block), lambda b: (0, b)),            # mask_s
        pl.BlockSpec((T, b_block, 1), lambda b: (0, b, 0)),      # mask_g
        pl.BlockSpec((T, b_block, E), lambda b: (0, b, 0)),      # x
        full_spec(wih_all.shape), full_spec(bih_all.shape),
        full_spec(params["whh_f"].shape), full_spec(params["whh_b"].shape),
        full_spec(bhn_f.shape), full_spec(bhn_b.shape),
        full_spec(waf.shape), full_spec(wab.shape),
        full_spec(params["battn"].shape), full_spec(vctx_row.shape),
    ]
    out_specs = (pl.BlockSpec((b_block, H), lambda b: (b, 0)),
                 pl.BlockSpec((b_block, T), lambda b: (b, 0)))

    rvw, attn = pl.pallas_call(
        rnn_encoder_kernel,
        grid=(nb,),
        in_specs=in_specs,
        out_specs=out_specs,
        out_shape=(jax.ShapeDtypeStruct((B, H), jnp.float32),
                   jax.ShapeDtypeStruct((B, T), jnp.float32)),
        scratch_shapes=[pltpu.VMEM((T, b_block, 6 * H), jnp.float32),
                        pltpu.VMEM((T, b_block, H), jnp.float32),
                        pltpu.VMEM((T, b_block, H), jnp.float32)],
        compiler_params=pltpu.CompilerParams(
            dimension_semantics=("parallel",)),
    )(mask_s, mask_g, x,
      wih_all, bih_all, params["whh_f"], params["whh_b"],
      bhn_f, bhn_b, waf, wab, params["battn"], vctx_row)

    return rvw, attn


def ref_forward(x, word_mask, params):
    """Pure-JAX reference of the same math (for correctness check)."""
    T, B, E = x.shape
    H = params["whh_f"].shape[0]
    m = word_mask.astype(jnp.float32)[..., None]

    def cell(h, xs, wih, whh, bih, bhh):
        x_t, m_t = xs
        gx = x_t @ wih + bih
        gh = h @ whh + bhh
        r = jax.nn.sigmoid(gx[:, :H] + gh[:, :H])
        z = jax.nn.sigmoid(gx[:, H:2 * H] + gh[:, H:2 * H])
        n = jnp.tanh(gx[:, 2 * H:] + r * gh[:, 2 * H:])
        h_new = (1.0 - z) * n + z * h
        h = m_t * h_new + (1.0 - m_t) * h
        return h, h * m_t

    h0 = jnp.zeros((B, H), jnp.float32)
    _, out_f = lax.scan(
        lambda h, xs: cell(h, xs, params["wih_f"], params["whh_f"],
                           params["bih_f"], params["bhh_f"]), h0, (x, m))
    _, out_b_rev = lax.scan(
        lambda h, xs: cell(h, xs, params["wih_b"], params["whh_b"],
                           params["bih_b"], params["bhh_b"]), h0, (x[::-1], m[::-1]))
    out_b = out_b_rev[::-1]
    wo = jnp.concatenate([out_f, out_b], axis=-1)                     # (T, B, 2H)

    u = jnp.tanh(wo @ params["wattn"] + params["battn"])
    score = u @ params["vctx"]                                        # (T, B, 1)
    score = jnp.where(m > 0, score, -1e30)
    attn = jax.nn.softmax(score, axis=0)
    rvw = jnp.sum(attn * wo, axis=0)
    return rvw[:, :H] + rvw[:, H:], attn[:, :, 0].T


if __name__ == "__main__":
    key = jax.random.PRNGKey(0)
    T, B, E, H = 8, 4, 16, 32   # word_seq, batch, word_ebd_size, hidden_size
    keys = jax.random.split(key, 12)

    def uni(k, shape, scale):
        return jax.random.uniform(k, shape, jnp.float32, -scale, scale)

    kg = 1.0 / (H ** 0.5)        # PyTorch GRU init scale
    ka = 1.0 / ((2 * H) ** 0.5)  # Linear(2H, .) init scale
    params = {
        "wih_f": uni(keys[0], (E, 3 * H), kg),
        "whh_f": uni(keys[1], (H, 3 * H), kg),
        "bih_f": uni(keys[2], (1, 3 * H), kg),
        "bhh_f": uni(keys[3], (1, 3 * H), kg),
        "wih_b": uni(keys[4], (E, 3 * H), kg),
        "whh_b": uni(keys[5], (H, 3 * H), kg),
        "bih_b": uni(keys[6], (1, 3 * H), kg),
        "bhh_b": uni(keys[7], (1, 3 * H), kg),
        "wattn": uni(keys[8], (2 * H, 2 * H), ka),
        "battn": uni(keys[9], (1, 2 * H), ka),
        "vctx":  uni(keys[10], (2 * H, 1), ka),
    }

    x = jax.random.normal(keys[11], (T, B, E), jnp.float32)
    rvw_lens = jnp.array([8, 5, 3, 6], jnp.int32)                     # (batch,)
    word_mask = jnp.arange(T)[:, None] < rvw_lens[None, :]            # (T, B) bool

    rvw, word_attn = rnn_encoder_forward(x, word_mask, params)
    rvw, word_attn = jax.block_until_ready((rvw, word_attn))

    rvw_r, attn_r = ref_forward(x, word_mask, params)
    assert rvw.shape == (B, H) and word_attn.shape == (B, T)
    assert jnp.allclose(rvw, rvw_r, atol=1e-4, rtol=1e-4), "rvw mismatch"
    assert jnp.allclose(word_attn, attn_r, atol=1e-4, rtol=1e-4), "attn mismatch"

    print("KERNEL_OK")
</pallas_src>

<mosaic_0001>
module attributes {stable_mosaic.version = 11 : i64} {
  func.func @rnn_encoder_kernel(%arg0: i32, %arg1: memref<8x4xf32, #tpu.memory_space<vmem>>, %arg2: memref<8x4x1xf32, #tpu.memory_space<vmem>>, %arg3: memref<8x4x16xf32, #tpu.memory_space<vmem>>, %arg4: memref<16x192xf32, #tpu.memory_space<vmem>>, %arg5: memref<1x192xf32, #tpu.memory_space<vmem>>, %arg6: memref<32x96xf32, #tpu.memory_space<vmem>>, %arg7: memref<32x96xf32, #tpu.memory_space<vmem>>, %arg8: memref<1x32xf32, #tpu.memory_space<vmem>>, %arg9: memref<1x32xf32, #tpu.memory_space<vmem>>, %arg10: memref<32x64xf32, #tpu.memory_space<vmem>>, %arg11: memref<32x64xf32, #tpu.memory_space<vmem>>, %arg12: memref<1x64xf32, #tpu.memory_space<vmem>>, %arg13: memref<1x64xf32, #tpu.memory_space<vmem>>, %arg14: memref<4x32xf32, #tpu.memory_space<vmem>>, %arg15: memref<4x8xf32, #tpu.memory_space<vmem>>, %arg16: memref<8x4x192xf32, #tpu.memory_space<vmem>>, %arg17: memref<8x4x32xf32, #tpu.memory_space<vmem>>, %arg18: memref<8x4x32xf32, #tpu.memory_space<vmem>>) attributes {dimension_semantics = [#tpu.dimension_semantics<parallel>], iteration_bounds = array<i64: 1>, scalar_prefetch = 0 : i64, scratch_operands = 3 : i64, tpu.core_type = #tpu.core_type<tc>, window_params = [{transform_indices = @transform_0, window_bounds = array<i64: 8, 4>}, {transform_indices = @transform_1, window_bounds = array<i64: 8, 4, 1>}, {transform_indices = @transform_2, window_bounds = array<i64: 8, 4, 16>}, {pipeline_mode = #tpu.pipeline_mode<synchronous>, transform_indices = @transform_3, window_bounds = array<i64: 16, 192>}, {pipeline_mode = #tpu.pipeline_mode<synchronous>, transform_indices = @transform_4, window_bounds = array<i64: 1, 192>}, {pipeline_mode = #tpu.pipeline_mode<synchronous>, transform_indices = @transform_5, window_bounds = array<i64: 32, 96>}, {pipeline_mode = #tpu.pipeline_mode<synchronous>, transform_indices = @transform_6, window_bounds = array<i64: 32, 96>}, {pipeline_mode = #tpu.pipeline_mode<synchronous>, transform_indices = @transform_7, window_bounds = array<i64: 1, 32>}, {pipeline_mode = #tpu.pipeline_mode<synchronous>, transform_indices = @transform_8, window_bounds = array<i64: 1, 32>}, {pipeline_mode = #tpu.pipeline_mode<synchronous>, transform_indices = @transform_9, window_bounds = array<i64: 32, 64>}, {pipeline_mode = #tpu.pipeline_mode<synchronous>, transform_indices = @transform_10, window_bounds = array<i64: 32, 64>}, {pipeline_mode = #tpu.pipeline_mode<synchronous>, transform_indices = @transform_11, window_bounds = array<i64: 1, 64>}, {pipeline_mode = #tpu.pipeline_mode<synchronous>, transform_indices = @transform_12, window_bounds = array<i64: 1, 64>}, {transform_indices = @transform_13, window_bounds = array<i64: 4, 32>}, {transform_indices = @transform_14, window_bounds = array<i64: 4, 8>}]} {
    %c0 = arith.constant 0 : index
    %c0_0 = arith.constant 0 : index
    %c0_1 = arith.constant 0 : index
    %0 = vector.load %arg3[%c0, %c0_0, %c0_1] : memref<8x4x16xf32, #tpu.memory_space<vmem>>, vector<8x4x16xf32>
    %1 = vector.shape_cast %0 : vector<8x4x16xf32> to vector<32x16xf32>
    %c0_2 = arith.constant 0 : index
    %c0_3 = arith.constant 0 : index
    %2 = vector.load %arg4[%c0_2, %c0_3] : memref<16x192xf32, #tpu.memory_space<vmem>>, vector<16x192xf32>
    %cst = arith.constant dense<0.000000e+00> : vector<32x192xf32>
    %3 = tpu.matmul %1, %2, %cst {dimension_numbers = #tpu.dot_dimension_numbers<[1], [0], [0], [1], [0, 0, 1, 1], [], []>} : vector<32x16xf32>, vector<16x192xf32>, vector<32x192xf32> -> vector<32x192xf32>
    %c0_4 = arith.constant 0 : index
    %c0_5 = arith.constant 0 : index
    %4 = vector.load %arg5[%c0_4, %c0_5] : memref<1x192xf32, #tpu.memory_space<vmem>>, vector<1x192xf32>
    %5 = vector.broadcast %4 : vector<1x192xf32> to vector<32x192xf32>
    %6 = arith.addf %3, %5 : vector<32x192xf32>
    %7 = vector.shape_cast %6 : vector<32x192xf32> to vector<8x4x192xf32>
    %c0_6 = arith.constant 0 : index
    %c0_7 = arith.constant 0 : index
    %c0_8 = arith.constant 0 : index
    %8 = vector.load %arg16[%c0_6, %c0_7, %c0_8] : memref<8x4x192xf32, #tpu.memory_space<vmem>>, vector<8x4x192xf32>
    tpu.vector_store %arg16[%c0_6, %c0_7, %c0_8], %7 {strides = array<i32>} : memref<8x4x192xf32, #tpu.memory_space<vmem>>, vector<8x4x192xf32>,
    %c0_9 = arith.constant 0 : index
    %c0_10 = arith.constant 0 : index
    %9 = vector.load %arg6[%c0_9, %c0_10] : memref<32x96xf32, #tpu.memory_space<vmem>>, vector<32x96xf32>
    %c0_11 = arith.constant 0 : index
    %c0_12 = arith.constant 0 : index
    %10 = vector.load %arg7[%c0_11, %c0_12] : memref<32x96xf32, #tpu.memory_space<vmem>>, vector<32x96xf32>
    %c0_13 = arith.constant 0 : index
    %c0_14 = arith.constant 0 : index
    %11 = vector.load %arg8[%c0_13, %c0_14] : memref<1x32xf32, #tpu.memory_space<vmem>>, vector<1x32xf32>
    %12 = vector.shape_cast %11 : vector<1x32xf32> to vector<1x32xf32>
    %13 = vector.broadcast %12 : vector<1x32xf32> to vector<4x32xf32>
    %c0_15 = arith.constant 0 : index
    %c0_16 = arith.constant 0 : index
    %14 = vector.load %arg9[%c0_15, %c0_16] : memref<1x32xf32, #tpu.memory_space<vmem>>, vector<1x32xf32>
    %15 = vector.shape_cast %14 : vector<1x32xf32> to vector<1x32xf32>
    %16 = vector.broadcast %15 : vector<1x32xf32> to vector<4x32xf32>
    %cst_17 = arith.constant 0.000000e+00 : f32
    %17 = vector.broadcast %cst_17 : f32 to vector<4x32xf32>
    %c0_i32 = arith.constant 0 : i32
    %c7_i32 = arith.constant 7 : i32
    %18 = arith.subi %c7_i32, %c0_i32 : i32
    %19 = arith.index_cast %c0_i32 : i32 to index
    %c0_18 = arith.constant 0 : index
    %c0_19 = arith.constant 0 : index
    %20 = vector.load %arg2[%19, %c0_18, %c0_19] : memref<8x4x1xf32, #tpu.memory_space<vmem>>, vector<1x4x1xf32>
    %21 = vector.shape_cast %20 : vector<1x4x1xf32> to vector<4x1xf32>
    %22 = arith.index_cast %18 : i32 to index
    %c0_20 = arith.constant 0 : index
    %c0_21 = arith.constant 0 : index
    %23 = vector.load %arg2[%22, %c0_20, %c0_21] : memref<8x4x1xf32, #tpu.memory_space<vmem>>, vector<1x4x1xf32>
    %24 = vector.shape_cast %23 : vector<1x4x1xf32> to vector<4x1xf32>
    %25 = arith.index_cast %c0_i32 : i32 to index
    %c0_22 = arith.constant 0 : index
    %c0_23 = arith.constant 0 : index
    %26 = vector.load %arg16[%25, %c0_22, %c0_23] : memref<8x4x192xf32, #tpu.memory_space<vmem>>, vector<1x4x96xf32>
    %27 = vector.shape_cast %26 : vector<1x4x96xf32> to vector<4x96xf32>
    %cst_24 = arith.constant dense<0.000000e+00> : vector<4x96xf32>
    %28 = tpu.matmul %17, %9, %cst_24 {dimension_numbers = #tpu.dot_dimension_numbers<[1], [0], [0], [1], [0, 0, 1, 1], [], []>} : vector<4x32xf32>, vector<32x96xf32>, vector<4x96xf32> -> vector<4x96xf32>
    %29 = vector.extract_strided_slice %27 {offsets = [0, 0], sizes = [4, 32], strides = [1, 1]} : vector<4x96xf32> to vector<4x32xf32>
    %30 = vector.extract_strided_slice %28 {offsets = [0, 0], sizes = [4, 32], strides = [1, 1]} : vector<4x96xf32> to vector<4x32xf32>
    %31 = arith.addf %29, %30 : vector<4x32xf32>
    %32 = arith.negf %31 : vector<4x32xf32>
    %33 = math.exp %32 : vector<4x32xf32>
    %cst_25 = arith.constant 1.000000e+00 : f32
    %34 = vector.broadcast %cst_25 : f32 to vector<4x32xf32>
    %35 = arith.addf %34, %33 : vector<4x32xf32>
    %36 = arith.divf %34, %35 : vector<4x32xf32>
    %37 = vector.extract_strided_slice %27 {offsets = [0, 32], sizes = [4, 32], strides = [1, 1]} : vector<4x96xf32> to vector<4x32xf32>
    %38 = vector.extract_strided_slice %28 {offsets = [0, 32], sizes = [4, 32], strides = [1, 1]} : vector<4x96xf32> to vector<4x32xf32>
    %39 = arith.addf %37, %38 : vector<4x32xf32>
    %40 = arith.negf %39 : vector<4x32xf32>
    %41 = math.exp %40 : vector<4x32xf32>
    %cst_26 = arith.constant 1.000000e+00 : f32
    %42 = vector.broadcast %cst_26 : f32 to vector<4x32xf32>
    %43 = arith.addf %42, %41 : vector<4x32xf32>
    %44 = arith.divf %42, %43 : vector<4x32xf32>
    %45 = vector.extract_strided_slice %27 {offsets = [0, 64], sizes = [4, 32], strides = [1, 1]} : vector<4x96xf32> to vector<4x32xf32>
    %46 = vector.extract_strided_slice %28 {offsets = [0, 64], sizes = [4, 32], strides = [1, 1]} : vector<4x96xf32> to vector<4x32xf32>
    %47 = arith.addf %46, %13 : vector<4x32xf32>
    %48 = arith.mulf %36, %47 : vector<4x32xf32>
    %49 = arith.addf %45, %48 : vector<4x32xf32>
    %50 = math.tanh %49 : vector<4x32xf32>
    %cst_27 = arith.constant 1.000000e+00 : f32
    %51 = vector.broadcast %cst_27 : f32 to vector<4x32xf32>
    %52 = arith.subf %51, %44 : vector<4x32xf32>
    %53 = arith.mulf %52, %50 : vector<4x32xf32>
    %54 = arith.mulf %44, %17 : vector<4x32xf32>
    %55 = arith.addf %53, %54 : vector<4x32xf32>
    %56 = vector.broadcast %21 : vector<4x1xf32> to vector<4x32xf32>
    %57 = arith.mulf %56, %55 : vector<4x32xf32>
    %cst_28 = arith.constant 1.000000e+00 : f32
    %58 = vector.broadcast %cst_28 : f32 to vector<4x1xf32>
    %59 = arith.subf %58, %21 : vector<4x1xf32>
    %60 = vector.broadcast %59 : vector<4x1xf32> to vector<4x32xf32>
    %61 = arith.mulf %60, %17 : vector<4x32xf32>
    %62 = arith.addf %57, %61 : vector<4x32xf32>
    %63 = arith.index_cast %18 : i32 to index
    %c0_29 = arith.constant 0 : index
    %c96 = arith.constant 96 : index
    %64 = vector.load %arg16[%63, %c0_29, %c96] : memref<8x4x192xf32, #tpu.memory_space<vmem>>, vector<1x4x96xf32>
    %65 = vector.shape_cast %64 : vector<1x4x96xf32> to vector<4x96xf32>
    %cst_30 = arith.constant dense<0.000000e+00> : vector<4x96xf32>
    %66 = tpu.matmul %17, %10, %cst_30 {dimension_numbers = #tpu.dot_dimension_numbers<[1], [0], [0], [1], [0, 0, 1, 1], [], []>} : vector<4x32xf32>, vector<32x96xf32>, vector<4x96xf32> -> vector<4x96xf32>
    %67 = vector.extract_strided_slice %65 {offsets = [0, 0], sizes = [4, 32], strides = [1, 1]} : vector<4x96xf32> to vector<4x32xf32>
    %68 = vector.extract_strided_slice %66 {offsets = [0, 0], sizes = [4, 32], strides = [1, 1]} : vector<4x96xf32> to vector<4x32xf32>
    %69 = arith.addf %67, %68 : vector<4x32xf32>
    %70 = arith.negf %69 : vector<4x32xf32>
    %71 = math.exp %70 : vector<4x32xf32>
    %cst_31 = arith.constant 1.000000e+00 : f32
    %72 = vector.broadcast %cst_31 : f32 to vector<4x32xf32>
    %73 = arith.addf %72, %71 : vector<4x32xf32>
    %74 = arith.divf %72, %73 : vector<4x32xf32>
    %75 = vector.extract_strided_slice %65 {offsets = [0, 32], sizes = [4, 32], strides = [1, 1]} : vector<4x96xf32> to vector<4x32xf32>
    %76 = vector.extract_strided_slice %66 {offsets = [0, 32], sizes = [4, 32], strides = [1, 1]} : vector<4x96xf32> to vector<4x32xf32>
    %77 = arith.addf %75, %76 : vector<4x32xf32>
    %78 = arith.negf %77 : vector<4x32xf32>
    %79 = math.exp %78 : vector<4x32xf32>
    %cst_32 = arith.constant 1.000000e+00 : f32
    %80 = vector.broadcast %cst_32 : f32 to vector<4x32xf32>
    %81 = arith.addf %80, %79 : vector<4x32xf32>
    %82 = arith.divf %80, %81 : vector<4x32xf32>
    %83 = vector.extract_strided_slice %65 {offsets = [0, 64], sizes = [4, 32], strides = [1, 1]} : vector<4x96xf32> to vector<4x32xf32>
    %84 = vector.extract_strided_slice %66 {offsets = [0, 64], sizes = [4, 32], strides = [1, 1]} : vector<4x96xf32> to vector<4x32xf32>
    %85 = arith.addf %84, %16 : vector<4x32xf32>
    %86 = arith.mulf %74, %85 : vector<4x32xf32>
    %87 = arith.addf %83, %86 : vector<4x32xf32>
    %88 = math.tanh %87 : vector<4x32xf32>
    %cst_33 = arith.constant 1.000000e+00 : f32
    %89 = vector.broadcast %cst_33 : f32 to vector<4x32xf32>
    %90 = arith.subf %89, %82 : vector<4x32xf32>
    %91 = arith.mulf %90, %88 : vector<4x32xf32>
    %92 = arith.mulf %82, %17 : vector<4x32xf32>
    %93 = arith.addf %91, %92 : vector<4x32xf32>
    %94 = vector.broadcast %24 : vector<4x1xf32> to vector<4x32xf32>
    %95 = arith.mulf %94, %93 : vector<4x32xf32>
    %cst_34 = arith.constant 1.000000e+00 : f32
    %96 = vector.broadcast %cst_34 : f32 to vector<4x1xf32>
    %97 = arith.subf %96, %24 : vector<4x1xf32>
    %98 = vector.broadcast %97 : vector<4x1xf32> to vector<4x32xf32>
    %99 = arith.mulf %98, %17 : vector<4x32xf32>
    %100 = arith.addf %95, %99 : vector<4x32xf32>
    %101 = vector.broadcast %21 : vector<4x1xf32> to vector<4x32xf32>
    %102 = arith.mulf %62, %101 : vector<4x32xf32>
    %103 = arith.index_cast %c0_i32 : i32 to index
    %c0_35 = arith.constant 0 : index
    %c0_36 = arith.constant 0 : index
    %104 = vector.load %arg17[%103, %c0_35, %c0_36] : memref<8x4x32xf32, #tpu.memory_space<vmem>>, vector<1x4x32xf32>
    %105 = vector.shape_cast %104 : vector<1x4x32xf32> to vector<4x32xf32>
    %106 = vector.shape_cast %102 : vector<4x32xf32> to vector<1x4x32xf32>
    tpu.vector_store %arg17[%103, %c0_35, %c0_36], %106 {strides = array<i32>} : memref<8x4x32xf32, #tpu.memory_space<vmem>>, vector<1x4x32xf32>,
    %107 = vector.broadcast %24 : vector<4x1xf32> to vector<4x32xf32>
    %108 = arith.mulf %100, %107 : vector<4x32xf32>
    %109 = arith.index_cast %18 : i32 to index
    %c0_37 = arith.constant 0 : index
    %c0_38 = arith.constant 0 : index
    %110 = vector.load %arg18[%109, %c0_37, %c0_38] : memref<8x4x32xf32, #tpu.memory_space<vmem>>, vector<1x4x32xf32>
    %111 = vector.shape_cast %110 : vector<1x4x32xf32> to vector<4x32xf32>
    %112 = vector.shape_cast %108 : vector<4x32xf32> to vector<1x4x32xf32>
    tpu.vector_store %arg18[%109, %c0_37, %c0_38], %112 {strides = array<i32>} : memref<8x4x32xf32, #tpu.memory_space<vmem>>, vector<1x4x32xf32>,
    %c1_i32 = arith.constant 1 : i32
    %c7_i32_39 = arith.constant 7 : i32
    %113 = arith.subi %c7_i32_39, %c1_i32 : i32
    %114 = arith.index_cast %c1_i32 : i32 to index
    %c0_40 = arith.constant 0 : index
    %c0_41 = arith.constant 0 : index
    %115 = vector.load %arg2[%114, %c0_40, %c0_41] : memref<8x4x1xf32, #tpu.memory_space<vmem>>, vector<1x4x1xf32>
    %116 = vector.shape_cast %115 : vector<1x4x1xf32> to vector<4x1xf32>
    %117 = arith.index_cast %113 : i32 to index
    %c0_42 = arith.constant 0 : index
    %c0_43 = arith.constant 0 : index
    %118 = vector.load %arg2[%117, %c0_42, %c0_43] : memref<8x4x1xf32, #tpu.memory_space<vmem>>, vector<1x4x1xf32>
    %119 = vector.shape_cast %118 : vector<1x4x1xf32> to vector<4x1xf32>
    %120 = arith.index_cast %c1_i32 : i32 to index
    %c0_44 = arith.constant 0 : index
    %c0_45 = arith.constant 0 : index
    %121 = vector.load %arg16[%120, %c0_44, %c0_45] : memref<8x4x192xf32, #tpu.memory_space<vmem>>, vector<1x4x96xf32>
    %122 = vector.shape_cast %121 : vector<1x4x96xf32> to vector<4x96xf32>
    %cst_46 = arith.constant dense<0.000000e+00> : vector<4x96xf32>
    %123 = tpu.matmul %62, %9, %cst_46 {dimension_numbers = #tpu.dot_dimension_numbers<[1], [0], [0], [1], [0, 0, 1, 1], [], []>} : vector<4x32xf32>, vector<32x96xf32>, vector<4x96xf32> -> vector<4x96xf32>
    %124 = vector.extract_strided_slice %122 {offsets = [0, 0], sizes = [4, 32], strides = [1, 1]} : vector<4x96xf32> to vector<4x32xf32>
    %125 = vector.extract_strided_slice %123 {offsets = [0, 0], sizes = [4, 32], strides = [1, 1]} : vector<4x96xf32> to vector<4x32xf32>
    %126 = arith.addf %124, %125 : vector<4x32xf32>
    %127 = arith.negf %126 : vector<4x32xf32>
    %128 = math.exp %127 : vector<4x32xf32>
    %cst_47 = arith.constant 1.000000e+00 : f32
    %129 = vector.broadcast %cst_47 : f32 to vector<4x32xf32>
    %130 = arith.addf %129, %128 : vector<4x32xf32>
    %131 = arith.divf %129, %130 : vector<4x32xf32>
    %132 = vector.extract_strided_slice %122 {offsets = [0, 32], sizes = [4, 32], strides = [1, 1]} : vector<4x96xf32> to vector<4x32xf32>
    %133 = vector.extract_strided_slice %123 {offsets = [0, 32], sizes = [4, 32], strides = [1, 1]} : vector<4x96xf32> to vector<4x32xf32>
    %134 = arith.addf %132, %133 : vector<4x32xf32>
    %135 = arith.negf %134 : vector<4x32xf32>
    %136 = math.exp %135 : vector<4x32xf32>
    %cst_48 = arith.constant 1.000000e+00 : f32
    %137 = vector.broadcast %cst_48 : f32 to vector<4x32xf32>
    %138 = arith.addf %137, %136 : vector<4x32xf32>
    %139 = arith.divf %137, %138 : vector<4x32xf32>
    %140 = vector.extract_strided_slice %122 {offsets = [0, 64], sizes = [4, 32], strides = [1, 1]} : vector<4x96xf32> to vector<4x32xf32>
    %141 = vector.extract_strided_slice %123 {offsets = [0, 64], sizes = [4, 32], strides = [1, 1]} : vector<4x96xf32> to vector<4x32xf32>
    %142 = arith.addf %141, %13 : vector<4x32xf32>
    %143 = arith.mulf %131, %142 : vector<4x32xf32>
    %144 = arith.addf %140, %143 : vector<4x32xf32>
    %145 = math.tanh %144 : vector<4x32xf32>
    %cst_49 = arith.constant 1.000000e+00 : f32
    %146 = vector.broadcast %cst_49 : f32 to vector<4x32xf32>
    %147 = arith.subf %146, %139 : vector<4x32xf32>
    %148 = arith.mulf %147, %145 : vector<4x32xf32>
    %149 = arith.mulf %139, %62 : vector<4x32xf32>
    %150 = arith.addf %148, %149 : vector<4x32xf32>
    %151 = vector.broadcast %116 : vector<4x1xf32> to vector<4x32xf32>
    %152 = arith.mulf %151, %150 : vector<4x32xf32>
    %cst_50 = arith.constant 1.000000e+00 : f32
    %153 = vector.broadcast %cst_50 : f32 to vector<4x1xf32>
    %154 = arith.subf %153, %116 : vector<4x1xf32>
    %155 = vector.broadcast %154 : vector<4x1xf32> to vector<4x32xf32>
    %156 = arith.mulf %155, %62 : vector<4x32xf32>
    %157 = arith.addf %152, %156 : vector<4x32xf32>
    %158 = arith.index_cast %113 : i32 to index
    %c0_51 = arith.constant 0 : index
    %c96_52 = arith.constant 96 : index
    %159 = vector.load %arg16[%158, %c0_51, %c96_52] : memref<8x4x192xf32, #tpu.memory_space<vmem>>, vector<1x4x96xf32>
    %160 = vector.shape_cast %159 : vector<1x4x96xf32> to vector<4x96xf32>
    %cst_53 = arith.constant dense<0.000000e+00> : vector<4x96xf32>
    %161 = tpu.matmul %100, %10, %cst_53 {dimension_numbers = #tpu.dot_dimension_numbers<[1], [0], [0], [1], [0, 0, 1, 1], [], []>} : vector<4x32xf32>, vector<32x96xf32>, vector<4x96xf32> -> vector<4x96xf32>
    %162 = vector.extract_strided_slice %160 {offsets = [0, 0], sizes = [4, 32], strides = [1, 1]} : vector<4x96xf32> to vector<4x32xf32>
    %163 = vector.extract_strided_slice %161 {offsets = [0, 0], sizes = [4, 32], strides = [1, 1]} : vector<4x96xf32> to vector<4x32xf32>
    %164 = arith.addf %162, %163 : vector<4x32xf32>
    %165 = arith.negf %164 : vector<4x32xf32>
    %166 = math.exp %165 : vector<4x32xf32>
    %cst_54 = arith.constant 1.000000e+00 : f32
    %167 = vector.broadcast %cst_54 : f32 to vector<4x32xf32>
    %168 = arith.addf %167, %166 : vector<4x32xf32>
    %169 = arith.divf %167, %168 : vector<4x32xf32>
    %170 = vector.extract_strided_slice %160 {offsets = [0, 32], sizes = [4, 32], strides = [1, 1]} : vector<4x96xf32> to vector<4x32xf32>
    %171 = vector.extract_strided_slice %161 {offsets = [0, 32], sizes = [4, 32], strides = [1, 1]} : vector<4x96xf32> to vector<4x32xf32>
    %172 = arith.addf %170, %171 : vector<4x32xf32>
    %173 = arith.negf %172 : vector<4x32xf32>
    %174 = math.exp %173 : vector<4x32xf32>
    %cst_55 = arith.constant 1.000000e+00 : f32
    %175 = vector.broadcast %cst_55 : f32 to vector<4x32xf32>
    %176 = arith.addf %175, %174 : vector<4x32xf32>
    %177 = arith.divf %175, %176 : vector<4x32xf32>
    %178 = vector.extract_strided_slice %160 {offsets = [0, 64], sizes = [4, 32], strides = [1, 1]} : vector<4x96xf32> to vector<4x32xf32>
    %179 = vector.extract_strided_slice %161 {offsets = [0, 64], sizes = [4, 32], strides = [1, 1]} : vector<4x96xf32> to vector<4x32xf32>
    %180 = arith.addf %179, %16 : vector<4x32xf32>
    %181 = arith.mulf %169, %180 : vector<4x32xf32>
    %182 = arith.addf %178, %181 : vector<4x32xf32>
    %183 = math.tanh %182 : vector<4x32xf32>
    %cst_56 = arith.constant 1.000000e+00 : f32
    %184 = vector.broadcast %cst_56 : f32 to vector<4x32xf32>
    %185 = arith.subf %184, %177 : vector<4x32xf32>
    %186 = arith.mulf %185, %183 : vector<4x32xf32>
    %187 = arith.mulf %177, %100 : vector<4x32xf32>
    %188 = arith.addf %186, %187 : vector<4x32xf32>
    %189 = vector.broadcast %119 : vector<4x1xf32> to vector<4x32xf32>
    %190 = arith.mulf %189, %188 : vector<4x32xf32>
    %cst_57 = arith.constant 1.000000e+00 : f32
    %191 = vector.broadcast %cst_57 : f32 to vector<4x1xf32>
    %192 = arith.subf %191, %119 : vector<4x1xf32>
    %193 = vector.broadcast %192 : vector<4x1xf32> to vector<4x32xf32>
    %194 = arith.mulf %193, %100 : vector<4x32xf32>
    %195 = arith.addf %190, %194 : vector<4x32xf32>
    %196 = vector.broadcast %116 : vector<4x1xf32> to vector<4x32xf32>
    %197 = arith.mulf %157, %196 : vector<4x32xf32>
    %198 = arith.index_cast %c1_i32 : i32 to index
    %c0_58 = arith.constant 0 : index
    %c0_59 = arith.constant 0 : index
    %199 = vector.load %arg17[%198, %c0_58, %c0_59] : memref<8x4x32xf32, #tpu.memory_space<vmem>>, vector<1x4x32xf32>
    %200 = vector.shape_cast %199 : vector<1x4x32xf32> to vector<4x32xf32>
    %201 = vector.shape_cast %197 : vector<4x32xf32> to vector<1x4x32xf32>
    tpu.vector_store %arg17[%198, %c0_58, %c0_59], %201 {strides = array<i32>} : memref<8x4x32xf32, #tpu.memory_space<vmem>>, vector<1x4x32xf32>,
    %202 = vector.broadcast %119 : vector<4x1xf32> to vector<4x32xf32>
    %203 = arith.mulf %195, %202 : vector<4x32xf32>
    %204 = arith.index_cast %113 : i32 to index
    %c0_60 = arith.constant 0 : index
    %c0_61 = arith.constant 0 : index
    %205 = vector.load %arg18[%204, %c0_60, %c0_61] : memref<8x4x32xf32, #tpu.memory_space<vmem>>, vector<1x4x32xf32>
    %206 = vector.shape_cast %205 : vector<1x4x32xf32> to vector<4x32xf32>
    %207 = vector.shape_cast %203 : vector<4x32xf32> to vector<1x4x32xf32>
    tpu.vector_store %arg18[%204, %c0_60, %c0_61], %207 {strides = array<i32>} : memref<8x4x32xf32, #tpu.memory_space<vmem>>, vector<1x4x32xf32>,
    %c2_i32 = arith.constant 2 : i32
    %c7_i32_62 = arith.constant 7 : i32
    %208 = arith.subi %c7_i32_62, %c2_i32 : i32
    %209 = arith.index_cast %c2_i32 : i32 to index
    %c0_63 = arith.constant 0 : index
    %c0_64 = arith.constant 0 : index
    %210 = vector.load %arg2[%209, %c0_63, %c0_64] : memref<8x4x1xf32, #tpu.memory_space<vmem>>, vector<1x4x1xf32>
    %211 = vector.shape_cast %210 : vector<1x4x1xf32> to vector<4x1xf32>
    %212 = arith.index_cast %208 : i32 to index
    %c0_65 = arith.constant 0 : index
    %c0_66 = arith.constant 0 : index
    %213 = vector.load %arg2[%212, %c0_65, %c0_66] : memref<8x4x1xf32, #tpu.memory_space<vmem>>, vector<1x4x1xf32>
    %214 = vector.shape_cast %213 : vector<1x4x1xf32> to vector<4x1xf32>
    %215 = arith.index_cast %c2_i32 : i32 to index
    %c0_67 = arith.constant 0 : index
    %c0_68 = arith.constant 0 : index
    %216 = vector.load %arg16[%215, %c0_67, %c0_68] : memref<8x4x192xf32, #tpu.memory_space<vmem>>, vector<1x4x96xf32>
    %217 = vector.shape_cast %216 : vector<1x4x96xf32> to vector<4x96xf32>
    %cst_69 = arith.constant dense<0.000000e+00> : vector<4x96xf32>
    %218 = tpu.matmul %157, %9, %cst_69 {dimension_numbers = #tpu.dot_dimension_numbers<[1], [0], [0], [1], [0, 0, 1, 1], [], []>} : vector<4x32xf32>, vector<32x96xf32>, vector<4x96xf32> -> vector<4x96xf32>
    %219 = vector.extract_strided_slice %217 {offsets = [0, 0], sizes = [4, 32], strides = [1, 1]} : vector<4x96xf32> to vector<4x32xf32>
    %220 = vector.extract_strided_slice %218 {offsets = [0, 0], sizes = [4, 32], strides = [1, 1]} : vector<4x96xf32> to vector<4x32xf32>
    %221 = arith.addf %219, %220 : vector<4x32xf32>
    %222 = arith.negf %221 : vector<4x32xf32>
    %223 = math.exp %222 : vector<4x32xf32>
    %cst_70 = arith.constant 1.000000e+00 : f32
    %224 = vector.broadcast %cst_70 : f32 to vector<4x32xf32>
    %225 = arith.addf %224, %223 : vector<4x32xf32>
    %226 = arith.divf %224, %225 : vector<4x32xf32>
    %227 = vector.extract_strided_slice %217 {offsets = [0, 32], sizes = [4, 32], strides = [1, 1]} : vector<4x96xf32> to vector<4x32xf32>
    %228 = vector.extract_strided_slice %218 {offsets = [0, 32], sizes = [4, 32], strides = [1, 1]} : vector<4x96xf32> to vector<4x32xf32>
    %229 = arith.addf %227, %228 : vector<4x32xf32>
    %230 = arith.negf %229 : vector<4x32xf32>
    %231 = math.exp %230 : vector<4x32xf32>
    %cst_71 = arith.constant 1.000000e+00 : f32
    %232 = vector.broadcast %cst_71 : f32 to vector<4x32xf32>
    %233 = arith.addf %232, %231 : vector<4x32xf32>
    %234 = arith.divf %232, %233 : vector<4x32xf32>
    %235 = vector.extract_strided_slice %217 {offsets = [0, 64], sizes = [4, 32], strides = [1, 1]} : vector<4x96xf32> to vector<4x32xf32>
    %236 = vector.extract_strided_slice %218 {offsets = [0, 64], sizes = [4, 32], strides = [1, 1]} : vector<4x96xf32> to vector<4x32xf32>
    %237 = arith.addf %236, %13 : vector<4x32xf32>
    %238 = arith.mulf %226, %237 : vector<4x32xf32>
    %239 = arith.addf %235, %238 : vector<4x32xf32>
    %240 = math.tanh %239 : vector<4x32xf32>
    %cst_72 = arith.constant 1.000000e+00 : f32
    %241 = vector.broadcast %cst_72 : f32 to vector<4x32xf32>
    %242 = arith.subf %241, %234 : vector<4x32xf32>
    %243 = arith.mulf %242, %240 : vector<4x32xf32>
    %244 = arith.mulf %234, %157 : vector<4x32xf32>
    %245 = arith.addf %243, %244 : vector<4x32xf32>
    %246 = vector.broadcast %211 : vector<4x1xf32> to vector<4x32xf32>
    %247 = arith.mulf %246, %245 : vector<4x32xf32>
    %cst_73 = arith.constant 1.000000e+00 : f32
    %248 = vector.broadcast %cst_73 : f32 to vector<4x1xf32>
    %249 = arith.subf %248, %211 : vector<4x1xf32>
    %250 = vector.broadcast %249 : vector<4x1xf32> to vector<4x32xf32>
    %251 = arith.mulf %250, %157 : vector<4x32xf32>
    %252 = arith.addf %247, %251 : vector<4x32xf32>
    %253 = arith.index_cast %208 : i32 to index
    %c0_74 = arith.constant 0 : index
    %c96_75 = arith.constant 96 : index
    %254 = vector.load %arg16[%253, %c0_74, %c96_75] : memref<8x4x192xf32, #tpu.memory_space<vmem>>, vector<1x4x96xf32>
    %255 = vector.shape_cast %254 : vector<1x4x96xf32> to vector<4x96xf32>
    %cst_76 = arith.constant dense<0.000000e+00> : vector<4x96xf32>
    %256 = tpu.matmul %195, %10, %cst_76 {dimension_numbers = #tpu.dot_dimension_numbers<[1], [0], [0], [1], [0, 0, 1, 1], [], []>} : vector<4x32xf32>, vector<32x96xf32>, vector<4x96xf32> -> vector<4x96xf32>
    %257 = vector.extract_strided_slice %255 {offsets = [0, 0], sizes = [4, 32], strides = [1, 1]} : vector<4x96xf32> to vector<4x32xf32>
    %258 = vector.extract_strided_slice %256 {offsets = [0, 0], sizes = [4, 32], strides = [1, 1]} : vector<4x96xf32> to vector<4x32xf32>
    %259 = arith.addf %257, %258 : vector<4x32xf32>
    %260 = arith.negf %259 : vector<4x32xf32>
    %261 = math.exp %260 : vector<4x32xf32>
    %cst_77 = arith.constant 1.000000e+00 : f32
    %262 = vector.broadcast %cst_77 : f32 to vector<4x32xf32>
    %263 = arith.addf %262, %261 : vector<4x32xf32>
    %264 = arith.divf %262, %263 : vector<4x32xf32>
    %265 = vector.extract_strided_slice %255 {offsets = [0, 32], sizes = [4, 32], strides = [1, 1]} : vector<4x96xf32> to vector<4x32xf32>
    %266 = vector.extract_strided_slice %256 {offsets = [0, 32], sizes = [4, 32], strides = [1, 1]} : vector<4x96xf32> to vector<4x32xf32>
    %267 = arith.addf %265, %266 : vector<4x32xf32>
    %268 = arith.negf %267 : vector<4x32xf32>
    %269 = math.exp %268 : vector<4x32xf32>
    %cst_78 = arith.constant 1.000000e+00 : f32
    %270 = vector.broadcast %cst_78 : f32 to vector<4x32xf32>
    %271 = arith.addf %270, %269 : vector<4x32xf32>
    %272 = arith.divf %270, %271 : vector<4x32xf32>
    %273 = vector.extract_strided_slice %255 {offsets = [0, 64], sizes = [4, 32], strides = [1, 1]} : vector<4x96xf32> to vector<4x32xf32>
    %274 = vector.extract_strided_slice %256 {offsets = [0, 64], sizes = [4, 32], strides = [1, 1]} : vector<4x96xf32> to vector<4x32xf32>
    %275 = arith.addf %274, %16 : vector<4x32xf32>
    %276 = arith.mulf %264, %275 : vector<4x32xf32>
    %277 = arith.addf %273, %276 : vector<4x32xf32>
    %278 = math.tanh %277 : vector<4x32xf32>
    %cst_79 = arith.constant 1.000000e+00 : f32
    %279 = vector.broadcast %cst_79 : f32 to vector<4x32xf32>
    %280 = arith.subf %279, %272 : vector<4x32xf32>
    %281 = arith.mulf %280, %278 : vector<4x32xf32>
    %282 = arith.mulf %272, %195 : vector<4x32xf32>
    %283 = arith.addf %281, %282 : vector<4x32xf32>
    %284 = vector.broadcast %214 : vector<4x1xf32> to vector<4x32xf32>
    %285 = arith.mulf %284, %283 : vector<4x32xf32>
    %cst_80 = arith.constant 1.000000e+00 : f32
    %286 = vector.broadcast %cst_80 : f32 to vector<4x1xf32>
    %287 = arith.subf %286, %214 : vector<4x1xf32>
    %288 = vector.broadcast %287 : vector<4x1xf32> to vector<4x32xf32>
    %289 = arith.mulf %288, %195 : vector<4x32xf32>
    %290 = arith.addf %285, %289 : vector<4x32xf32>
    %291 = vector.broadcast %211 : vector<4x1xf32> to vector<4x32xf32>
    %292 = arith.mulf %252, %291 : vector<4x32xf32>
    %293 = arith.index_cast %c2_i32 : i32 to index
    %c0_81 = arith.constant 0 : index
    %c0_82 = arith.constant 0 : index
    %294 = vector.load %arg17[%293, %c0_81, %c0_82] : memref<8x4x32xf32, #tpu.memory_space<vmem>>, vector<1x4x32xf32>
    %295 = vector.shape_cast %294 : vector<1x4x32xf32> to vector<4x32xf32>
    %296 = vector.shape_cast %292 : vector<4x32xf32> to vector<1x4x32xf32>
    tpu.vector_store %arg17[%293, %c0_81, %c0_82], %296 {strides = array<i32>} : memref<8x4x32xf32, #tpu.memory_space<vmem>>, vector<1x4x32xf32>,
    %297 = vector.broadcast %214 : vector<4x1xf32> to vector<4x32xf32>
    %298 = arith.mulf %290, %297 : vector<4x32xf32>
    %299 = arith.index_cast %208 : i32 to index
    %c0_83 = arith.constant 0 : index
    %c0_84 = arith.constant 0 : index
    %300 = vector.load %arg18[%299, %c0_83, %c0_84] : memref<8x4x32xf32, #tpu.memory_space<vmem>>, vector<1x4x32xf32>
    %301 = vector.shape_cast %300 : vector<1x4x32xf32> to vector<4x32xf32>
    %302 = vector.shape_cast %298 : vector<4x32xf32> to vector<1x4x32xf32>
    tpu.vector_store %arg18[%299, %c0_83, %c0_84], %302 {strides = array<i32>} : memref<8x4x32xf32, #tpu.memory_space<vmem>>, vector<1x4x32xf32>,
    %c3_i32 = arith.constant 3 : i32
    %c7_i32_85 = arith.constant 7 : i32
    %303 = arith.subi %c7_i32_85, %c3_i32 : i32
    %304 = arith.index_cast %c3_i32 : i32 to index
    %c0_86 = arith.constant 0 : index
    %c0_87 = arith.constant 0 : index
    %305 = vector.load %arg2[%304, %c0_86, %c0_87] : memref<8x4x1xf32, #tpu.memory_space<vmem>>, vector<1x4x1xf32>
    %306 = vector.shape_cast %305 : vector<1x4x1xf32> to vector<4x1xf32>
    %307 = arith.index_cast %303 : i32 to index
    %c0_88 = arith.constant 0 : index
    %c0_89 = arith.constant 0 : index
    %308 = vector.load %arg2[%307, %c0_88, %c0_89] : memref<8x4x1xf32, #tpu.memory_space<vmem>>, vector<1x4x1xf32>
    %309 = vector.shape_cast %308 : vector<1x4x1xf32> to vector<4x1xf32>
    %310 = arith.index_cast %c3_i32 : i32 to index
    %c0_90 = arith.constant 0 : index
    %c0_91 = arith.constant 0 : index
    %311 = vector.load %arg16[%310, %c0_90, %c0_91] : memref<8x4x192xf32, #tpu.memory_space<vmem>>, vector<1x4x96xf32>
    %312 = vector.shape_cast %311 : vector<1x4x96xf32> to vector<4x96xf32>
    %cst_92 = arith.constant dense<0.000000e+00> : vector<4x96xf32>
    %313 = tpu.matmul %252, %9, %cst_92 {dimension_numbers = #tpu.dot_dimension_numbers<[1], [0], [0], [1], [0, 0, 1, 1], [], []>} : vector<4x32xf32>, vector<32x96xf32>, vector<4x96xf32> -> vector<4x96xf32>
    %314 = vector.extract_strided_slice %312 {offsets = [0, 0], sizes = [4, 32], strides = [1, 1]} : vector<4x96xf32> to vector<4x32xf32>
    %315 = vector.extract_strided_slice %313 {offsets = [0, 0], sizes = [4, 32], strides = [1, 1]} : vector<4x96xf32> to vector<4x32xf32>
    %316 = arith.addf %314, %315 : vector<4x32xf32>
    %317 = arith.negf %316 : vector<4x32xf32>
    %318 = math.exp %317 : vector<4x32xf32>
    %cst_93 = arith.constant 1.000000e+00 : f32
    %319 = vector.broadcast %cst_93 : f32 to vector<4x32xf32>
    %320 = arith.addf %319, %318 : vector<4x32xf32>
    %321 = arith.divf %319, %320 : vector<4x32xf32>
    %322 = vector.extract_strided_slice %312 {offsets = [0, 32], sizes = [4, 32], strides = [1, 1]} : vector<4x96xf32> to vector<4x32xf32>
    %323 = vector.extract_strided_slice %313 {offsets = [0, 32], sizes = [4, 32], strides = [1, 1]} : vector<4x96xf32> to vector<4x32xf32>
    %324 = arith.addf %322, %323 : vector<4x32xf32>
    %325 = arith.negf %324 : vector<4x32xf32>
    %326 = math.exp %325 : vector<4x32xf32>
    %cst_94 = arith.constant 1.000000e+00 : f32
    %327 = vector.broadcast %cst_94 : f32 to vector<4x32xf32>
    %328 = arith.addf %327, %326 : vector<4x32xf32>
    %329 = arith.divf %327, %328 : vector<4x32xf32>
    %330 = vector.extract_strided_slice %312 {offsets = [0, 64], sizes = [4, 32], strides = [1, 1]} : vector<4x96xf32> to vector<4x32xf32>
    %331 = vector.extract_strided_slice %313 {offsets = [0, 64], sizes = [4, 32], strides = [1, 1]} : vector<4x96xf32> to vector<4x32xf32>
    %332 = arith.addf %331, %13 : vector<4x32xf32>
    %333 = arith.mulf %321, %332 : vector<4x32xf32>
    %334 = arith.addf %330, %333 : vector<4x32xf32>
    %335 = math.tanh %334 : vector<4x32xf32>
    %cst_95 = arith.constant 1.000000e+00 : f32
    %336 = vector.broadcast %cst_95 : f32 to vector<4x32xf32>
    %337 = arith.subf %336, %329 : vector<4x32xf32>
    %338 = arith.mulf %337, %335 : vector<4x32xf32>
    %339 = arith.mulf %329, %252 : vector<4x32xf32>
    %340 = arith.addf %338, %339 : vector<4x32xf32>
    %341 = vector.broadcast %306 : vector<4x1xf32> to vector<4x32xf32>
    %342 = arith.mulf %341, %340 : vector<4x32xf32>
    %cst_96 = arith.constant 1.000000e+00 : f32
    %343 = vector.broadcast %cst_96 : f32 to vector<4x1xf32>
    %344 = arith.subf %343, %306 : vector<4x1xf32>
    %345 = vector.broadcast %344 : vector<4x1xf32> to vector<4x32xf32>
    %346 = arith.mulf %345, %252 : vector<4x32xf32>
    %347 = arith.addf %342, %346 : vector<4x32xf32>
    %348 = arith.index_cast %303 : i32 to index
    %c0_97 = arith.constant 0 : index
    %c96_98 = arith.constant 96 : index
    %349 = vector.load %arg16[%348, %c0_97, %c96_98] : memref<8x4x192xf32, #tpu.memory_space<vmem>>, vector<1x4x96xf32>
    %350 = vector.shape_cast %349 : vector<1x4x96xf32> to vector<4x96xf32>
    %cst_99 = arith.constant dense<0.000000e+00> : vector<4x96xf32>
    %351 = tpu.matmul %290, %10, %cst_99 {dimension_numbers = #tpu.dot_dimension_numbers<[1], [0], [0], [1], [0, 0, 1, 1], [], []>} : vector<4x32xf32>, vector<32x96xf32>, vector<4x96xf32> -> vector<4x96xf32>
    %352 = vector.extract_strided_slice %350 {offsets = [0, 0], sizes = [4, 32], strides = [1, 1]} : vector<4x96xf32> to vector<4x32xf32>
    %353 = vector.extract_strided_slice %351 {offsets = [0, 0], sizes = [4, 32], strides = [1, 1]} : vector<4x96xf32> to vector<4x32xf32>
    %354 = arith.addf %352, %353 : vector<4x32xf32>
    %355 = arith.negf %354 : vector<4x32xf32>
    %356 = math.exp %355 : vector<4x32xf32>
    %cst_100 = arith.constant 1.000000e+00 : f32
    %357 = vector.broadcast %cst_100 : f32 to vector<4x32xf32>
    %358 = arith.addf %357, %356 : vector<4x32xf32>
    %359 = arith.divf %357, %358 : vector<4x32xf32>
    %360 = vector.extract_strided_slice %350 {offsets = [0, 32], sizes = [4, 32], strides = [1, 1]} : vector<4x96xf32> to vector<4x32xf32>
    %361 = vector.extract_strided_slice %351 {offsets = [0, 32], sizes = [4, 32], strides = [1, 1]} : vector<4x96xf32> to vector<4x32xf32>
    %362 = arith.addf %360, %361 : vector<4x32xf32>
    %363 = arith.negf %362 : vector<4x32xf32>
    %364 = math.exp %363 : vector<4x32xf32>
    %cst_101 = arith.constant 1.000000e+00 : f32
    %365 = vector.broadcast %cst_101 : f32 to vector<4x32xf32>
    %366 = arith.addf %365, %364 : vector<4x32xf32>
    %367 = arith.divf %365, %366 : vector<4x32xf32>
    %368 = vector.extract_strided_slice %350 {offsets = [0, 64], sizes = [4, 32], strides = [1, 1]} : vector<4x96xf32> to vector<4x32xf32>
    %369 = vector.extract_strided_slice %351 {offsets = [0, 64], sizes = [4, 32], strides = [1, 1]} : vector<4x96xf32> to vector<4x32xf32>
    %370 = arith.addf %369, %16 : vector<4x32xf32>
    %371 = arith.mulf %359, %370 : vector<4x32xf32>
    %372 = arith.addf %368, %371 : vector<4x32xf32>
    %373 = math.tanh %372 : vector<4x32xf32>
    %cst_102 = arith.constant 1.000000e+00 : f32
    %374 = vector.broadcast %cst_102 : f32 to vector<4x32xf32>
    %375 = arith.subf %374, %367 : vector<4x32xf32>
    %376 = arith.mulf %375, %373 : vector<4x32xf32>
    %377 = arith.mulf %367, %290 : vector<4x32xf32>
    %378 = arith.addf %376, %377 : vector<4x32xf32>
    %379 = vector.broadcast %309 : vector<4x1xf32> to vector<4x32xf32>
    %380 = arith.mulf %379, %378 : vector<4x32xf32>
    %cst_103 = arith.constant 1.000000e+00 : f32
    %381 = vector.broadcast %cst_103 : f32 to vector<4x1xf32>
    %382 = arith.subf %381, %309 : vector<4x1xf32>
    %383 = vector.broadcast %382 : vector<4x1xf32> to vector<4x32xf32>
    %384 = arith.mulf %383, %290 : vector<4x32xf32>
    %385 = arith.addf %380, %384 : vector<4x32xf32>
    %386 = vector.broadcast %306 : vector<4x1xf32> to vector<4x32xf32>
    %387 = arith.mulf %347, %386 : vector<4x32xf32>
    %388 = arith.index_cast %c3_i32 : i32 to index
    %c0_104 = arith.constant 0 : index
    %c0_105 = arith.constant 0 : index
    %389 = vector.load %arg17[%388, %c0_104, %c0_105] : memref<8x4x32xf32, #tpu.memory_space<vmem>>, vector<1x4x32xf32>
    %390 = vector.shape_cast %389 : vector<1x4x32xf32> to vector<4x32xf32>
    %391 = vector.shape_cast %387 : vector<4x32xf32> to vector<1x4x32xf32>
    tpu.vector_store %arg17[%388, %c0_104, %c0_105], %391 {strides = array<i32>} : memref<8x4x32xf32, #tpu.memory_space<vmem>>, vector<1x4x32xf32>,
    %392 = vector.broadcast %309 : vector<4x1xf32> to vector<4x32xf32>
    %393 = arith.mulf %385, %392 : vector<4x32xf32>
    %394 = arith.index_cast %303 : i32 to index
    %c0_106 = arith.constant 0 : index
    %c0_107 = arith.constant 0 : index
    %395 = vector.load %arg18[%394, %c0_106, %c0_107] : memref<8x4x32xf32, #tpu.memory_space<vmem>>, vector<1x4x32xf32>
    %396 = vector.shape_cast %395 : vector<1x4x32xf32> to vector<4x32xf32>
    %397 = vector.shape_cast %393 : vector<4x32xf32> to vector<1x4x32xf32>
    tpu.vector_store %arg18[%394, %c0_106, %c0_107], %397 {strides = array<i32>} : memref<8x4x32xf32, #tpu.memory_space<vmem>>, vector<1x4x32xf32>,
    %c4_i32 = arith.constant 4 : i32
    %c7_i32_108 = arith.constant 7 : i32
    %398 = arith.subi %c7_i32_108, %c4_i32 : i32
    %399 = arith.index_cast %c4_i32 : i32 to index
    %c0_109 = arith.constant 0 : index
    %c0_110 = arith.constant 0 : index
    %400 = vector.load %arg2[%399, %c0_109, %c0_110] : memref<8x4x1xf32, #tpu.memory_space<vmem>>, vector<1x4x1xf32>
    %401 = vector.shape_cast %400 : vector<1x4x1xf32> to vector<4x1xf32>
    %402 = arith.index_cast %398 : i32 to index
    %c0_111 = arith.constant 0 : index
    %c0_112 = arith.constant 0 : index
    %403 = vector.load %arg2[%402, %c0_111, %c0_112] : memref<8x4x1xf32, #tpu.memory_space<vmem>>, vector<1x4x1xf32>
    %404 = vector.shape_cast %403 : vector<1x4x1xf32> to vector<4x1xf32>
    %405 = arith.index_cast %c4_i32 : i32 to index
    %c0_113 = arith.constant 0 : index
    %c0_114 = arith.constant 0 : index
    %406 = vector.load %arg16[%405, %c0_113, %c0_114] : memref<8x4x192xf32, #tpu.memory_space<vmem>>, vector<1x4x96xf32>
    %407 = vector.shape_cast %406 : vector<1x4x96xf32> to vector<4x96xf32>
    %cst_115 = arith.constant dense<0.000000e+00> : vector<4x96xf32>
    %408 = tpu.matmul %347, %9, %cst_115 {dimension_numbers = #tpu.dot_dimension_numbers<[1], [0], [0], [1], [0, 0, 1, 1], [], []>} : vector<4x32xf32>, vector<32x96xf32>, vector<4x96xf32> -> vector<4x96xf32>
    %409 = vector.extract_strided_slice %407 {offsets = [0, 0], sizes = [4, 32], strides = [1, 1]} : vector<4x96xf32> to vector<4x32xf32>
    %410 = vector.extract_strided_slice %408 {offsets = [0, 0], sizes = [4, 32], strides = [1, 1]} : vector<4x96xf32> to vector<4x32xf32>
    %411 = arith.addf %409, %410 : vector<4x32xf32>
    %412 = arith.negf %411 : vector<4x32xf32>
    %413 = math.exp %412 : vector<4x32xf32>
    %cst_116 = arith.constant 1.000000e+00 : f32
    %414 = vector.broadcast %cst_116 : f32 to vector<4x32xf32>
    %415 = arith.addf %414, %413 : vector<4x32xf32>
    %416 = arith.divf %414, %415 : vector<4x32xf32>
    %417 = vector.extract_strided_slice %407 {offsets = [0, 32], sizes = [4, 32], strides = [1, 1]} : vector<4x96xf32> to vector<4x32xf32>
    %418 = vector.extract_strided_slice %408 {offsets = [0, 32], sizes = [4, 32], strides = [1, 1]} : vector<4x96xf32> to vector<4x32xf32>
    %419 = arith.addf %417, %418 : vector<4x32xf32>
    %420 = arith.negf %419 : vector<4x32xf32>
    %421 = math.exp %420 : vector<4x32xf32>
    %cst_117 = arith.constant 1.000000e+00 : f32
    %422 = vector.broadcast %cst_117 : f32 to vector<4x32xf32>
    %423 = arith.addf %422, %421 : vector<4x32xf32>
    %424 = arith.divf %422, %423 : vector<4x32xf32>
    %425 = vector.extract_strided_slice %407 {offsets = [0, 64], sizes = [4, 32], strides = [1, 1]} : vector<4x96xf32> to vector<4x32xf32>
    %426 = vector.extract_strided_slice %408 {offsets = [0, 64], sizes = [4, 32], strides = [1, 1]} : vector<4x96xf32> to vector<4x32xf32>
    %427 = arith.addf %426, %13 : vector<4x32xf32>
    %428 = arith.mulf %416, %427 : vector<4x32xf32>
    %429 = arith.addf %425, %428 : vector<4x32xf32>
    %430 = math.tanh %429 : vector<4x32xf32>
    %cst_118 = arith.constant 1.000000e+00 : f32
    %431 = vector.broadcast %cst_118 : f32 to vector<4x32xf32>
    %432 = arith.subf %431, %424 : vector<4x32xf32>
    %433 = arith.mulf %432, %430 : vector<4x32xf32>
    %434 = arith.mulf %424, %347 : vector<4x32xf32>
    %435 = arith.addf %433, %434 : vector<4x32xf32>
    %436 = vector.broadcast %401 : vector<4x1xf32> to vector<4x32xf32>
    %437 = arith.mulf %436, %435 : vector<4x32xf32>
    %cst_119 = arith.constant 1.000000e+00 : f32
    %438 = vector.broadcast %cst_119 : f32 to vector<4x1xf32>
    %439 = arith.subf %438, %401 : vector<4x1xf32>
    %440 = vector.broadcast %439 : vector<4x1xf32> to vector<4x32xf32>
    %441 = arith.mulf %440, %347 : vector<4x32xf32>
    %442 = arith.addf %437, %441 : vector<4x32xf32>
    %443 = arith.index_cast %398 : i32 to index
    %c0_120 = arith.constant 0 : index
    %c96_121 = arith.constant 96 : index
    %444 = vector.load %arg16[%443, %c0_120, %c96_121] : memref<8x4x192xf32, #tpu.memory_space<vmem>>, vector<1x4x96xf32>
    %445 = vector.shape_cast %444 : vector<1x4x96xf32> to vector<4x96xf32>
    %cst_122 = arith.constant dense<0.000000e+00> : vector<4x96xf32>
    %446 = tpu.matmul %385, %10, %cst_122 {dimension_numbers = #tpu.dot_dimension_numbers<[1], [0], [0], [1], [0, 0, 1, 1], [], []>} : vector<4x32xf32>, vector<32x96xf32>, vector<4x96xf32> -> vector<4x96xf32>
    %447 = vector.extract_strided_slice %445 {offsets = [0, 0], sizes = [4, 32], strides = [1, 1]} : vector<4x96xf32> to vector<4x32xf32>
    %448 = vector.extract_strided_slice %446 {offsets = [0, 0], sizes = [4, 32], strides = [1, 1]} : vector<4x96xf32> to vector<4x32xf32>
    %449 = arith.addf %447, %448 : vector<4x32xf32>
    %450 = arith.negf %449 : vector<4x32xf32>
    %451 = math.exp %450 : vector<4x32xf32>
    %cst_123 = arith.constant 1.000000e+00 : f32
    %452 = vector.broadcast %cst_123 : f32 to vector<4x32xf32>
    %453 = arith.addf %452, %451 : vector<4x32xf32>
    %454 = arith.divf %452, %453 : vector<4x32xf32>
    %455 = vector.extract_strided_slice %445 {offsets = [0, 32], sizes = [4, 32], strides = [1, 1]} : vector<4x96xf32> to vector<4x32xf32>
    %456 = vector.extract_strided_slice %446 {offsets = [0, 32], sizes = [4, 32], strides = [1, 1]} : vector<4x96xf32> to vector<4x32xf32>
    %457 = arith.addf %455, %456 : vector<4x32xf32>
    %458 = arith.negf %457 : vector<4x32xf32>
    %459 = math.exp %458 : vector<4x32xf32>
    %cst_124 = arith.constant 1.000000e+00 : f32
    %460 = vector.broadcast %cst_124 : f32 to vector<4x32xf32>
    %461 = arith.addf %460, %459 : vector<4x32xf32>
    %462 = arith.divf %460, %461 : vector<4x32xf32>
    %463 = vector.extract_strided_slice %445 {offsets = [0, 64], sizes = [4, 32], strides = [1, 1]} : vector<4x96xf32> to vector<4x32xf32>
    %464 = vector.extract_strided_slice %446 {offsets = [0, 64], sizes = [4, 32], strides = [1, 1]} : vector<4x96xf32> to vector<4x32xf32>
    %465 = arith.addf %464, %16 : vector<4x32xf32>
    %466 = arith.mulf %454, %465 : vector<4x32xf32>
    %467 = arith.addf %463, %466 : vector<4x32xf32>
    %468 = math.tanh %467 : vector<4x32xf32>
    %cst_125 = arith.constant 1.000000e+00 : f32
    %469 = vector.broadcast %cst_125 : f32 to vector<4x32xf32>
    %470 = arith.subf %469, %462 : vector<4x32xf32>
    %471 = arith.mulf %470, %468 : vector<4x32xf32>
    %472 = arith.mulf %462, %385 : vector<4x32xf32>
    %473 = arith.addf %471, %472 : vector<4x32xf32>
    %474 = vector.broadcast %404 : vector<4x1xf32> to vector<4x32xf32>
    %475 = arith.mulf %474, %473 : vector<4x32xf32>
    %cst_126 = arith.constant 1.000000e+00 : f32
    %476 = vector.broadcast %cst_126 : f32 to vector<4x1xf32>
    %477 = arith.subf %476, %404 : vector<4x1xf32>
    %478 = vector.broadcast %477 : vector<4x1xf32> to vector<4x32xf32>
    %479 = arith.mulf %478, %385 : vector<4x32xf32>
    %480 = arith.addf %475, %479 : vector<4x32xf32>
    %481 = vector.broadcast %401 : vector<4x1xf32> to vector<4x32xf32>
    %482 = arith.mulf %442, %481 : vector<4x32xf32>
    %483 = arith.index_cast %c4_i32 : i32 to index
    %c0_127 = arith.constant 0 : index
    %c0_128 = arith.constant 0 : index
    %484 = vector.load %arg17[%483, %c0_127, %c0_128] : memref<8x4x32xf32, #tpu.memory_space<vmem>>, vector<1x4x32xf32>
    %485 = vector.shape_cast %484 : vector<1x4x32xf32> to vector<4x32xf32>
    %486 = vector.shape_cast %482 : vector<4x32xf32> to vector<1x4x32xf32>
    tpu.vector_store %arg17[%483, %c0_127, %c0_128], %486 {strides = array<i32>} : memref<8x4x32xf32, #tpu.memory_space<vmem>>, vector<1x4x32xf32>,
    %487 = vector.broadcast %404 : vector<4x1xf32> to vector<4x32xf32>
    %488 = arith.mulf %480, %487 : vector<4x32xf32>
    %489 = arith.index_cast %398 : i32 to index
    %c0_129 = arith.constant 0 : index
    %c0_130 = arith.constant 0 : index
    %490 = vector.load %arg18[%489, %c0_129, %c0_130] : memref<8x4x32xf32, #tpu.memory_space<vmem>>, vector<1x4x32xf32>
    %491 = vector.shape_cast %490 : vector<1x4x32xf32> to vector<4x32xf32>
    %492 = vector.shape_cast %488 : vector<4x32xf32> to vector<1x4x32xf32>
    tpu.vector_store %arg18[%489, %c0_129, %c0_130], %492 {strides = array<i32>} : memref<8x4x32xf32, #tpu.memory_space<vmem>>, vector<1x4x32xf32>,
    %c5_i32 = arith.constant 5 : i32
    %c7_i32_131 = arith.constant 7 : i32
    %493 = arith.subi %c7_i32_131, %c5_i32 : i32
    %494 = arith.index_cast %c5_i32 : i32 to index
    %c0_132 = arith.constant 0 : index
    %c0_133 = arith.constant 0 : index
    %495 = vector.load %arg2[%494, %c0_132, %c0_133] : memref<8x4x1xf32, #tpu.memory_space<vmem>>, vector<1x4x1xf32>
    %496 = vector.shape_cast %495 : vector<1x4x1xf32> to vector<4x1xf32>
    %497 = arith.index_cast %493 : i32 to index
    %c0_134 = arith.constant 0 : index
    %c0_135 = arith.constant 0 : index
    %498 = vector.load %arg2[%497, %c0_134, %c0_135] : memref<8x4x1xf32, #tpu.memory_space<vmem>>, vector<1x4x1xf32>
    %499 = vector.shape_cast %498 : vector<1x4x1xf32> to vector<4x1xf32>
    %500 = arith.index_cast %c5_i32 : i32 to index
    %c0_136 = arith.constant 0 : index
    %c0_137 = arith.constant 0 : index
    %501 = vector.load %arg16[%500, %c0_136, %c0_137] : memref<8x4x192xf32, #tpu.memory_space<vmem>>, vector<1x4x96xf32>
    %502 = vector.shape_cast %501 : vector<1x4x96xf32> to vector<4x96xf32>
    %cst_138 = arith.constant dense<0.000000e+00> : vector<4x96xf32>
    %503 = tpu.matmul %442, %9, %cst_138 {dimension_numbers = #tpu.dot_dimension_numbers<[1], [0], [0], [1], [0, 0, 1, 1], [], []>} : vector<4x32xf32>, vector<32x96xf32>, vector<4x96xf32> -> vector<4x96xf32>
    %504 = vector.extract_strided_slice %502 {offsets = [0, 0], sizes = [4, 32], strides = [1, 1]} : vector<4x96xf32> to vector<4x32xf32>
    %505 = vector.extract_strided_slice %503 {offsets = [0, 0], sizes = [4, 32], strides = [1, 1]} : vector<4x96xf32> to vector<4x32xf32>
    %506 = arith.addf %504, %505 : vector<4x32xf32>
    %507 = arith.negf %506 : vector<4x32xf32>
    %508 = math.exp %507 : vector<4x32xf32>
    %cst_139 = arith.constant 1.000000e+00 : f32
    %509 = vector.broadcast %cst_139 : f32 to vector<4x32xf32>
    %510 = arith.addf %509, %508 : vector<4x32xf32>
    %511 = arith.divf %509, %510 : vector<4x32xf32>
    %512 = vector.extract_strided_slice %502 {offsets = [0, 32], sizes = [4, 32], strides = [1, 1]} : vector<4x96xf32> to vector<4x32xf32>
    %513 = vector.extract_strided_slice %503 {offsets = [0, 32], sizes = [4, 32], strides = [1, 1]} : vector<4x96xf32> to vector<4x32xf32>
    %514 = arith.addf %512, %513 : vector<4x32xf32>
    %515 = arith.negf %514 : vector<4x32xf32>
    %516 = math.exp %515 : vector<4x32xf32>
    %cst_140 = arith.constant 1.000000e+00 : f32
    %517 = vector.broadcast %cst_140 : f32 to vector<4x32xf32>
    %518 = arith.addf %517, %516 : vector<4x32xf32>
    %519 = arith.divf %517, %518 : vector<4x32xf32>
    %520 = vector.extract_strided_slice %502 {offsets = [0, 64], sizes = [4, 32], strides = [1, 1]} : vector<4x96xf32> to vector<4x32xf32>
    %521 = vector.extract_strided_slice %503 {offsets = [0, 64], sizes = [4, 32], strides = [1, 1]} : vector<4x96xf32> to vector<4x32xf32>
    %522 = arith.addf %521, %13 : vector<4x32xf32>
    %523 = arith.mulf %511, %522 : vector<4x32xf32>
    %524 = arith.addf %520, %523 : vector<4x32xf32>
    %525 = math.tanh %524 : vector<4x32xf32>
    %cst_141 = arith.constant 1.000000e+00 : f32
    %526 = vector.broadcast %cst_141 : f32 to vector<4x32xf32>
    %527 = arith.subf %526, %519 : vector<4x32xf32>
    %528 = arith.mulf %527, %525 : vector<4x32xf32>
    %529 = arith.mulf %519, %442 : vector<4x32xf32>
    %530 = arith.addf %528, %529 : vector<4x32xf32>
    %531 = vector.broadcast %496 : vector<4x1xf32> to vector<4x32xf32>
    %532 = arith.mulf %531, %530 : vector<4x32xf32>
    %cst_142 = arith.constant 1.000000e+00 : f32
    %533 = vector.broadcast %cst_142 : f32 to vector<4x1xf32>
    %534 = arith.subf %533, %496 : vector<4x1xf32>
    %535 = vector.broadcast %534 : vector<4x1xf32> to vector<4x32xf32>
    %536 = arith.mulf %535, %442 : vector<4x32xf32>
    %537 = arith.addf %532, %536 : vector<4x32xf32>
    %538 = arith.index_cast %493 : i32 to index
    %c0_143 = arith.constant 0 : index
    %c96_144 = arith.constant 96 : index
    %539 = vector.load %arg16[%538, %c0_143, %c96_144] : memref<8x4x192xf32, #tpu.memory_space<vmem>>, vector<1x4x96xf32>
    %540 = vector.shape_cast %539 : vector<1x4x96xf32> to vector<4x96xf32>
    %cst_145 = arith.constant dense<0.000000e+00> : vector<4x96xf32>
    %541 = tpu.matmul %480, %10, %cst_145 {dimension_numbers = #tpu.dot_dimension_numbers<[1], [0], [0], [1], [0, 0, 1, 1], [], []>} : vector<4x32xf32>, vector<32x96xf32>, vector<4x96xf32> -> vector<4x96xf32>
    %542 = vector.extract_strided_slice %540 {offsets = [0, 0], sizes = [4, 32], strides = [1, 1]} : vector<4x96xf32> to vector<4x32xf32>
    %543 = vector.extract_strided_slice %541 {offsets = [0, 0], sizes = [4, 32], strides = [1, 1]} : vector<4x96xf32> to vector<4x32xf32>
    %544 = arith.addf %542, %543 : vector<4x32xf32>
    %545 = arith.negf %544 : vector<4x32xf32>
    %546 = math.exp %545 : vector<4x32xf32>
    %cst_146 = arith.constant 1.000000e+00 : f32
    %547 = vector.broadcast %cst_146 : f32 to vector<4x32xf32>
    %548 = arith.addf %547, %546 : vector<4x32xf32>
    %549 = arith.divf %547, %548 : vector<4x32xf32>
    %550 = vector.extract_strided_slice %540 {offsets = [0, 32], sizes = [4, 32], strides = [1, 1]} : vector<4x96xf32> to vector<4x32xf32>
    %551 = vector.extract_strided_slice %541 {offsets = [0, 32], sizes = [4, 32], strides = [1, 1]} : vector<4x96xf32> to vector<4x32xf32>
    %552 = arith.addf %550, %551 : vector<4x32xf32>
    %553 = arith.negf %552 : vector<4x32xf32>
    %554 = math.exp %553 : vector<4x32xf32>
    %cst_147 = arith.constant 1.000000e+00 : f32
    %555 = vector.broadcast %cst_147 : f32 to vector<4x32xf32>
    %556 = arith.addf %555, %554 : vector<4x32xf32>
    %557 = arith.divf %555, %556 : vector<4x32xf32>
    %558 = vector.extract_strided_slice %540 {offsets = [0, 64], sizes = [4, 32], strides = [1, 1]} : vector<4x96xf32> to vector<4x32xf32>
    %559 = vector.extract_strided_slice %541 {offsets = [0, 64], sizes = [4, 32], strides = [1, 1]} : vector<4x96xf32> to vector<4x32xf32>
    %560 = arith.addf %559, %16 : vector<4x32xf32>
    %561 = arith.mulf %549, %560 : vector<4x32xf32>
    %562 = arith.addf %558, %561 : vector<4x32xf32>
    %563 = math.tanh %562 : vector<4x32xf32>
    %cst_148 = arith.constant 1.000000e+00 : f32
    %564 = vector.broadcast %cst_148 : f32 to vector<4x32xf32>
    %565 = arith.subf %564, %557 : vector<4x32xf32>
    %566 = arith.mulf %565, %563 : vector<4x32xf32>
    %567 = arith.mulf %557, %480 : vector<4x32xf32>
    %568 = arith.addf %566, %567 : vector<4x32xf32>
    %569 = vector.broadcast %499 : vector<4x1xf32> to vector<4x32xf32>
    %570 = arith.mulf %569, %568 : vector<4x32xf32>
    %cst_149 = arith.constant 1.000000e+00 : f32
    %571 = vector.broadcast %cst_149 : f32 to vector<4x1xf32>
    %572 = arith.subf %571, %499 : vector<4x1xf32>
    %573 = vector.broadcast %572 : vector<4x1xf32> to vector<4x32xf32>
    %574 = arith.mulf %573, %480 : vector<4x32xf32>
    %575 = arith.addf %570, %574 : vector<4x32xf32>
    %576 = vector.broadcast %496 : vector<4x1xf32> to vector<4x32xf32>
    %577 = arith.mulf %537, %576 : vector<4x32xf32>
    %578 = arith.index_cast %c5_i32 : i32 to index
    %c0_150 = arith.constant 0 : index
    %c0_151 = arith.constant 0 : index
    %579 = vector.load %arg17[%578, %c0_150, %c0_151] : memref<8x4x32xf32, #tpu.memory_space<vmem>>, vector<1x4x32xf32>
    %580 = vector.shape_cast %579 : vector<1x4x32xf32> to vector<4x32xf32>
    %581 = vector.shape_cast %577 : vector<4x32xf32> to vector<1x4x32xf32>
    tpu.vector_store %arg17[%578, %c0_150, %c0_151], %581 {strides = array<i32>} : memref<8x4x32xf32, #tpu.memory_space<vmem>>, vector<1x4x32xf32>,
    %582 = vector.broadcast %499 : vector<4x1xf32> to vector<4x32xf32>
    %583 = arith.mulf %575, %582 : vector<4x32xf32>
    %584 = arith.index_cast %493 : i32 to index
    %c0_152 = arith.constant 0 : index
    %c0_153 = arith.constant 0 : index
    %585 = vector.load %arg18[%584, %c0_152, %c0_153] : memref<8x4x32xf32, #tpu.memory_space<vmem>>, vector<1x4x32xf32>
    %586 = vector.shape_cast %585 : vector<1x4x32xf32> to vector<4x32xf32>
    %587 = vector.shape_cast %583 : vector<4x32xf32> to vector<1x4x32xf32>
    tpu.vector_store %arg18[%584, %c0_152, %c0_153], %587 {strides = array<i32>} : memref<8x4x32xf32, #tpu.memory_space<vmem>>, vector<1x4x32xf32>,
    %c6_i32 = arith.constant 6 : i32
    %c7_i32_154 = arith.constant 7 : i32
    %588 = arith.subi %c7_i32_154, %c6_i32 : i32
    %589 = arith.index_cast %c6_i32 : i32 to index
    %c0_155 = arith.constant 0 : index
    %c0_156 = arith.constant 0 : index
    %590 = vector.load %arg2[%589, %c0_155, %c0_156] : memref<8x4x1xf32, #tpu.memory_space<vmem>>, vector<1x4x1xf32>
    %591 = vector.shape_cast %590 : vector<1x4x1xf32> to vector<4x1xf32>
    %592 = arith.index_cast %588 : i32 to index
    %c0_157 = arith.constant 0 : index
    %c0_158 = arith.constant 0 : index
    %593 = vector.load %arg2[%592, %c0_157, %c0_158] : memref<8x4x1xf32, #tpu.memory_space<vmem>>, vector<1x4x1xf32>
    %594 = vector.shape_cast %593 : vector<1x4x1xf32> to vector<4x1xf32>
    %595 = arith.index_cast %c6_i32 : i32 to index
    %c0_159 = arith.constant 0 : index
    %c0_160 = arith.constant 0 : index
    %596 = vector.load %arg16[%595, %c0_159, %c0_160] : memref<8x4x192xf32, #tpu.memory_space<vmem>>, vector<1x4x96xf32>
    %597 = vector.shape_cast %596 : vector<1x4x96xf32> to vector<4x96xf32>
    %cst_161 = arith.constant dense<0.000000e+00> : vector<4x96xf32>
    %598 = tpu.matmul %537, %9, %cst_161 {dimension_numbers = #tpu.dot_dimension_numbers<[1], [0], [0], [1], [0, 0, 1, 1], [], []>} : vector<4x32xf32>, vector<32x96xf32>, vector<4x96xf32> -> vector<4x96xf32>
    %599 = vector.extract_strided_slice %597 {offsets = [0, 0], sizes = [4, 32], strides = [1, 1]} : vector<4x96xf32> to vector<4x32xf32>
    %600 = vector.extract_strided_slice %598 {offsets = [0, 0], sizes = [4, 32], strides = [1, 1]} : vector<4x96xf32> to vector<4x32xf32>
    %601 = arith.addf %599, %600 : vector<4x32xf32>
    %602 = arith.negf %601 : vector<4x32xf32>
    %603 = math.exp %602 : vector<4x32xf32>
    %cst_162 = arith.constant 1.000000e+00 : f32
    %604 = vector.broadcast %cst_162 : f32 to vector<4x32xf32>
    %605 = arith.addf %604, %603 : vector<4x32xf32>
    %606 = arith.divf %604, %605 : vector<4x32xf32>
    %607 = vector.extract_strided_slice %597 {offsets = [0, 32], sizes = [4, 32], strides = [1, 1]} : vector<4x96xf32> to vector<4x32xf32>
    %608 = vector.extract_strided_slice %598 {offsets = [0, 32], sizes = [4, 32], strides = [1, 1]} : vector<4x96xf32> to vector<4x32xf32>
    %609 = arith.addf %607, %608 : vector<4x32xf32>
    %610 = arith.negf %609 : vector<4x32xf32>
    %611 = math.exp %610 : vector<4x32xf32>
    %cst_163 = arith.constant 1.000000e+00 : f32
    %612 = vector.broadcast %cst_163 : f32 to vector<4x32xf32>
    %613 = arith.addf %612, %611 : vector<4x32xf32>
    %614 = arith.divf %612, %613 : vector<4x32xf32>
    %615 = vector.extract_strided_slice %597 {offsets = [0, 64], sizes = [4, 32], strides = [1, 1]} : vector<4x96xf32> to vector<4x32xf32>
    %616 = vector.extract_strided_slice %598 {offsets = [0, 64], sizes = [4, 32], strides = [1, 1]} : vector<4x96xf32> to vector<4x32xf32>
    %617 = arith.addf %616, %13 : vector<4x32xf32>
    %618 = arith.mulf %606, %617 : vector<4x32xf32>
    %619 = arith.addf %615, %618 : vector<4x32xf32>
    %620 = math.tanh %619 : vector<4x32xf32>
    %cst_164 = arith.constant 1.000000e+00 : f32
    %621 = vector.broadcast %cst_164 : f32 to vector<4x32xf32>
    %622 = arith.subf %621, %614 : vector<4x32xf32>
    %623 = arith.mulf %622, %620 : vector<4x32xf32>
    %624 = arith.mulf %614, %537 : vector<4x32xf32>
    %625 = arith.addf %623, %624 : vector<4x32xf32>
    %626 = vector.broadcast %591 : vector<4x1xf32> to vector<4x32xf32>
    %627 = arith.mulf %626, %625 : vector<4x32xf32>
    %cst_165 = arith.constant 1.000000e+00 : f32
    %628 = vector.broadcast %cst_165 : f32 to vector<4x1xf32>
    %629 = arith.subf %628, %591 : vector<4x1xf32>
    %630 = vector.broadcast %629 : vector<4x1xf32> to vector<4x32xf32>
    %631 = arith.mulf %630, %537 : vector<4x32xf32>
    %632 = arith.addf %627, %631 : vector<4x32xf32>
    %633 = arith.index_cast %588 : i32 to index
    %c0_166 = arith.constant 0 : index
    %c96_167 = arith.constant 96 : index
    %634 = vector.load %arg16[%633, %c0_166, %c96_167] : memref<8x4x192xf32, #tpu.memory_space<vmem>>, vector<1x4x96xf32>
    %635 = vector.shape_cast %634 : vector<1x4x96xf32> to vector<4x96xf32>
    %cst_168 = arith.constant dense<0.000000e+00> : vector<4x96xf32>
    %636 = tpu.matmul %575, %10, %cst_168 {dimension_numbers = #tpu.dot_dimension_numbers<[1], [0], [0], [1], [0, 0, 1, 1], [], []>} : vector<4x32xf32>, vector<32x96xf32>, vector<4x96xf32> -> vector<4x96xf32>
    %637 = vector.extract_strided_slice %635 {offsets = [0, 0], sizes = [4, 32], strides = [1, 1]} : vector<4x96xf32> to vector<4x32xf32>
    %638 = vector.extract_strided_slice %636 {offsets = [0, 0], sizes = [4, 32], strides = [1, 1]} : vector<4x96xf32> to vector<4x32xf32>
    %639 = arith.addf %637, %638 : vector<4x32xf32>
    %640 = arith.negf %639 : vector<4x32xf32>
    %641 = math.exp %640 : vector<4x32xf32>
    %cst_169 = arith.constant 1.000000e+00 : f32
    %642 = vector.broadcast %cst_169 : f32 to vector<4x32xf32>
    %643 = arith.addf %642, %641 : vector<4x32xf32>
    %644 = arith.divf %642, %643 : vector<4x32xf32>
    %645 = vector.extract_strided_slice %635 {offsets = [0, 32], sizes = [4, 32], strides = [1, 1]} : vector<4x96xf32> to vector<4x32xf32>
    %646 = vector.extract_strided_slice %636 {offsets = [0, 32], sizes = [4, 32], strides = [1, 1]} : vector<4x96xf32> to vector<4x32xf32>
    %647 = arith.addf %645, %646 : vector<4x32xf32>
    %648 = arith.negf %647 : vector<4x32xf32>
    %649 = math.exp %648 : vector<4x32xf32>
    %cst_170 = arith.constant 1.000000e+00 : f32
    %650 = vector.broadcast %cst_170 : f32 to vector<4x32xf32>
    %651 = arith.addf %650, %649 : vector<4x32xf32>
    %652 = arith.divf %650, %651 : vector<4x32xf32>
    %653 = vector.extract_strided_slice %635 {offsets = [0, 64], sizes = [4, 32], strides = [1, 1]} : vector<4x96xf32> to vector<4x32xf32>
    %654 = vector.extract_strided_slice %636 {offsets = [0, 64], sizes = [4, 32], strides = [1, 1]} : vector<4x96xf32> to vector<4x32xf32>
    %655 = arith.addf %654, %16 : vector<4x32xf32>
    %656 = arith.mulf %644, %655 : vector<4x32xf32>
    %657 = arith.addf %653, %656 : vector<4x32xf32>
    %658 = math.tanh %657 : vector<4x32xf32>
    %cst_171 = arith.constant 1.000000e+00 : f32
    %659 = vector.broadcast %cst_171 : f32 to vector<4x32xf32>
    %660 = arith.subf %659, %652 : vector<4x32xf32>
    %661 = arith.mulf %660, %658 : vector<4x32xf32>
    %662 = arith.mulf %652, %575 : vector<4x32xf32>
    %663 = arith.addf %661, %662 : vector<4x32xf32>
    %664 = vector.broadcast %594 : vector<4x1xf32> to vector<4x32xf32>
    %665 = arith.mulf %664, %663 : vector<4x32xf32>
    %cst_172 = arith.constant 1.000000e+00 : f32
    %666 = vector.broadcast %cst_172 : f32 to vector<4x1xf32>
    %667 = arith.subf %666, %594 : vector<4x1xf32>
    %668 = vector.broadcast %667 : vector<4x1xf32> to vector<4x32xf32>
    %669 = arith.mulf %668, %575 : vector<4x32xf32>
    %670 = arith.addf %665, %669 : vector<4x32xf32>
    %671 = vector.broadcast %591 : vector<4x1xf32> to vector<4x32xf32>
    %672 = arith.mulf %632, %671 : vector<4x32xf32>
    %673 = arith.index_cast %c6_i32 : i32 to index
    %c0_173 = arith.constant 0 : index
    %c0_174 = arith.constant 0 : index
    %674 = vector.load %arg17[%673, %c0_173, %c0_174] : memref<8x4x32xf32, #tpu.memory_space<vmem>>, vector<1x4x32xf32>
    %675 = vector.shape_cast %674 : vector<1x4x32xf32> to vector<4x32xf32>
    %676 = vector.shape_cast %672 : vector<4x32xf32> to vector<1x4x32xf32>
    tpu.vector_store %arg17[%673, %c0_173, %c0_174], %676 {strides = array<i32>} : memref<8x4x32xf32, #tpu.memory_space<vmem>>, vector<1x4x32xf32>,
    %677 = vector.broadcast %594 : vector<4x1xf32> to vector<4x32xf32>
    %678 = arith.mulf %670, %677 : vector<4x32xf32>
    %679 = arith.index_cast %588 : i32 to index
    %c0_175 = arith.constant 0 : index
    %c0_176 = arith.constant 0 : index
    %680 = vector.load %arg18[%679, %c0_175, %c0_176] : memref<8x4x32xf32, #tpu.memory_space<vmem>>, vector<1x4x32xf32>
    %681 = vector.shape_cast %680 : vector<1x4x32xf32> to vector<4x32xf32>
    %682 = vector.shape_cast %678 : vector<4x32xf32> to vector<1x4x32xf32>
    tpu.vector_store %arg18[%679, %c0_175, %c0_176], %682 {strides = array<i32>} : memref<8x4x32xf32, #tpu.memory_space<vmem>>, vector<1x4x32xf32>,
    %c7_i32_177 = arith.constant 7 : i32
    %c7_i32_178 = arith.constant 7 : i32
    %683 = arith.subi %c7_i32_178, %c7_i32_177 : i32
    %684 = arith.index_cast %c7_i32_177 : i32 to index
    %c0_179 = arith.constant 0 : index
    %c0_180 = arith.constant 0 : index
    %685 = vector.load %arg2[%684, %c0_179, %c0_180] : memref<8x4x1xf32, #tpu.memory_space<vmem>>, vector<1x4x1xf32>
    %686 = vector.shape_cast %685 : vector<1x4x1xf32> to vector<4x1xf32>
    %687 = arith.index_cast %683 : i32 to index
    %c0_181 = arith.constant 0 : index
    %c0_182 = arith.constant 0 : index
    %688 = vector.load %arg2[%687, %c0_181, %c0_182] : memref<8x4x1xf32, #tpu.memory_space<vmem>>, vector<1x4x1xf32>
    %689 = vector.shape_cast %688 : vector<1x4x1xf32> to vector<4x1xf32>
    %690 = arith.index_cast %c7_i32_177 : i32 to index
    %c0_183 = arith.constant 0 : index
    %c0_184 = arith.constant 0 : index
    %691 = vector.load %arg16[%690, %c0_183, %c0_184] : memref<8x4x192xf32, #tpu.memory_space<vmem>>, vector<1x4x96xf32>
    %692 = vector.shape_cast %691 : vector<1x4x96xf32> to vector<4x96xf32>
    %cst_185 = arith.constant dense<0.000000e+00> : vector<4x96xf32>
    %693 = tpu.matmul %632, %9, %cst_185 {dimension_numbers = #tpu.dot_dimension_numbers<[1], [0], [0], [1], [0, 0, 1, 1], [], []>} : vector<4x32xf32>, vector<32x96xf32>, vector<4x96xf32> -> vector<4x96xf32>
    %694 = vector.extract_strided_slice %692 {offsets = [0, 0], sizes = [4, 32], strides = [1, 1]} : vector<4x96xf32> to vector<4x32xf32>
    %695 = vector.extract_strided_slice %693 {offsets = [0, 0], sizes = [4, 32], strides = [1, 1]} : vector<4x96xf32> to vector<4x32xf32>
    %696 = arith.addf %694, %695 : vector<4x32xf32>
    %697 = arith.negf %696 : vector<4x32xf32>
    %698 = math.exp %697 : vector<4x32xf32>
    %cst_186 = arith.constant 1.000000e+00 : f32
    %699 = vector.broadcast %cst_186 : f32 to vector<4x32xf32>
    %700 = arith.addf %699, %698 : vector<4x32xf32>
    %701 = arith.divf %699, %700 : vector<4x32xf32>
    %702 = vector.extract_strided_slice %692 {offsets = [0, 32], sizes = [4, 32], strides = [1, 1]} : vector<4x96xf32> to vector<4x32xf32>
    %703 = vector.extract_strided_slice %693 {offsets = [0, 32], sizes = [4, 32], strides = [1, 1]} : vector<4x96xf32> to vector<4x32xf32>
    %704 = arith.addf %702, %703 : vector<4x32xf32>
    %705 = arith.negf %704 : vector<4x32xf32>
    %706 = math.exp %705 : vector<4x32xf32>
    %cst_187 = arith.constant 1.000000e+00 : f32
    %707 = vector.broadcast %cst_187 : f32 to vector<4x32xf32>
    %708 = arith.addf %707, %706 : vector<4x32xf32>
    %709 = arith.divf %707, %708 : vector<4x32xf32>
    %710 = vector.extract_strided_slice %692 {offsets = [0, 64], sizes = [4, 32], strides = [1, 1]} : vector<4x96xf32> to vector<4x32xf32>
    %711 = vector.extract_strided_slice %693 {offsets = [0, 64], sizes = [4, 32], strides = [1, 1]} : vector<4x96xf32> to vector<4x32xf32>
    %712 = arith.addf %711, %13 : vector<4x32xf32>
    %713 = arith.mulf %701, %712 : vector<4x32xf32>
    %714 = arith.addf %710, %713 : vector<4x32xf32>
    %715 = math.tanh %714 : vector<4x32xf32>
    %cst_188 = arith.constant 1.000000e+00 : f32
    %716 = vector.broadcast %cst_188 : f32 to vector<4x32xf32>
    %717 = arith.subf %716, %709 : vector<4x32xf32>
    %718 = arith.mulf %717, %715 : vector<4x32xf32>
    %719 = arith.mulf %709, %632 : vector<4x32xf32>
    %720 = arith.addf %718, %719 : vector<4x32xf32>
    %721 = vector.broadcast %686 : vector<4x1xf32> to vector<4x32xf32>
    %722 = arith.mulf %721, %720 : vector<4x32xf32>
    %cst_189 = arith.constant 1.000000e+00 : f32
    %723 = vector.broadcast %cst_189 : f32 to vector<4x1xf32>
    %724 = arith.subf %723, %686 : vector<4x1xf32>
    %725 = vector.broadcast %724 : vector<4x1xf32> to vector<4x32xf32>
    %726 = arith.mulf %725, %632 : vector<4x32xf32>
    %727 = arith.addf %722, %726 : vector<4x32xf32>
    %728 = arith.index_cast %683 : i32 to index
    %c0_190 = arith.constant 0 : index
    %c96_191 = arith.constant 96 : index
    %729 = vector.load %arg16[%728, %c0_190, %c96_191] : memref<8x4x192xf32, #tpu.memory_space<vmem>>, vector<1x4x96xf32>
    %730 = vector.shape_cast %729 : vector<1x4x96xf32> to vector<4x96xf32>
    %cst_192 = arith.constant dense<0.000000e+00> : vector<4x96xf32>
    %731 = tpu.matmul %670, %10, %cst_192 {dimension_numbers = #tpu.dot_dimension_numbers<[1], [0], [0], [1], [0, 0, 1, 1], [], []>} : vector<4x32xf32>, vector<32x96xf32>, vector<4x96xf32> -> vector<4x96xf32>
    %732 = vector.extract_strided_slice %730 {offsets = [0, 0], sizes = [4, 32], strides = [1, 1]} : vector<4x96xf32> to vector<4x32xf32>
    %733 = vector.extract_strided_slice %731 {offsets = [0, 0], sizes = [4, 32], strides = [1, 1]} : vector<4x96xf32> to vector<4x32xf32>
    %734 = arith.addf %732, %733 : vector<4x32xf32>
    %735 = arith.negf %734 : vector<4x32xf32>
    %736 = math.exp %735 : vector<4x32xf32>
    %cst_193 = arith.constant 1.000000e+00 : f32
    %737 = vector.broadcast %cst_193 : f32 to vector<4x32xf32>
    %738 = arith.addf %737, %736 : vector<4x32xf32>
    %739 = arith.divf %737, %738 : vector<4x32xf32>
    %740 = vector.extract_strided_slice %730 {offsets = [0, 32], sizes = [4, 32], strides = [1, 1]} : vector<4x96xf32> to vector<4x32xf32>
    %741 = vector.extract_strided_slice %731 {offsets = [0, 32], sizes = [4, 32], strides = [1, 1]} : vector<4x96xf32> to vector<4x32xf32>
    %742 = arith.addf %740, %741 : vector<4x32xf32>
    %743 = arith.negf %742 : vector<4x32xf32>
    %744 = math.exp %743 : vector<4x32xf32>
    %cst_194 = arith.constant 1.000000e+00 : f32
    %745 = vector.broadcast %cst_194 : f32 to vector<4x32xf32>
    %746 = arith.addf %745, %744 : vector<4x32xf32>
    %747 = arith.divf %745, %746 : vector<4x32xf32>
    %748 = vector.extract_strided_slice %730 {offsets = [0, 64], sizes = [4, 32], strides = [1, 1]} : vector<4x96xf32> to vector<4x32xf32>
    %749 = vector.extract_strided_slice %731 {offsets = [0, 64], sizes = [4, 32], strides = [1, 1]} : vector<4x96xf32> to vector<4x32xf32>
    %750 = arith.addf %749, %16 : vector<4x32xf32>
    %751 = arith.mulf %739, %750 : vector<4x32xf32>
    %752 = arith.addf %748, %751 : vector<4x32xf32>
    %753 = math.tanh %752 : vector<4x32xf32>
    %cst_195 = arith.constant 1.000000e+00 : f32
    %754 = vector.broadcast %cst_195 : f32 to vector<4x32xf32>
    %755 = arith.subf %754, %747 : vector<4x32xf32>
    %756 = arith.mulf %755, %753 : vector<4x32xf32>
    %757 = arith.mulf %747, %670 : vector<4x32xf32>
    %758 = arith.addf %756, %757 : vector<4x32xf32>
    %759 = vector.broadcast %689 : vector<4x1xf32> to vector<4x32xf32>
    %760 = arith.mulf %759, %758 : vector<4x32xf32>
    %cst_196 = arith.constant 1.000000e+00 : f32
    %761 = vector.broadcast %cst_196 : f32 to vector<4x1xf32>
    %762 = arith.subf %761, %689 : vector<4x1xf32>
    %763 = vector.broadcast %762 : vector<4x1xf32> to vector<4x32xf32>
    %764 = arith.mulf %763, %670 : vector<4x32xf32>
    %765 = arith.addf %760, %764 : vector<4x32xf32>
    %766 = vector.broadcast %686 : vector<4x1xf32> to vector<4x32xf32>
    %767 = arith.mulf %727, %766 : vector<4x32xf32>
    %768 = arith.index_cast %c7_i32_177 : i32 to index
    %c0_197 = arith.constant 0 : index
    %c0_198 = arith.constant 0 : index
    %769 = vector.load %arg17[%768, %c0_197, %c0_198] : memref<8x4x32xf32, #tpu.memory_space<vmem>>, vector<1x4x32xf32>
    %770 = vector.shape_cast %769 : vector<1x4x32xf32> to vector<4x32xf32>
    %771 = vector.shape_cast %767 : vector<4x32xf32> to vector<1x4x32xf32>
    tpu.vector_store %arg17[%768, %c0_197, %c0_198], %771 {strides = array<i32>} : memref<8x4x32xf32, #tpu.memory_space<vmem>>, vector<1x4x32xf32>,
    %772 = vector.broadcast %689 : vector<4x1xf32> to vector<4x32xf32>
    %773 = arith.mulf %765, %772 : vector<4x32xf32>
    %774 = arith.index_cast %683 : i32 to index
    %c0_199 = arith.constant 0 : index
    %c0_200 = arith.constant 0 : index
    %775 = vector.load %arg18[%774, %c0_199, %c0_200] : memref<8x4x32xf32, #tpu.memory_space<vmem>>, vector<1x4x32xf32>
    %776 = vector.shape_cast %775 : vector<1x4x32xf32> to vector<4x32xf32>
    %777 = vector.shape_cast %773 : vector<4x32xf32> to vector<1x4x32xf32>
    tpu.vector_store %arg18[%774, %c0_199, %c0_200], %777 {strides = array<i32>} : memref<8x4x32xf32, #tpu.memory_space<vmem>>, vector<1x4x32xf32>,
    %c8_i32 = arith.constant 8 : i32
    %c0_201 = arith.constant 0 : index
    %c0_202 = arith.constant 0 : index
    %c0_203 = arith.constant 0 : index
    %778 = vector.load %arg17[%c0_201, %c0_202, %c0_203] : memref<8x4x32xf32, #tpu.memory_space<vmem>>, vector<8x4x32xf32>
    %c0_204 = arith.constant 0 : index
    %c0_205 = arith.constant 0 : index
    %c0_206 = arith.constant 0 : index
    %779 = vector.load %arg18[%c0_204, %c0_205, %c0_206] : memref<8x4x32xf32, #tpu.memory_space<vmem>>, vector<8x4x32xf32>
    %780 = vector.shape_cast %778 : vector<8x4x32xf32> to vector<32x32xf32>
    %c0_207 = arith.constant 0 : index
    %c0_208 = arith.constant 0 : index
    %781 = vector.load %arg10[%c0_207, %c0_208] : memref<32x64xf32, #tpu.memory_space<vmem>>, vector<32x64xf32>
    %cst_209 = arith.constant dense<0.000000e+00> : vector<32x64xf32>
    %782 = tpu.matmul %780, %781, %cst_209 {dimension_numbers = #tpu.dot_dimension_numbers<[1], [0], [0], [1], [0, 0, 1, 1], [], []>} : vector<32x32xf32>, vector<32x64xf32>, vector<32x64xf32> -> vector<32x64xf32>
    %783 = vector.shape_cast %779 : vector<8x4x32xf32> to vector<32x32xf32>
    %c0_210 = arith.constant 0 : index
    %c0_211 = arith.constant 0 : index
    %784 = vector.load %arg11[%c0_210, %c0_211] : memref<32x64xf32, #tpu.memory_space<vmem>>, vector<32x64xf32>
    %cst_212 = arith.constant dense<0.000000e+00> : vector<32x64xf32>
    %785 = tpu.matmul %783, %784, %cst_212 {dimension_numbers = #tpu.dot_dimension_numbers<[1], [0], [0], [1], [0, 0, 1, 1], [], []>} : vector<32x32xf32>, vector<32x64xf32>, vector<32x64xf32> -> vector<32x64xf32>
    %786 = arith.addf %782, %785 : vector<32x64xf32>
    %c0_213 = arith.constant 0 : index
    %c0_214 = arith.constant 0 : index
    %787 = vector.load %arg12[%c0_213, %c0_214] : memref<1x64xf32, #tpu.memory_space<vmem>>, vector<1x64xf32>
    %788 = vector.broadcast %787 : vector<1x64xf32> to vector<32x64xf32>
    %789 = arith.addf %786, %788 : vector<32x64xf32>
    %790 = math.tanh %789 : vector<32x64xf32>
    %791 = vector.shape_cast %790 : vector<32x64xf32> to vector<8x4x64xf32>
    %c0_215 = arith.constant 0 : index
    %c0_216 = arith.constant 0 : index
    %792 = vector.load %arg13[%c0_215, %c0_216] : memref<1x64xf32, #tpu.memory_space<vmem>>, vector<1x64xf32>
    %793 = vector.shape_cast %792 : vector<1x64xf32> to vector<1x1x64xf32>
    %794 = vector.broadcast %793 : vector<1x1x64xf32> to vector<8x4x64xf32>
    %795 = arith.mulf %791, %794 : vector<8x4x64xf32>
    %cst_217 = arith.constant dense<0.000000e+00> : vector<8x4xf32>
    %796 = vector.multi_reduction <add>, %795, %cst_217 [2] : vector<8x4x64xf32> to vector<8x4xf32>
    %c0_218 = arith.constant 0 : index
    %c0_219 = arith.constant 0 : index
    %797 = vector.load %arg1[%c0_218, %c0_219] : memref<8x4xf32, #tpu.memory_space<vmem>>, vector<8x4xf32>
    %cst_220 = arith.constant 0.000000e+00 : f32
    %798 = vector.broadcast %cst_220 : f32 to vector<8x4xf32>
    %799 = arith.cmpf ogt, %797, %798 : vector<8x4xf32>
    %cst_221 = arith.constant -1.000000e+30 : f32
    %800 = vector.broadcast %cst_221 : f32 to vector<8x4xf32>
    %801 = arith.select %799, %796, %800 : vector<8x4xi1>, vector<8x4xf32>
    %cst_222 = arith.constant dense<0xFF800000> : vector<4xf32>
    %802 = vector.multi_reduction <maximumf>, %801, %cst_222 [0] : vector<8x4xf32> to vector<4xf32>
    %803 = vector.shape_cast %802 : vector<4xf32> to vector<1x4xf32>
    %804 = vector.broadcast %803 : vector<1x4xf32> to vector<8x4xf32>
    %805 = arith.subf %801, %804 : vector<8x4xf32>
    %806 = math.exp %805 : vector<8x4xf32>
    %cst_223 = arith.constant dense<0.000000e+00> : vector<4xf32>
    %807 = vector.multi_reduction <add>, %806, %cst_223 [0] : vector<8x4xf32> to vector<4xf32>
    %808 = vector.shape_cast %807 : vector<4xf32> to vector<1x4xf32>
    %809 = vector.broadcast %808 : vector<1x4xf32> to vector<8x4xf32>
    %810 = arith.divf %806, %809 : vector<8x4xf32>
    %811 = vector.shape_cast %810 : vector<8x4xf32> to vector<8x4x1xf32>
    %812 = arith.addf %778, %779 : vector<8x4x32xf32>
    %813 = vector.broadcast %811 : vector<8x4x1xf32> to vector<8x4x32xf32>
    %814 = arith.mulf %813, %812 : vector<8x4x32xf32>
    %cst_224 = arith.constant dense<0.000000e+00> : vector<4x32xf32>
    %815 = vector.multi_reduction <add>, %814, %cst_224 [0] : vector<8x4x32xf32> to vector<4x32xf32>
    %c0_225 = arith.constant 0 : index
    %c0_226 = arith.constant 0 : index
    %816 = vector.load %arg14[%c0_225, %c0_226] : memref<4x32xf32, #tpu.memory_space<vmem>>, vector<4x32xf32>
    tpu.vector_store %arg14[%c0_225, %c0_226], %815 {strides = array<i32>} : memref<4x32xf32, #tpu.memory_space<vmem>>, vector<4x32xf32>,
    %817 = tpu.transpose %810, [1, 0] : vector<8x4xf32> -> vector<4x8xf32>
    %c0_227 = arith.constant 0 : index
    %c0_228 = arith.constant 0 : index
    %818 = vector.load %arg15[%c0_227, %c0_228] : memref<4x8xf32, #tpu.memory_space<vmem>>, vector<4x8xf32>
    tpu.vector_store %arg15[%c0_227, %c0_228], %817 {strides = array<i32>} : memref<4x8xf32, #tpu.memory_space<vmem>>, vector<4x8xf32>,
    return
  }
  func.func @transform_0(%arg0: i32) -> (i32, i32) {
    %c0_i32 = arith.constant 0 : i32
    %c0_i32_0 = arith.constant 0 : i32
    return %c0_i32, %arg0 : i32, i32
  }
  func.func @transform_1(%arg0: i32) -> (i32, i32, i32) {
    %c0_i32 = arith.constant 0 : i32
    %c0_i32_0 = arith.constant 0 : i32
    %c0_i32_1 = arith.constant 0 : i32
    return %c0_i32, %arg0, %c0_i32_0 : i32, i32, i32
  }
  func.func @transform_2(%arg0: i32) -> (i32, i32, i32) {
    %c0_i32 = arith.constant 0 : i32
    %c0_i32_0 = arith.constant 0 : i32
    %c0_i32_1 = arith.constant 0 : i32
    return %c0_i32, %arg0, %c0_i32_0 : i32, i32, i32
  }
  func.func @transform_3(%arg0: i32) -> (i32, i32) {
    %c0_i32 = arith.constant 0 : i32
    %c0_i32_0 = arith.constant 0 : i32
    %c0_i32_1 = arith.constant 0 : i32
    return %c0_i32, %c0_i32_0 : i32, i32
  }
  func.func @transform_4(%arg0: i32) -> (i32, i32) {
    %c0_i32 = arith.constant 0 : i32
    %c0_i32_0 = arith.constant 0 : i32
    %c0_i32_1 = arith.constant 0 : i32
    return %c0_i32, %c0_i32_0 : i32, i32
  }
  func.func @transform_5(%arg0: i32) -> (i32, i32) {
    %c0_i32 = arith.constant 0 : i32
    %c0_i32_0 = arith.constant 0 : i32
    %c0_i32_1 = arith.constant 0 : i32
    return %c0_i32, %c0_i32_0 : i32, i32
  }
  func.func @transform_6(%arg0: i32) -> (i32, i32) {
    %c0_i32 = arith.constant 0 : i32
    %c0_i32_0 = arith.constant 0 : i32
    %c0_i32_1 = arith.constant 0 : i32
    return %c0_i32, %c0_i32_0 : i32, i32
  }
  func.func @transform_7(%arg0: i32) -> (i32, i32) {
    %c0_i32 = arith.constant 0 : i32
    %c0_i32_0 = arith.constant 0 : i32
    %c0_i32_1 = arith.constant 0 : i32
    return %c0_i32, %c0_i32_0 : i32, i32
  }
  func.func @transform_8(%arg0: i32) -> (i32, i32) {
    %c0_i32 = arith.constant 0 : i32
    %c0_i32_0 = arith.constant 0 : i32
    %c0_i32_1 = arith.constant 0 : i32
    return %c0_i32, %c0_i32_0 : i32, i32
  }
  func.func @transform_9(%arg0: i32) -> (i32, i32) {
    %c0_i32 = arith.constant 0 : i32
    %c0_i32_0 = arith.constant 0 : i32
    %c0_i32_1 = arith.constant 0 : i32
    return %c0_i32, %c0_i32_0 : i32, i32
  }
  func.func @transform_10(%arg0: i32) -> (i32, i32) {
    %c0_i32 = arith.constant 0 : i32
    %c0_i32_0 = arith.constant 0 : i32
    %c0_i32_1 = arith.constant 0 : i32
    return %c0_i32, %c0_i32_0 : i32, i32
  }
  func.func @transform_11(%arg0: i32) -> (i32, i32) {
    %c0_i32 = arith.constant 0 : i32
    %c0_i32_0 = arith.constant 0 : i32
    %c0_i32_1 = arith.constant 0 : i32
    return %c0_i32, %c0_i32_0 : i32, i32
  }
  func.func @transform_12(%arg0: i32) -> (i32, i32) {
    %c0_i32 = arith.constant 0 : i32
    %c0_i32_0 = arith.constant 0 : i32
    %c0_i32_1 = arith.constant 0 : i32
    return %c0_i32, %c0_i32_0 : i32, i32
  }
  func.func @transform_13(%arg0: i32) -> (i32, i32) {
    %c0_i32 = arith.constant 0 : i32
    %c0_i32_0 = arith.constant 0 : i32
    return %arg0, %c0_i32 : i32, i32
  }
  func.func @transform_14(%arg0: i32) -> (i32, i32) {
    %c0_i32 = arith.constant 0 : i32
    %c0_i32_0 = arith.constant 0 : i32
    return %arg0, %c0_i32 : i32, i32
  }
}

</mosaic_0001>

<llo_original>
// kernel: tpu_custom_call.1
$region0: #{tpu_custom_call.1}
  #allocation0 [shape = 'u32[]', space=smem, size = 0x4, offset = 0x4, fixed_abs, tag = 'smem constant byte address 0x4 - core index']
  #allocation1 [shape = 'u32[144,128]{1,0:T(1,128)}', space=vmem, size = 0x12000, scoped, tag = 'internal scratch']
  #allocation2 [shape = 'f32[8,4,192]{2,1,0:T(4,128)}', space=vmem, size = 0x8000, scoped, tag = 'scratch operand']
  #allocation3 [shape = 'f32[8,4,32]{2,1,0:T(4,128)}', space=vmem, size = 0x4000, scoped, tag = 'scratch operand']
  #allocation4 [shape = 'f32[8,4,32]{2,1,0:T(4,128)}', space=vmem, size = 0x4000, scoped, tag = 'scratch operand']
  %s0 = inlined_call_operand.vmem [shape: f32[8,4], index: 0, kind: input, shape index: {}]
  %s1 = inlined_call_operand.vmem [shape: f32[8,4,1], index: 1, kind: input, shape index: {}]
  %s2 = inlined_call_operand.vmem [shape: f32[8,4,16], index: 2, kind: input, shape index: {}]
  %s3 = inlined_call_operand.hbm [shape: f32[16,192], index: 3, kind: input, shape index: {}]
  %s4 = inlined_call_operand.vmem [shape: f32[1,192], index: 4, kind: input, shape index: {}]
  %s5 = inlined_call_operand.vmem [shape: f32[32,96], index: 5, kind: input, shape index: {}]
  %s6 = inlined_call_operand.hbm [shape: f32[32,96], index: 6, kind: input, shape index: {}]
  %s7 = inlined_call_operand.vmem [shape: f32[1,32], index: 7, kind: input, shape index: {}]
  %s8 = inlined_call_operand.vmem [shape: f32[1,32], index: 8, kind: input, shape index: {}]
  %s9 = inlined_call_operand.hbm [shape: f32[32,64], index: 9, kind: input, shape index: {}]
  %s10 = inlined_call_operand.hbm [shape: f32[32,64], index: 10, kind: input, shape index: {}]
  %s11 = inlined_call_operand.vmem [shape: f32[1,64], index: 11, kind: input, shape index: {}]
  %s12 = inlined_call_operand.vmem [shape: f32[1,64], index: 12, kind: input, shape index: {}]
  %s13 = inlined_call_operand.hbm [shape: f32[4,32], index: 13, kind: output, shape index: {0}]
  %s14 = inlined_call_operand.hbm [shape: f32[4,8], index: 14, kind: output, shape index: {1}]
  %15 = xla_tuple %s13, %s14
  %s16 = sld [smem:[#allocation0]]
  $region86: #{tpu_custom_call.1} parent=0
    _
  %s18 = ssub.s32 1, %s16
  %s19 = scalar_select 0, %s18, %s16
  $region1: #{tpu_custom_call.1} parent=0
    #allocation5 [shape = 'u8[16384]{0}', space=vmem, size = 0x4000, scoped, tag = 'input window, operand 3, single buffered']
    #allocation6 [shape = 's32[1]{0}', space=sflag, size = 0x4, scoped, tag = 'scoped memory for tpu_custom_call.1']
    #allocation7 [shape = 's32[1]{0}', space=sflag, size = 0x4, scoped, tag = 'scoped memory for tpu_custom_call.1']
    #allocation8 [shape = 'u8[16384]{0}', space=vmem, size = 0x4000, scoped, tag = 'input window, operand 6, single buffered']
    #allocation9 [shape = 's32[1]{0}', space=sflag, size = 0x4, scoped, tag = 'scoped memory for tpu_custom_call.1']
    #allocation10 [shape = 'u8[16384]{0}', space=vmem, size = 0x4000, scoped, tag = 'input window, operand 9, single buffered']
    #allocation11 [shape = 'u8[16384]{0}', space=vmem, size = 0x4000, scoped, tag = 'input window, operand 10, single buffered']
    #allocation12 [shape = 's32[1]{0}', space=sflag, size = 0x4, scoped, tag = 'scoped memory for tpu_custom_call.1']
    #allocation13 [shape = 'u8[2048]{0}', space=vmem, size = 0x800, scoped, tag = 'output window, operand 0, single buffered']
    #allocation14 [shape = 'u8[2048]{0}', space=vmem, size = 0x800, scoped, tag = 'output window, operand 1, single buffered']
    #allocation15 [shape = 's32[1]{0}', space=sflag, size = 0x4, scoped, tag = 'scoped memory for tpu_custom_call.1']
    %20 = vsyncpa [#allocation6], 0
    %21 = vsyncpa [#allocation9], 0
    %22 = vsyncpa [#allocation12], 0
    %23 = vsyncpa [#allocation7], 0
    %24 = vsyncpa [#allocation15], 0
    // Predicated region
    $region2: #{tpu_custom_call.1} parent=1 // pred_check
      _
    $region3: #{tpu_custom_call.1} parent=1 // pred_check_branch
      %26 = sbr.rel (0) target = $region5
    $region4: #{tpu_custom_call.1} parent=1 // pred_region
      _
    $region5: #{tpu_custom_call.1} parent=1 // pred_fallthru
      _
    // Predicated region
    $region6: #{tpu_custom_call.1} parent=1 // pred_check
      _
    $region7: #{tpu_custom_call.1} parent=1 // pred_check_branch
      %28 = sbr.rel (0) target = $region9
    $region8: #{tpu_custom_call.1} parent=1 // pred_region
      _
    $region9: #{tpu_custom_call.1} parent=1 // pred_fallthru
      _
    // Predicated region
    $region10: #{tpu_custom_call.1} parent=1 // pred_check
      _
    $region11: #{tpu_custom_call.1} parent=1 // pred_check_branch
      %30 = sbr.rel (0) target = $region13
    $region12: #{tpu_custom_call.1} parent=1 // pred_region
      _
    $region13: #{tpu_custom_call.1} parent=1 // pred_fallthru
      _
    // Predicated region
    $region14: #{tpu_custom_call.1} parent=1 // pred_check
      _
    $region15: #{tpu_custom_call.1} parent=1 // pred_check_branch
      %32 = sbr.rel (0) target = $region17
    $region16: #{tpu_custom_call.1} parent=1 // pred_region
      %s34 = ssub.s32 512, 512
      %35 = vsyncadd [#allocation6], %s34
      %s36 = sshll.u32 [#allocation5], 4
      %s37 = int_to_ptr.vmem [resolvable:$true] %s36
      %42 = dma.hbm_to_vmem [thread:$0]  %s3, 512, %s37, [#allocation6], 256, 256, 16
    $region17: #{tpu_custom_call.1} parent=1 // pred_fallthru
      _
    // Predicated region
    $region18: #{tpu_custom_call.1} parent=1 // pred_check
      _
    $region19: #{tpu_custom_call.1} parent=1 // pred_check_branch
      %44 = sbr.rel (0) target = $region21
    $region20: #{tpu_custom_call.1} parent=1 // pred_region
      _
    $region21: #{tpu_custom_call.1} parent=1 // pred_fallthru
      _
    // Predicated region
    $region22: #{tpu_custom_call.1} parent=1 // pred_check
      _
    $region23: #{tpu_custom_call.1} parent=1 // pred_check_branch
      %46 = sbr.rel (0) target = $region25
    $region24: #{tpu_custom_call.1} parent=1 // pred_region
      _
    $region25: #{tpu_custom_call.1} parent=1 // pred_fallthru
      _
    // Predicated region
    $region26: #{tpu_custom_call.1} parent=1 // pred_check
      _
    $region27: #{tpu_custom_call.1} parent=1 // pred_check_branch
      %48 = sbr.rel (0) target = $region29
    $region28: #{tpu_custom_call.1} parent=1 // pred_region
      %s50 = ssub.s32 512, 512
      %51 = vsyncadd [#allocation9], %s50
      %s52 = sshll.u32 [#allocation8], 4
      %s53 = int_to_ptr.vmem [resolvable:$true] %s52
      %58 = dma.hbm_to_vmem [thread:$0]  %s6, 512, %s53, [#allocation9], 128, 128, 8
    $region29: #{tpu_custom_call.1} parent=1 // pred_fallthru
      _
    // Predicated region
    $region30: #{tpu_custom_call.1} parent=1 // pred_check
      _
    $region31: #{tpu_custom_call.1} parent=1 // pred_check_branch
      %60 = sbr.rel (0) target = $region33
    $region32: #{tpu_custom_call.1} parent=1 // pred_region
      _
    $region33: #{tpu_custom_call.1} parent=1 // pred_fallthru
      _
    // Predicated region
    $region34: #{tpu_custom_call.1} parent=1 // pred_check
      _
    $region35: #{tpu_custom_call.1} parent=1 // pred_check_branch
      %62 = sbr.rel (0) target = $region37
    $region36: #{tpu_custom_call.1} parent=1 // pred_region
      _
    $region37: #{tpu_custom_call.1} parent=1 // pred_fallthru
      _
    // Predicated region
    $region38: #{tpu_custom_call.1} parent=1 // pred_check
      _
    $region39: #{tpu_custom_call.1} parent=1 // pred_check_branch
      %64 = sbr.rel (0) target = $region41
    $region40: #{tpu_custom_call.1} parent=1 // pred_region
      %s66 = ssub.s32 512, 512
      %67 = vsyncadd [#allocation9], %s66
      %s68 = sshll.u32 [#allocation10], 4
      %s69 = int_to_ptr.vmem [resolvable:$true] %s68
      %74 = dma.hbm_to_vmem [thread:$0]  %s9, 512, %s69, [#allocation9], 128, 128, 8
    $region41: #{tpu_custom_call.1} parent=1 // pred_fallthru
      _
    // Predicated region
    $region42: #{tpu_custom_call.1} parent=1 // pred_check
      _
    $region43: #{tpu_custom_call.1} parent=1 // pred_check_branch
      %76 = sbr.rel (0) target = $region45
    $region44: #{tpu_custom_call.1} parent=1 // pred_region
      %s78 = ssub.s32 512, 512
      %79 = vsyncadd [#allocation12], %s78
      %s80 = sshll.u32 [#allocation11], 4
      %s81 = int_to_ptr.vmem [resolvable:$true] %s80
      %86 = dma.hbm_to_vmem [thread:$0]  %s10, 512, %s81, [#allocation12], 128, 128, 8
    $region45: #{tpu_custom_call.1} parent=1 // pred_fallthru
      _
    // Predicated region
    $region46: #{tpu_custom_call.1} parent=1 // pred_check
      _
    $region47: #{tpu_custom_call.1} parent=1 // pred_check_branch
      %88 = sbr.rel (0) target = $region49
    $region48: #{tpu_custom_call.1} parent=1 // pred_region
      _
    $region49: #{tpu_custom_call.1} parent=1 // pred_fallthru
      _
    // Predicated region
    $region50: #{tpu_custom_call.1} parent=1 // pred_check
      _
    $region51: #{tpu_custom_call.1} parent=1 // pred_check_branch
      %90 = sbr.rel (0) target = $region53
    $region52: #{tpu_custom_call.1} parent=1 // pred_region
      _
    $region53: #{tpu_custom_call.1} parent=1 // pred_fallthru
      _
    // Predicated region
    $region54: #{tpu_custom_call.1} parent=1 // pred_check
      _
    $region55: #{tpu_custom_call.1} parent=1 // pred_check_branch
      %92 = sbr.rel (0) target = $region57
    $region56: #{tpu_custom_call.1} parent=1 // pred_region
      %93 = dma.done [#allocation6], 512
    $region57: #{tpu_custom_call.1} parent=1 // pred_fallthru
      _
    // Predicated region
    $region58: #{tpu_custom_call.1} parent=1 // pred_check
      _
    $region59: #{tpu_custom_call.1} parent=1 // pred_check_branch
      %95 = sbr.rel (0) target = $region61
    $region60: #{tpu_custom_call.1} parent=1 // pred_region
      %96 = dma.done [#allocation9], 512
    $region61: #{tpu_custom_call.1} parent=1 // pred_fallthru
      _
    // Predicated region
    $region62: #{tpu_custom_call.1} parent=1 // pred_check
      _
    $region63: #{tpu_custom_call.1} parent=1 // pred_check_branch
      %98 = sbr.rel (0) target = $region65
    $region64: #{tpu_custom_call.1} parent=1 // pred_region
      %99 = dma.done [#allocation9], 512
    $region65: #{tpu_custom_call.1} parent=1 // pred_fallthru
      _
    // Predicated region
    $region66: #{tpu_custom_call.1} parent=1 // pred_check
      _
    $region67: #{tpu_custom_call.1} parent=1 // pred_check_branch
      %101 = sbr.rel (0) target = $region69
    $region68: #{tpu_custom_call.1} parent=1 // pred_region
      %102 = dma.done [#allocation12], 512
    $region69: #{tpu_custom_call.1} parent=1 // pred_fallthru
      _
    %v103 = vld [vmem:[%s2] sm:$0xf]
    %v104 = vld [vmem:[%s2 + $0x4] sm:$0xf]
    %v105 = vld [vmem:[%s2 + $0x8] sm:$0xf]
    %v106 = vld [vmem:[%s2 + $0xc] sm:$0xf]
    %v107 = vld [vmem:[%s2 + $0x10] sm:$0xf]
    %v108 = vld [vmem:[%s2 + $0x14] sm:$0xf]
    %v109 = vld [vmem:[%s2 + $0x18] sm:$0xf]
    %v110 = vld [vmem:[%s2 + $0x1c] sm:$0xf]
    %v111 = vld [vmem:[#allocation5] sm:$0xff]
    %v112 = vld [vmem:[#allocation5 + $0x8] sm:$0xff]
    %v113 = vld [vmem:[#allocation5 + $0x10] sm:$0xff]
    %v114 = vld [vmem:[#allocation5 + $0x18] sm:$0xff]
    %v115 = vld [vmem:[%s4] sm:$0x3]
    %v117 = vlaneseq
    %v118 = vshrl.u32 %v117, 7
    %v119 = vsub.s32 0, %v118
    %v120 = vrot.slane %v115, %v119
    %v121 = vlaneseq
    %v122 = vshrl.u32 %v121, 7
    %v123 = vsub.s32 1, %v122
    %v124 = vrot.slane %v115, %v123
    %v135 = vcombine.low %v103, %v104
    %v136 = vcombine.low %v105, %v106
    %v137 = vcombine.low %v107, %v108
    %v138 = vcombine.low %v109, %v110
    %vm139 = vcmask 130048
    %v140 = vsel %vm139, %v135, 0
    %v142 = vsel %vm139, %v136, 0
    %v144 = vsel %vm139, %v137, 0
    %v146 = vsel %vm139, %v138, 0
    %148 = vmatprep.subr.mxu0 %v112
    %149 = vmatpush1.msra.mxu0 %v111
    %150 = vmatprep.subr.mxu0 %v114
    %151 = vmatpush1.msra.mxu0 %v113
    %152 = vmatprep.subr.mxu0 0.0
    %153 = vmatpush1.msra.mxu0 0.0
    %154 = vmatprep.subr.mxu0 0.0
    %155 = vmatpush1.msra.mxu0 0.0
    %156 = vmatprep.subr.mxu0 0.0
    %157 = vmatpush1.msra.mxu0 0.0
    %158 = vmatprep.subr.mxu0 0.0
    %159 = vmatpush1.msra.mxu0 0.0
    %160 = vmatprep.subr.mxu0 0.0
    %161 = vmatpush1.msra.mxu0 0.0
    %162 = vmatprep.subr.mxu0 0.0
    %163 = vmatpush1.msra.mxu0 0.0
    %164 = vmatprep.subr.mxu0 0.0
    %165 = vmatpush1.msra.mxu0 0.0
    %166 = vmatprep.subr.mxu0 0.0
    %167 = vmatpush1.msra.mxu0 0.0
    %168 = vmatprep.subr.mxu0 0.0
    %169 = vmatpush1.msra.mxu0 0.0
    %170 = vmatprep.subr.mxu0 0.0
    %171 = vmatpush1.msra.mxu0 0.0
    %172 = vmatprep.subr.mxu0 0.0
    %173 = vmatpush1.msra.mxu0 0.0
    %174 = vmatprep.subr.mxu0 0.0
    %175 = vmatpush1.msra.mxu0 0.0
    %176 = vmatprep.subr.mxu0 0.0
    %177 = vmatpush1.msra.mxu0 0.0
    %178 = vmatprep.subr.mxu0 0.0
    %179 = vmatpush1.msra.mxu0 0.0
    %180 = vmatprep.subr.mxu0 0.0
    %181 = vmatpush1.msra.mxu0 0.0
    %182 = vmatprep.subr.mxu0 0.0
    %183 = vmatpush1.msra.mxu0 0.0
    %184 = vmatprep.subr.mxu0 0.0
    %185 = vmatpush1.msra.mxu0 0.0
    %186 = vmatprep.subr.mxu0 0.0
    %187 = vmatpush1.msra.mxu0 0.0
    %188 = vmatprep.subr.mxu0 0.0
    %189 = vmatpush1.msra.mxu0 0.0
    %190 = vmatprep.subr.mxu0 0.0
    %191 = vmatpush1.msra.mxu0 0.0
    %192 = vmatprep.subr.mxu0 0.0
    %193 = vmatpush1.msra.mxu0 0.0
    %194 = vmatprep.subr.mxu0 0.0
    %195 = vmatpush1.msra.mxu0 0.0
    %196 = vmatprep.subr.mxu0 0.0
    %197 = vmatpush1.msra.mxu0 0.0
    %198 = vmatprep.subr.mxu0 0.0
    %199 = vmatpush1.msra.mxu0 0.0
    %200 = vmatprep.subr.mxu0 0.0
    %201 = vmatpush1.msra.mxu0 0.0
    %202 = vmatprep.subr.mxu0 0.0
    %203 = vmatpush1.msra.mxu0 0.0
    %204 = vmatprep.subr.mxu0 0.0
    %205 = vmatpush1.msra.mxu0 0.0
    %206 = vmatprep.subr.mxu0 0.0
    %207 = vmatpush1.msra.mxu0 0.0
    %208 = vmatprep.subr.mxu0 0.0
    %209 = vmatpush1.msra.mxu0 0.0
    %210 = vmatprep.subr.mxu0 0.0
    %211 = vmatpush1.msra.mxu0 0.0
    %212 = vmatprep.mubr.f32.mxu0 0.0
    %213 = vmatmul.mubr.f32.gmra.mrb[0].mxu0 %v140
    %v214 = vpop.f32.mrb[0].mxu0
    %v215 = vadd.f32 %v120, %v214
    %v216 = vpop.f32.mrb[0].mxu0
    %v217 = vadd.f32 %v124, %v216
    %218 = vmatprep.mubr.f32.mxu0 0.0
    %219 = vmatmul.mubr.f32.gmra.mrb[0].mxu0 %v142
    %v220 = vpop.f32.mrb[0].mxu0
    %v221 = vadd.f32 %v120, %v220
    %v222 = vpop.f32.mrb[0].mxu0
    %v223 = vadd.f32 %v124, %v222
    %224 = vmatprep.mubr.f32.mxu0 0.0
    %225 = vmatmul.mubr.f32.gmra.mrb[0].mxu0 %v144
    %v226 = vpop.f32.mrb[0].mxu0
    %v227 = vadd.f32 %v120, %v226
    %v228 = vpop.f32.mrb[0].mxu0
    %v229 = vadd.f32 %v124, %v228
    %230 = vmatprep.mubr.f32.mxu0 0.0
    %231 = vmatmul.mubr.f32.gmra.mrb[0].mxu0 %v146
    %v232 = vpop.f32.mrb[0].mxu0
    %v233 = vadd.f32 %v120, %v232
    %v234 = vpop.f32.mrb[0].mxu0
    %v235 = vadd.f32 %v124, %v234
    %236 = vdwg.mxu0
    %v245 = vcombine.low %v215, %v217
    %v246 = vcombine.high %v215, %v217
    %v247 = vcombine.low %v221, %v223
    %v248 = vcombine.high %v221, %v223
    %v249 = vcombine.low %v227, %v229
    %v250 = vcombine.high %v227, %v229
    %v251 = vcombine.low %v233, %v235
    %v252 = vcombine.high %v233, %v235
    %vm261 = vcmask 1043456
    %vm262 = vcmask 523268
    %vm263 = vmor %vm262, %vm261
    %264 = vst.msk [vmem:[#allocation2] sm:$0xff] %vm263, %v245
    %265 = vst.msk [vmem:[#allocation2 + $0x8] sm:$0xff] %vm263, %v246
    %266 = vst.msk [vmem:[#allocation2 + $0x10] sm:$0xff] %vm263, %v247
    %267 = vst.msk [vmem:[#allocation2 + $0x18] sm:$0xff] %vm263, %v248
    %268 = vst.msk [vmem:[#allocation2 + $0x20] sm:$0xff] %vm263, %v249
    %269 = vst.msk [vmem:[#allocation2 + $0x28] sm:$0xff] %vm263, %v250
    %270 = vst.msk [vmem:[#allocation2 + $0x30] sm:$0xff] %vm263, %v251
    %271 = vst.msk [vmem:[#allocation2 + $0x38] sm:$0xff] %vm263, %v252
    %v272 = vld [vmem:[%s5] sm:$0xff]
    %v273 = vld [vmem:[%s5 + $0x8] sm:$0xff]
    %v274 = vld [vmem:[%s5 + $0x10] sm:$0xff]
    %v275 = vld [vmem:[%s5 + $0x18] sm:$0xff]
    %v276 = vld [vmem:[#allocation8] sm:$0xff]
    %v277 = vld [vmem:[#allocation8 + $0x8] sm:$0xff]
    %v278 = vld [vmem:[#allocation8 + $0x10] sm:$0xff]
    %v279 = vld [vmem:[#allocation8 + $0x18] sm:$0xff]
    %v280 = vld [vmem:[%s7] sm:$0x1]
    %v282 = vlaneseq
    %v283 = vshrl.u32 %v282, 7
    %v284 = vsub.s32 0, %v283
    %v285 = vrot.slane %v280, %v284
    %v286 = vld [vmem:[%s8] sm:$0x1]
    %v288 = vlaneseq
    %v289 = vshrl.u32 %v288, 7
    %v290 = vsub.s32 0, %v289
    %v291 = vrot.slane %v286, %v290
    %v292 = vld [vmem:[%s1] sm:$0xf]
    %s293 = scalar_lea.vmem %s1, 28
    %v294 = vld [vmem:[%s293] sm:$0xf]
    %v295 = vld [vmem:[#allocation2] sm:$0xf]
    %vm296 = vcmask 261120
    %v298 = vsel %vm296, 0.0, 0
    %300 = vmatprep.subr.mxu0 0.0
    %301 = vmatpush1.msra.mxu0 %v272
    %302 = vmatprep.subr.mxu0 0.0
    %303 = vmatpush1.msra.mxu0 %v273
    %304 = vmatprep.subr.mxu0 0.0
    %305 = vmatpush1.msra.mxu0 %v274
    %306 = vmatprep.subr.mxu0 0.0
    %307 = vmatpush1.msra.mxu0 %v275
    %308 = vmatprep.subr.mxu0 0.0
    %309 = vmatpush1.msra.mxu0 0.0
    %310 = vmatprep.subr.mxu0 0.0
    %311 = vmatpush1.msra.mxu0 0.0
    %312 = vmatprep.subr.mxu0 0.0
    %313 = vmatpush1.msra.mxu0 0.0
    %314 = vmatprep.subr.mxu0 0.0
    %315 = vmatpush1.msra.mxu0 0.0
    %316 = vmatprep.subr.mxu0 0.0
    %317 = vmatpush1.msra.mxu0 0.0
    %318 = vmatprep.subr.mxu0 0.0
    %319 = vmatpush1.msra.mxu0 0.0
    %320 = vmatprep.subr.mxu0 0.0
    %321 = vmatpush1.msra.mxu0 0.0
    %322 = vmatprep.subr.mxu0 0.0
    %323 = vmatpush1.msra.mxu0 0.0
    %324 = vmatprep.subr.mxu0 0.0
    %325 = vmatpush1.msra.mxu0 0.0
    %326 = vmatprep.subr.mxu0 0.0
    %327 = vmatpush1.msra.mxu0 0.0
    %328 = vmatprep.subr.mxu0 0.0
    %329 = vmatpush1.msra.mxu0 0.0
    %330 = vmatprep.subr.mxu0 0.0
    %331 = vmatpush1.msra.mxu0 0.0
    %332 = vmatprep.subr.mxu0 0.0
    %333 = vmatpush1.msra.mxu0 0.0
    %334 = vmatprep.subr.mxu0 0.0
    %335 = vmatpush1.msra.mxu0 0.0
    %336 = vmatprep.subr.mxu0 0.0
    %337 = vmatpush1.msra.mxu0 0.0
    %338 = vmatprep.subr.mxu0 0.0
    %339 = vmatpush1.msra.mxu0 0.0
    %340 = vmatprep.subr.mxu0 0.0
    %341 = vmatpush1.msra.mxu0 0.0
    %342 = vmatprep.subr.mxu0 0.0
    %343 = vmatpush1.msra.mxu0 0.0
    %344 = vmatprep.subr.mxu0 0.0
    %345 = vmatpush1.msra.mxu0 0.0
    %346 = vmatprep.subr.mxu0 0.0
    %347 = vmatpush1.msra.mxu0 0.0
    %348 = vmatprep.subr.mxu0 0.0
    %349 = vmatpush1.msra.mxu0 0.0
    %350 = vmatprep.subr.mxu0 0.0
    %351 = vmatpush1.msra.mxu0 0.0
    %352 = vmatprep.subr.mxu0 0.0
    %353 = vmatpush1.msra.mxu0 0.0
    %354 = vmatprep.subr.mxu0 0.0
    %355 = vmatpush1.msra.mxu0 0.0
    %356 = vmatprep.subr.mxu0 0.0
    %357 = vmatpush1.msra.mxu0 0.0
    %358 = vmatprep.subr.mxu0 0.0
    %359 = vmatpush1.msra.mxu0 0.0
    %360 = vmatprep.subr.mxu0 0.0
    %361 = vmatpush1.msra.mxu0 0.0
    %362 = vmatprep.subr.mxu0 0.0
    %363 = vmatpush1.msra.mxu0 0.0
    %364 = vmatprep.mubr.f32.mxu0 0.0
    %365 = vmatmul.mubr.f32.gmra.mrb[0].mxu0 %v298
    %v366 = vpop.f32.mrb[0].mxu0
    %v367 = vadd.f32 0.0, %v366
    %v368 = vpop.f32.mrb[0].mxu0
    %369 = vdwg.mxu0
    %v370 = vadd.f32 %v295, %v367
    %v371 = vxor.u32 %v370, 2147483648
    %v372 = vmul.f32 %v371, 1.442695
    %v373 = vpow.pop %v372
    %v374 = vadd.f32 %v373, 1.0
    %v375 = vrcp.pop %v374
    %v376 = vmul.f32 1.0, %v375
    %377 = vrot.lane.b32.xlu0 %v285, 64
    %v378 = vpop.permute.xlu0 %377
    %v380 = vadd.f32 %v367, %v378
    %382 = vrot.lane.b32.xlu0 %v380, 64
    %v383 = vpop.permute.xlu0 %382
    %v385 = vmul.f32 %v376, %v383
    %387 = vrot.lane.b32.xlu0 %v385, 64
    %v388 = vpop.permute.xlu0 %387
    %v390 = vadd.f32 %v295, %v388
    %v391 = vtanh.pop %v390
    %v392 = vsub.f32 1.0, %v376
    %394 = vrot.lane.b32.xlu0 %v391, 96
    %v395 = vpop.permute.xlu0 %394
    %v397 = vmul.f32 %v392, %v395
    %v398 = vmul.f32 %v376, 0.0
    %v399 = vadd.f32 %v397, %v398
    %401 = vset.pattern.permute.xlu0 0
    %402 = vperm.xlu0 %401, %v292
    %v403 = vpop.permute.xlu0 %402
    %406 = vrot.lane.b32.xlu0 %v399, 96
    %v407 = vpop.permute.xlu0 %406
    %v409 = vmul.f32 %v403, %v407
    %v410 = vsub.f32 1.0, %v292
    %412 = vset.pattern.permute.xlu0 0
    %413 = vperm.xlu0 %412, %v410
    %v414 = vpop.permute.xlu0 %413
    %v416 = vmul.f32 %v414, 0.0
    %v417 = vadd.f32 %v409, %v416
    %s418 = scalar_lea.vmem [#allocation2], 56
    %v419 = vld [vmem:[%s418] sm:$0xff]
    %420 = vmatprep.subr.mxu0 0.0
    %421 = vmatpush1.msra.mxu0 %v276
    %422 = vmatprep.subr.mxu0 0.0
    %423 = vmatpush1.msra.mxu0 %v277
    %424 = vmatprep.subr.mxu0 0.0
    %425 = vmatpush1.msra.mxu0 %v278
    %426 = vmatprep.subr.mxu0 0.0
    %427 = vmatpush1.msra.mxu0 %v279
    %428 = vmatprep.subr.mxu0 0.0
    %429 = vmatpush1.msra.mxu0 0.0
    %430 = vmatprep.subr.mxu0 0.0
    %431 = vmatpush1.msra.mxu0 0.0
    %432 = vmatprep.subr.mxu0 0.0
    %433 = vmatpush1.msra.mxu0 0.0
    %434 = vmatprep.subr.mxu0 0.0
    %435 = vmatpush1.msra.mxu0 0.0
    %436 = vmatprep.subr.mxu0 0.0
    %437 = vmatpush1.msra.mxu0 0.0
    %438 = vmatprep.subr.mxu0 0.0
    %439 = vmatpush1.msra.mxu0 0.0
    %440 = vmatprep.subr.mxu0 0.0
    %441 = vmatpush1.msra.mxu0 0.0
    %442 = vmatprep.subr.mxu0 0.0
    %443 = vmatpush1.msra.mxu0 0.0
    %444 = vmatprep.subr.mxu0 0.0
    %445 = vmatpush1.msra.mxu0 0.0
    %446 = vmatprep.subr.mxu0 0.0
    %447 = vmatpush1.msra.mxu0 0.0
    %448 = vmatprep.subr.mxu0 0.0
    %449 = vmatpush1.msra.mxu0 0.0
    %450 = vmatprep.subr.mxu0 0.0
    %451 = vmatpush1.msra.mxu0 0.0
    %452 = vmatprep.subr.mxu0 0.0
    %453 = vmatpush1.msra.mxu0 0.0
    %454 = vmatprep.subr.mxu0 0.0
    %455 = vmatpush1.msra.mxu0 0.0
    %456 = vmatprep.subr.mxu0 0.0
    %457 = vmatpush1.msra.mxu0 0.0
    %458 = vmatprep.subr.mxu0 0.0
    %459 = vmatpush1.msra.mxu0 0.0
    %460 = vmatprep.subr.mxu0 0.0
    %461 = vmatpush1.msra.mxu0 0.0
    %462 = vmatprep.subr.mxu0 0.0
    %463 = vmatpush1.msra.mxu0 0.0
    %464 = vmatprep.subr.mxu0 0.0
    %465 = vmatpush1.msra.mxu0 0.0
    %466 = vmatprep.subr.mxu0 0.0
    %467 = vmatpush1.msra.mxu0 0.0
    %468 = vmatprep.subr.mxu0 0.0
    %469 = vmatpush1.msra.mxu0 0.0
    %470 = vmatprep.subr.mxu0 0.0
    %471 = vmatpush1.msra.mxu0 0.0
    %472 = vmatprep.subr.mxu0 0.0
    %473 = vmatpush1.msra.mxu0 0.0
    %474 = vmatprep.subr.mxu0 0.0
    %475 = vmatpush1.msra.mxu0 0.0
    %476 = vmatprep.subr.mxu0 0.0
    %477 = vmatpush1.msra.mxu0 0.0
    %478 = vmatprep.subr.mxu0 0.0
    %479 = vmatpush1.msra.mxu0 0.0
    %480 = vmatprep.subr.mxu0 0.0
    %481 = vmatpush1.msra.mxu0 0.0
    %482 = vmatprep.subr.mxu0 0.0
    %483 = vmatpush1.msra.mxu0 0.0
    %484 = vmatprep.mubr.f32.mxu0 0.0
    %485 = vmatmul.mubr.f32.gmra.mrb[0].mxu0 %v298
    %v486 = vpop.f32.mrb[0].mxu0
    %v487 = vadd.f32 0.0, %v486
    %v488 = vpop.f32.mrb[0].mxu0
    %489 = vdwg.mxu0
    %491 = vrot.lane.b32.xlu0 %v487, 96
    %v492 = vpop.permute.xlu0 %491
    %v494 = vadd.f32 %v419, %v492
    %v495 = vxor.u32 %v494, 2147483648
    %v496 = vmul.f32 %v495, 1.442695
    %v497 = vpow.pop %v496
    %v498 = vadd.f32 %v497, 1.0
    %v499 = vrcp.pop %v498
    %v500 = vmul.f32 1.0, %v499
    %v502 = vrot.slane %v419, 4
    %v504 = vadd.f32 %v502, %v492
    %v505 = vxor.u32 %v504, 2147483648
    %v506 = vmul.f32 %v505, 1.442695
    %v507 = vpow.pop %v506
    %v508 = vadd.f32 %v507, 1.0
    %v509 = vrcp.pop %v508
    %v510 = vmul.f32 1.0, %v509
    %511 = vrot.lane.b32.xlu0 %v291, 64
    %v512 = vpop.permute.xlu0 %511
    %v514 = vadd.f32 %v487, %v512
    %516 = vrot.lane.b32.xlu0 %v514, 32
    %v517 = vpop.permute.xlu0 %516
    %v519 = vmul.f32 %v500, %v517
    %520 = vrot.lane.b32.xlu0 %v419, 96
    %v521 = vpop.permute.xlu0 %520
    %v522 = vrot.slane %v521, 4
    %525 = vrot.lane.b32.xlu0 %v519, 32
    %v526 = vpop.permute.xlu0 %525
    %v528 = vadd.f32 %v522, %v526
    %v529 = vtanh.pop %v528
    %v530 = vsub.f32 1.0, %v510
    %v531 = vmul.f32 %v530, %v529
    %v532 = vmul.f32 %v510, 0.0
    %v533 = vadd.f32 %v531, %v532
    %535 = vset.pattern.permute.xlu0 0
    %536 = vperm.xlu0 %535, %v294
    %v537 = vpop.permute.xlu0 %536
    %v539 = vmul.f32 %v537, %v533
    %v540 = vsub.f32 1.0, %v294
    %542 = vset.pattern.permute.xlu0 0
    %543 = vperm.xlu0 %542, %v540
    %v544 = vpop.permute.xlu0 %543
    %v546 = vmul.f32 %v544, 0.0
    %v547 = vadd.f32 %v539, %v546
    %v548 = vmul.f32 %v417, %v403
    %vm549 = vcmask 257024
    %550 = vst.msk [vmem:[#allocation3] sm:$0xf] %vm549, %v548
    %v551 = vmul.f32 %v547, %v537
    %s552 = scalar_lea.vmem [#allocation4], 28
    %553 = vst.msk [vmem:[%s552] sm:$0xf] %vm549, %v551
    %s554 = scalar_lea.vmem %s1, 4
    %v555 = vld [vmem:[%s554] sm:$0xf]
    %s556 = scalar_lea.vmem %s1, 24
    %v557 = vld [vmem:[%s556] sm:$0xf]
    %s558 = scalar_lea.vmem [#allocation2], 8
    %v559 = vld [vmem:[%s558] sm:$0xf]
    %v561 = vsel %vm296, %v417, 0
    %563 = vmatprep.subr.mxu0 0.0
    %564 = vmatpush1.msra.mxu0 %v272
    %565 = vmatprep.subr.mxu0 0.0
    %566 = vmatpush1.msra.mxu0 %v273
    %567 = vmatprep.subr.mxu0 0.0
    %568 = vmatpush1.msra.mxu0 %v274
    %569 = vmatprep.subr.mxu0 0.0
    %570 = vmatpush1.msra.mxu0 %v275
    %571 = vmatprep.subr.mxu0 0.0
    %572 = vmatpush1.msra.mxu0 0.0
    %573 = vmatprep.subr.mxu0 0.0
    %574 = vmatpush1.msra.mxu0 0.0
    %575 = vmatprep.subr.mxu0 0.0
    %576 = vmatpush1.msra.mxu0 0.0
    %577 = vmatprep.subr.mxu0 0.0
    %578 = vmatpush1.msra.mxu0 0.0
    %579 = vmatprep.subr.mxu0 0.0
    %580 = vmatpush1.msra.mxu0 0.0
    %581 = vmatprep.subr.mxu0 0.0
    %582 = vmatpush1.msra.mxu0 0.0
    %583 = vmatprep.subr.mxu0 0.0
    %584 = vmatpush1.msra.mxu0 0.0
    %585 = vmatprep.subr.mxu0 0.0
    %586 = vmatpush1.msra.mxu0 0.0
    %587 = vmatprep.subr.mxu0 0.0
    %588 = vmatpush1.msra.mxu0 0.0
    %589 = vmatprep.subr.mxu0 0.0
    %590 = vmatpush1.msra.mxu0 0.0
    %591 = vmatprep.subr.mxu0 0.0
    %592 = vmatpush1.msra.mxu0 0.0
    %593 = vmatprep.subr.mxu0 0.0
    %594 = vmatpush1.msra.mxu0 0.0
    %595 = vmatprep.subr.mxu0 0.0
    %596 = vmatpush1.msra.mxu0 0.0
    %597 = vmatprep.subr.mxu0 0.0
    %598 = vmatpush1.msra.mxu0 0.0
    %599 = vmatprep.subr.mxu0 0.0
    %600 = vmatpush1.msra.mxu0 0.0
    %601 = vmatprep.subr.mxu0 0.0
    %602 = vmatpush1.msra.mxu0 0.0
    %603 = vmatprep.subr.mxu0 0.0
    %604 = vmatpush1.msra.mxu0 0.0
    %605 = vmatprep.subr.mxu0 0.0
    %606 = vmatpush1.msra.mxu0 0.0
    %607 = vmatprep.subr.mxu0 0.0
    %608 = vmatpush1.msra.mxu0 0.0
    %609 = vmatprep.subr.mxu0 0.0
    %610 = vmatpush1.msra.mxu0 0.0
    %611 = vmatprep.subr.mxu0 0.0
    %612 = vmatpush1.msra.mxu0 0.0
    %613 = vmatprep.subr.mxu0 0.0
    %614 = vmatpush1.msra.mxu0 0.0
    %615 = vmatprep.subr.mxu0 0.0
    %616 = vmatpush1.msra.mxu0 0.0
    %617 = vmatprep.subr.mxu0 0.0
    %618 = vmatpush1.msra.mxu0 0.0
    %619 = vmatprep.subr.mxu0 0.0
    %620 = vmatpush1.msra.mxu0 0.0
    %621 = vmatprep.subr.mxu0 0.0
    %622 = vmatpush1.msra.mxu0 0.0
    %623 = vmatprep.subr.mxu0 0.0
    %624 = vmatpush1.msra.mxu0 0.0
    %625 = vmatprep.subr.mxu0 0.0
    %626 = vmatpush1.msra.mxu0 0.0
    %627 = vmatprep.mubr.f32.mxu0 0.0
    %628 = vmatmul.mubr.f32.gmra.mrb[0].mxu0 %v561
    %v629 = vpop.f32.mrb[0].mxu0
    %v630 = vadd.f32 0.0, %v629
    %v631 = vpop.f32.mrb[0].mxu0
    %632 = vdwg.mxu0
    %v633 = vadd.f32 %v559, %v630
    %v634 = vxor.u32 %v633, 2147483648
    %v635 = vmul.f32 %v634, 1.442695
    %v636 = vpow.pop %v635
    %v637 = vadd.f32 %v636, 1.0
    %v638 = vrcp.pop %v637
    %v639 = vmul.f32 1.0, %v638
    %v640 = vadd.f32 %v630, %v378
    %642 = vrot.lane.b32.xlu0 %v640, 64
    %v643 = vpop.permute.xlu0 %642
    %v645 = vmul.f32 %v639, %v643
    %647 = vrot.lane.b32.xlu0 %v645, 64
    %v648 = vpop.permute.xlu0 %647
    %v650 = vadd.f32 %v559, %v648
    %v651 = vtanh.pop %v650
    %v652 = vsub.f32 1.0, %v639
    %654 = vrot.lane.b32.xlu0 %v651, 96
    %v655 = vpop.permute.xlu0 %654
    %v657 = vmul.f32 %v652, %v655
    %658 = vrot.lane.b32.xlu0 %v417, 32
    %v659 = vpop.permute.xlu0 %658
    %v661 = vmul.f32 %v639, %v659
    %v662 = vadd.f32 %v657, %v661
    %664 = vset.pattern.permute.xlu0 0
    %665 = vperm.xlu0 %664, %v555
    %v666 = vpop.permute.xlu0 %665
    %669 = vrot.lane.b32.xlu0 %v662, 96
    %v670 = vpop.permute.xlu0 %669
    %v672 = vmul.f32 %v666, %v670
    %v673 = vsub.f32 1.0, %v555
    %675 = vset.pattern.permute.xlu0 0
    %676 = vperm.xlu0 %675, %v673
    %v677 = vpop.permute.xlu0 %676
    %v679 = vmul.f32 %v677, %v417
    %v680 = vadd.f32 %v672, %v679
    %s681 = scalar_lea.vmem [#allocation2], 48
    %v682 = vld [vmem:[%s681] sm:$0xff]
    %v684 = vsel %vm296, %v547, 0
    %686 = vmatprep.subr.mxu0 0.0
    %687 = vmatpush1.msra.mxu0 %v276
    %688 = vmatprep.subr.mxu0 0.0
    %689 = vmatpush1.msra.mxu0 %v277
    %690 = vmatprep.subr.mxu0 0.0
    %691 = vmatpush1.msra.mxu0 %v278
    %692 = vmatprep.subr.mxu0 0.0
    %693 = vmatpush1.msra.mxu0 %v279
    %694 = vmatprep.subr.mxu0 0.0
    %695 = vmatpush1.msra.mxu0 0.0
    %696 = vmatprep.subr.mxu0 0.0
    %697 = vmatpush1.msra.mxu0 0.0
    %698 = vmatprep.subr.mxu0 0.0
    %699 = vmatpush1.msra.mxu0 0.0
    %700 = vmatprep.subr.mxu0 0.0
    %701 = vmatpush1.msra.mxu0 0.0
    %702 = vmatprep.subr.mxu0 0.0
    %703 = vmatpush1.msra.mxu0 0.0
    %704 = vmatprep.subr.mxu0 0.0
    %705 = vmatpush1.msra.mxu0 0.0
    %706 = vmatprep.subr.mxu0 0.0
    %707 = vmatpush1.msra.mxu0 0.0
    %708 = vmatprep.subr.mxu0 0.0
    %709 = vmatpush1.msra.mxu0 0.0
    %710 = vmatprep.subr.mxu0 0.0
    %711 = vmatpush1.msra.mxu0 0.0
    %712 = vmatprep.subr.mxu0 0.0
    %713 = vmatpush1.msra.mxu0 0.0
    %714 = vmatprep.subr.mxu0 0.0
    %715 = vmatpush1.msra.mxu0 0.0
    %716 = vmatprep.subr.mxu0 0.0
    %717 = vmatpush1.msra.mxu0 0.0
    %718 = vmatprep.subr.mxu0 0.0
    %719 = vmatpush1.msra.mxu0 0.0
    %720 = vmatprep.subr.mxu0 0.0
    %721 = vmatpush1.msra.mxu0 0.0
    %722 = vmatprep.subr.mxu0 0.0
    %723 = vmatpush1.msra.mxu0 0.0
    %724 = vmatprep.subr.mxu0 0.0
    %725 = vmatpush1.msra.mxu0 0.0
    %726 = vmatprep.subr.mxu0 0.0
    %727 = vmatpush1.msra.mxu0 0.0
    %728 = vmatprep.subr.mxu0 0.0
    %729 = vmatpush1.msra.mxu0 0.0
    %730 = vmatprep.subr.mxu0 0.0
    %731 = vmatpush1.msra.mxu0 0.0
    %732 = vmatprep.subr.mxu0 0.0
    %733 = vmatpush1.msra.mxu0 0.0
    %734 = vmatprep.subr.mxu0 0.0
    %735 = vmatpush1.msra.mxu0 0.0
    %736 = vmatprep.subr.mxu0 0.0
    %737 = vmatpush1.msra.mxu0 0.0
    %738 = vmatprep.subr.mxu0 0.0
    %739 = vmatpush1.msra.mxu0 0.0
    %740 = vmatprep.subr.mxu0 0.0
    %741 = vmatpush1.msra.mxu0 0.0
    %742 = vmatprep.subr.mxu0 0.0
    %743 = vmatpush1.msra.mxu0 0.0
    %744 = vmatprep.subr.mxu0 0.0
    %745 = vmatpush1.msra.mxu0 0.0
    %746 = vmatprep.subr.mxu0 0.0
    %747 = vmatpush1.msra.mxu0 0.0
    %748 = vmatprep.subr.mxu0 0.0
    %749 = vmatpush1.msra.mxu0 0.0
    %750 = vmatprep.mubr.f32.mxu0 0.0
    %751 = vmatmul.mubr.f32.gmra.mrb[0].mxu0 %v684
    %v752 = vpop.f32.mrb[0].mxu0
    %v753 = vadd.f32 0.0, %v752
    %v754 = vpop.f32.mrb[0].mxu0
    %755 = vdwg.mxu0
    %757 = vrot.lane.b32.xlu0 %v753, 96
    %v758 = vpop.permute.xlu0 %757
    %v760 = vadd.f32 %v682, %v758
    %v761 = vxor.u32 %v760, 2147483648
    %v762 = vmul.f32 %v761, 1.442695
    %v763 = vpow.pop %v762
    %v764 = vadd.f32 %v763, 1.0
    %v765 = vrcp.pop %v764
    %v766 = vmul.f32 1.0, %v765
    %v768 = vrot.slane %v682, 4
    %v770 = vadd.f32 %v768, %v758
    %v771 = vxor.u32 %v770, 2147483648
    %v772 = vmul.f32 %v771, 1.442695
    %v773 = vpow.pop %v772
    %v774 = vadd.f32 %v773, 1.0
    %v775 = vrcp.pop %v774
    %v776 = vmul.f32 1.0, %v775
    %v777 = vadd.f32 %v753, %v512
    %779 = vrot.lane.b32.xlu0 %v777, 32
    %v780 = vpop.permute.xlu0 %779
    %v782 = vmul.f32 %v766, %v780
    %783 = vrot.lane.b32.xlu0 %v682, 96
    %v784 = vpop.permute.xlu0 %783
    %v785 = vrot.slane %v784, 4
    %788 = vrot.lane.b32.xlu0 %v782, 32
    %v789 = vpop.permute.xlu0 %788
    %v791 = vadd.f32 %v785, %v789
    %v792 = vtanh.pop %v791
    %v793 = vsub.f32 1.0, %v776
    %v794 = vmul.f32 %v793, %v792
    %v795 = vmul.f32 %v776, %v547
    %v796 = vadd.f32 %v794, %v795
    %798 = vset.pattern.permute.xlu0 0
    %799 = vperm.xlu0 %798, %v557
    %v800 = vpop.permute.xlu0 %799
    %v802 = vmul.f32 %v800, %v796
    %v803 = vsub.f32 1.0, %v557
    %805 = vset.pattern.permute.xlu0 0
    %806 = vperm.xlu0 %805, %v803
    %v807 = vpop.permute.xlu0 %806
    %v809 = vmul.f32 %v807, %v547
    %v810 = vadd.f32 %v802, %v809
    %v811 = vmul.f32 %v680, %v666
    %s812 = scalar_lea.vmem [#allocation3], 4
    %813 = vst.msk [vmem:[%s812] sm:$0xf] %vm549, %v811
    %v814 = vmul.f32 %v810, %v800
    %s815 = scalar_lea.vmem [#allocation4], 24
    %816 = vst.msk [vmem:[%s815] sm:$0xf] %vm549, %v814
    %s817 = scalar_lea.vmem %s1, 8
    %v818 = vld [vmem:[%s817] sm:$0xf]
    %s819 = scalar_lea.vmem %s1, 20
    %v820 = vld [vmem:[%s819] sm:$0xf]
    %s821 = scalar_lea.vmem [#allocation2], 16
    %v822 = vld [vmem:[%s821] sm:$0xf]
    %v824 = vsel %vm296, %v680, 0
    %826 = vmatprep.subr.mxu0 0.0
    %827 = vmatpush1.msra.mxu0 %v272
    %828 = vmatprep.subr.mxu0 0.0
    %829 = vmatpush1.msra.mxu0 %v273
    %830 = vmatprep.subr.mxu0 0.0
    %831 = vmatpush1.msra.mxu0 %v274
    %832 = vmatprep.subr.mxu0 0.0
    %833 = vmatpush1.msra.mxu0 %v275
    %834 = vmatprep.subr.mxu0 0.0
    %835 = vmatpush1.msra.mxu0 0.0
    %836 = vmatprep.subr.mxu0 0.0
    %837 = vmatpush1.msra.mxu0 0.0
    %838 = vmatprep.subr.mxu0 0.0
    %839 = vmatpush1.msra.mxu0 0.0
    %840 = vmatprep.subr.mxu0 0.0
    %841 = vmatpush1.msra.mxu0 0.0
    %842 = vmatprep.subr.mxu0 0.0
    %843 = vmatpush1.msra.mxu0 0.0
    %844 = vmatprep.subr.mxu0 0.0
    %845 = vmatpush1.msra.mxu0 0.0
    %846 = vmatprep.subr.mxu0 0.0
    %847 = vmatpush1.msra.mxu0 0.0
    %848 = vmatprep.subr.mxu0 0.0
    %849 = vmatpush1.msra.mxu0 0.0
    %850 = vmatprep.subr.mxu0 0.0
    %851 = vmatpush1.msra.mxu0 0.0
    %852 = vmatprep.subr.mxu0 0.0
    %853 = vmatpush1.msra.mxu0 0.0
    %854 = vmatprep.subr.mxu0 0.0
    %855 = vmatpush1.msra.mxu0 0.0
    %856 = vmatprep.subr.mxu0 0.0
    %857 = vmatpush1.msra.mxu0 0.0
    %858 = vmatprep.subr.mxu0 0.0
    %859 = vmatpush1.msra.mxu0 0.0
    %860 = vmatprep.subr.mxu0 0.0
    %861 = vmatpush1.msra.mxu0 0.0
    %862 = vmatprep.subr.mxu0 0.0
    %863 = vmatpush1.msra.mxu0 0.0
    %864 = vmatprep.subr.mxu0 0.0
    %865 = vmatpush1.msra.mxu0 0.0
    %866 = vmatprep.subr.mxu0 0.0
    %867 = vmatpush1.msra.mxu0 0.0
    %868 = vmatprep.subr.mxu0 0.0
    %869 = vmatpush1.msra.mxu0 0.0
    %870 = vmatprep.subr.mxu0 0.0
    %871 = vmatpush1.msra.mxu0 0.0
    %872 = vmatprep.subr.mxu0 0.0
    %873 = vmatpush1.msra.mxu0 0.0
    %874 = vmatprep.subr.mxu0 0.0
    %875 = vmatpush1.msra.mxu0 0.0
    %876 = vmatprep.subr.mxu0 0.0
    %877 = vmatpush1.msra.mxu0 0.0
    %878 = vmatprep.subr.mxu0 0.0
    %879 = vmatpush1.msra.mxu0 0.0
    %880 = vmatprep.subr.mxu0 0.0
    %881 = vmatpush1.msra.mxu0 0.0
    %882 = vmatprep.subr.mxu0 0.0
    %883 = vmatpush1.msra.mxu0 0.0
    %884 = vmatprep.subr.mxu0 0.0
    %885 = vmatpush1.msra.mxu0 0.0
    %886 = vmatprep.subr.mxu0 0.0
    %887 = vmatpush1.msra.mxu0 0.0
    %888 = vmatprep.subr.mxu0 0.0
    %889 = vmatpush1.msra.mxu0 0.0
    %890 = vmatprep.mubr.f32.mxu0 0.0
    %891 = vmatmul.mubr.f32.gmra.mrb[0].mxu0 %v824
    %v892 = vpop.f32.mrb[0].mxu0
    %v893 = vadd.f32 0.0, %v892
    %v894 = vpop.f32.mrb[0].mxu0
    %895 = vdwg.mxu0
    %v896 = vadd.f32 %v822, %v893
    %v897 = vxor.u32 %v896, 2147483648
    %v898 = vmul.f32 %v897, 1.442695
    %v899 = vpow.pop %v898
    %v900 = vadd.f32 %v899, 1.0
    %v901 = vrcp.pop %v900
    %v902 = vmul.f32 1.0, %v901
    %v903 = vadd.f32 %v893, %v378
    %905 = vrot.lane.b32.xlu0 %v903, 64
    %v906 = vpop.permute.xlu0 %905
    %v908 = vmul.f32 %v902, %v906
    %910 = vrot.lane.b32.xlu0 %v908, 64
    %v911 = vpop.permute.xlu0 %910
    %v913 = vadd.f32 %v822, %v911
    %v914 = vtanh.pop %v913
    %v915 = vsub.f32 1.0, %v902
    %917 = vrot.lane.b32.xlu0 %v914, 96
    %v918 = vpop.permute.xlu0 %917
    %v920 = vmul.f32 %v915, %v918
    %921 = vrot.lane.b32.xlu0 %v680, 32
    %v922 = vpop.permute.xlu0 %921
    %v924 = vmul.f32 %v902, %v922
    %v925 = vadd.f32 %v920, %v924
    %927 = vset.pattern.permute.xlu0 0
    %928 = vperm.xlu0 %927, %v818
    %v929 = vpop.permute.xlu0 %928
    %932 = vrot.lane.b32.xlu0 %v925, 96
    %v933 = vpop.permute.xlu0 %932
    %v935 = vmul.f32 %v929, %v933
    %v936 = vsub.f32 1.0, %v818
    %938 = vset.pattern.permute.xlu0 0
    %939 = vperm.xlu0 %938, %v936
    %v940 = vpop.permute.xlu0 %939
    %v942 = vmul.f32 %v940, %v680
    %v943 = vadd.f32 %v935, %v942
    %s944 = scalar_lea.vmem [#allocation2], 40
    %v945 = vld [vmem:[%s944] sm:$0xff]
    %v947 = vsel %vm296, %v810, 0
    %949 = vmatprep.subr.mxu0 0.0
    %950 = vmatpush1.msra.mxu0 %v276
    %951 = vmatprep.subr.mxu0 0.0
    %952 = vmatpush1.msra.mxu0 %v277
    %953 = vmatprep.subr.mxu0 0.0
    %954 = vmatpush1.msra.mxu0 %v278
    %955 = vmatprep.subr.mxu0 0.0
    %956 = vmatpush1.msra.mxu0 %v279
    %957 = vmatprep.subr.mxu0 0.0
    %958 = vmatpush1.msra.mxu0 0.0
    %959 = vmatprep.subr.mxu0 0.0
    %960 = vmatpush1.msra.mxu0 0.0
    %961 = vmatprep.subr.mxu0 0.0
    %962 = vmatpush1.msra.mxu0 0.0
    %963 = vmatprep.subr.mxu0 0.0
    %964 = vmatpush1.msra.mxu0 0.0
    %965 = vmatprep.subr.mxu0 0.0
    %966 = vmatpush1.msra.mxu0 0.0
    %967 = vmatprep.subr.mxu0 0.0
    %968 = vmatpush1.msra.mxu0 0.0
    %969 = vmatprep.subr.mxu0 0.0
    %970 = vmatpush1.msra.mxu0 0.0
    %971 = vmatprep.subr.mxu0 0.0
    %972 = vmatpush1.msra.mxu0 0.0
    %973 = vmatprep.subr.mxu0 0.0
    %974 = vmatpush1.msra.mxu0 0.0
    %975 = vmatprep.subr.mxu0 0.0
    %976 = vmatpush1.msra.mxu0 0.0
    %977 = vmatprep.subr.mxu0 0.0
    %978 = vmatpush1.msra.mxu0 0.0
    %979 = vmatprep.subr.mxu0 0.0
    %980 = vmatpush1.msra.mxu0 0.0
    %981 = vmatprep.subr.mxu0 0.0
    %982 = vmatpush1.msra.mxu0 0.0
    %983 = vmatprep.subr.mxu0 0.0
    %984 = vmatpush1.msra.mxu0 0.0
    %985 = vmatprep.subr.mxu0 0.0
    %986 = vmatpush1.msra.mxu0 0.0
    %987 = vmatprep.subr.mxu0 0.0
    %988 = vmatpush1.msra.mxu0 0.0
    %989 = vmatprep.subr.mxu0 0.0
    %990 = vmatpush1.msra.mxu0 0.0
    %991 = vmatprep.subr.mxu0 0.0
    %992 = vmatpush1.msra.mxu0 0.0
    %993 = vmatprep.subr.mxu0 0.0
    %994 = vmatpush1.msra.mxu0 0.0
    %995 = vmatprep.subr.mxu0 0.0
    %996 = vmatpush1.msra.mxu0 0.0
    %997 = vmatprep.subr.mxu0 0.0
    %998 = vmatpush1.msra.mxu0 0.0
    %999 = vmatprep.subr.mxu0 0.0
    %1000 = vmatpush1.msra.mxu0 0.0
    %1001 = vmatprep.subr.mxu0 0.0
    %1002 = vmatpush1.msra.mxu0 0.0
    %1003 = vmatprep.subr.mxu0 0.0
    %1004 = vmatpush1.msra.mxu0 0.0
    %1005 = vmatprep.subr.mxu0 0.0
    %1006 = vmatpush1.msra.mxu0 0.0
    %1007 = vmatprep.subr.mxu0 0.0
    %1008 = vmatpush1.msra.mxu0 0.0
    %1009 = vmatprep.subr.mxu0 0.0
    %1010 = vmatpush1.msra.mxu0 0.0
    %1011 = vmatprep.subr.mxu0 0.0
    %1012 = vmatpush1.msra.mxu0 0.0
    %1013 = vmatprep.mubr.f32.mxu0 0.0
    %1014 = vmatmul.mubr.f32.gmra.mrb[0].mxu0 %v947
    %v1015 = vpop.f32.mrb[0].mxu0
    %v1016 = vadd.f32 0.0, %v1015
    %v1017 = vpop.f32.mrb[0].mxu0
    %1018 = vdwg.mxu0
    %1020 = vrot.lane.b32.xlu0 %v1016, 96
    %v1021 = vpop.permute.xlu0 %1020
    %v1023 = vadd.f32 %v945, %v1021
    %v1024 = vxor.u32 %v1023, 2147483648
    %v1025 = vmul.f32 %v1024, 1.442695
    %v1026 = vpow.pop %v1025
    %v1027 = vadd.f32 %v1026, 1.0
    %v1028 = vrcp.pop %v1027
    %v1029 = vmul.f32 1.0, %v1028
    %v1031 = vrot.slane %v945, 4
    %v1033 = vadd.f32 %v1031, %v1021
    %v1034 = vxor.u32 %v1033, 2147483648
    %v1035 = vmul.f32 %v1034, 1.442695
    %v1036 = vpow.pop %v1035
    %v1037 = vadd.f32 %v1036, 1.0
    %v1038 = vrcp.pop %v1037
    %v1039 = vmul.f32 1.0, %v1038
    %v1040 = vadd.f32 %v1016, %v512
    %1042 = vrot.lane.b32.xlu0 %v1040, 32
    %v1043 = vpop.permute.xlu0 %1042
    %v1045 = vmul.f32 %v1029, %v1043
    %1046 = vrot.lane.b32.xlu0 %v945, 96
    %v1047 = vpop.permute.xlu0 %1046
    %v1048 = vrot.slane %v1047, 4
    %1051 = vrot.lane.b32.xlu0 %v1045, 32
    %v1052 = vpop.permute.xlu0 %1051
    %v1054 = vadd.f32 %v1048, %v1052
    %v1055 = vtanh.pop %v1054
    %v1056 = vsub.f32 1.0, %v1039
    %v1057 = vmul.f32 %v1056, %v1055
    %v1058 = vmul.f32 %v1039, %v810
    %v1059 = vadd.f32 %v1057, %v1058
    %1061 = vset.pattern.permute.xlu0 0
    %1062 = vperm.xlu0 %1061, %v820
    %v1063 = vpop.permute.xlu0 %1062
    %v1065 = vmul.f32 %v1063, %v1059
    %v1066 = vsub.f32 1.0, %v820
    %1068 = vset.pattern.permute.xlu0 0
    %1069 = vperm.xlu0 %1068, %v1066
    %v1070 = vpop.permute.xlu0 %1069
    %v1072 = vmul.f32 %v1070, %v810
    %v1073 = vadd.f32 %v1065, %v1072
    %v1074 = vmul.f32 %v943, %v929
    %s1075 = scalar_lea.vmem [#allocation3], 8
    %1076 = vst.msk [vmem:[%s1075] sm:$0xf] %vm549, %v1074
    %v1077 = vmul.f32 %v1073, %v1063
    %s1078 = scalar_lea.vmem [#allocation4], 20
    %1079 = vst.msk [vmem:[%s1078] sm:$0xf] %vm549, %v1077
    %s1080 = scalar_lea.vmem %s1, 12
    %v1081 = vld [vmem:[%s1080] sm:$0xf]
    %s1082 = scalar_lea.vmem %s1, 16
    %v1083 = vld [vmem:[%s1082] sm:$0xf]
    %s1084 = scalar_lea.vmem [#allocation2], 24
    %v1085 = vld [vmem:[%s1084] sm:$0xf]
    %v1087 = vsel %vm296, %v943, 0
    %1089 = vmatprep.subr.mxu0 0.0
    %1090 = vmatpush1.msra.mxu0 %v272
    %1091 = vmatprep.subr.mxu0 0.0
    %1092 = vmatpush1.msra.mxu0 %v273
    %1093 = vmatprep.subr.mxu0 0.0
    %1094 = vmatpush1.msra.mxu0 %v274
    %1095 = vmatprep.subr.mxu0 0.0
    %1096 = vmatpush1.msra.mxu0 %v275
    %1097 = vmatprep.subr.mxu0 0.0
    %1098 = vmatpush1.msra.mxu0 0.0
    %1099 = vmatprep.subr.mxu0 0.0
    %1100 = vmatpush1.msra.mxu0 0.0
    %1101 = vmatprep.subr.mxu0 0.0
    %1102 = vmatpush1.msra.mxu0 0.0
    %1103 = vmatprep.subr.mxu0 0.0
    %1104 = vmatpush1.msra.mxu0 0.0
    %1105 = vmatprep.subr.mxu0 0.0
    %1106 = vmatpush1.msra.mxu0 0.0
    %1107 = vmatprep.subr.mxu0 0.0
    %1108 = vmatpush1.msra.mxu0 0.0
    %1109 = vmatprep.subr.mxu0 0.0
    %1110 = vmatpush1.msra.mxu0 0.0
    %1111 = vmatprep.subr.mxu0 0.0
    %1112 = vmatpush1.msra.mxu0 0.0
    %1113 = vmatprep.subr.mxu0 0.0
    %1114 = vmatpush1.msra.mxu0 0.0
    %1115 = vmatprep.subr.mxu0 0.0
    %1116 = vmatpush1.msra.mxu0 0.0
    %1117 = vmatprep.subr.mxu0 0.0
    %1118 = vmatpush1.msra.mxu0 0.0
    %1119 = vmatprep.subr.mxu0 0.0
    %1120 = vmatpush1.msra.mxu0 0.0
    %1121 = vmatprep.subr.mxu0 0.0
    %1122 = vmatpush1.msra.mxu0 0.0
    %1123 = vmatprep.subr.mxu0 0.0
    %1124 = vmatpush1.msra.mxu0 0.0
    %1125 = vmatprep.subr.mxu0 0.0
    %1126 = vmatpush1.msra.mxu0 0.0
    %1127 = vmatprep.subr.mxu0 0.0
    %1128 = vmatpush1.msra.mxu0 0.0
    %1129 = vmatprep.subr.mxu0 0.0
    %1130 = vmatpush1.msra.mxu0 0.0
    %1131 = vmatprep.subr.mxu0 0.0
    %1132 = vmatpush1.msra.mxu0 0.0
    %1133 = vmatprep.subr.mxu0 0.0
    %1134 = vmatpush1.msra.mxu0 0.0
    %1135 = vmatprep.subr.mxu0 0.0
    %1136 = vmatpush1.msra.mxu0 0.0
    %1137 = vmatprep.subr.mxu0 0.0
    %1138 = vmatpush1.msra.mxu0 0.0
    %1139 = vmatprep.subr.mxu0 0.0
    %1140 = vmatpush1.msra.mxu0 0.0
    %1141 = vmatprep.subr.mxu0 0.0
    %1142 = vmatpush1.msra.mxu0 0.0
    %1143 = vmatprep.subr.mxu0 0.0
    %1144 = vmatpush1.msra.mxu0 0.0
    %1145 = vmatprep.subr.mxu0 0.0
    %1146 = vmatpush1.msra.mxu0 0.0
    %1147 = vmatprep.subr.mxu0 0.0
    %1148 = vmatpush1.msra.mxu0 0.0
    %1149 = vmatprep.subr.mxu0 0.0
    %1150 = vmatpush1.msra.mxu0 0.0
    %1151 = vmatprep.subr.mxu0 0.0
    %1152 = vmatpush1.msra.mxu0 0.0
    %1153 = vmatprep.mubr.f32.mxu0 0.0
    %1154 = vmatmul.mubr.f32.gmra.mrb[0].mxu0 %v1087
    %v1155 = vpop.f32.mrb[0].mxu0
    %v1156 = vadd.f32 0.0, %v1155
    %v1157 = vpop.f32.mrb[0].mxu0
    %1158 = vdwg.mxu0
    %v1159 = vadd.f32 %v1085, %v1156
    %v1160 = vxor.u32 %v1159, 2147483648
    %v1161 = vmul.f32 %v1160, 1.442695
    %v1162 = vpow.pop %v1161
    %v1163 = vadd.f32 %v1162, 1.0
    %v1164 = vrcp.pop %v1163
    %v1165 = vmul.f32 1.0, %v1164
    %v1166 = vadd.f32 %v1156, %v378
    %1168 = vrot.lane.b32.xlu0 %v1166, 64
    %v1169 = vpop.permute.xlu0 %1168
    %v1171 = vmul.f32 %v1165, %v1169
    %1173 = vrot.lane.b32.xlu0 %v1171, 64
    %v1174 = vpop.permute.xlu0 %1173
    %v1176 = vadd.f32 %v1085, %v1174
    %v1177 = vtanh.pop %v1176
    %v1178 = vsub.f32 1.0, %v1165
    %1180 = vrot.lane.b32.xlu0 %v1177, 96
    %v1181 = vpop.permute.xlu0 %1180
    %v1183 = vmul.f32 %v1178, %v1181
    %1184 = vrot.lane.b32.xlu0 %v943, 32
    %v1185 = vpop.permute.xlu0 %1184
    %v1187 = vmul.f32 %v1165, %v1185
    %v1188 = vadd.f32 %v1183, %v1187
    %1190 = vset.pattern.permute.xlu0 0
    %1191 = vperm.xlu0 %1190, %v1081
    %v1192 = vpop.permute.xlu0 %1191
    %1195 = vrot.lane.b32.xlu0 %v1188, 96
    %v1196 = vpop.permute.xlu0 %1195
    %v1198 = vmul.f32 %v1192, %v1196
    %v1199 = vsub.f32 1.0, %v1081
    %1201 = vset.pattern.permute.xlu0 0
    %1202 = vperm.xlu0 %1201, %v1199
    %v1203 = vpop.permute.xlu0 %1202
    %v1205 = vmul.f32 %v1203, %v943
    %v1206 = vadd.f32 %v1198, %v1205
    %s1207 = scalar_lea.vmem [#allocation2], 32
    %v1208 = vld [vmem:[%s1207] sm:$0xff]
    %v1210 = vsel %vm296, %v1073, 0
    %1212 = vmatprep.subr.mxu0 0.0
    %1213 = vmatpush1.msra.mxu0 %v276
    %1214 = vmatprep.subr.mxu0 0.0
    %1215 = vmatpush1.msra.mxu0 %v277
    %1216 = vmatprep.subr.mxu0 0.0
    %1217 = vmatpush1.msra.mxu0 %v278
    %1218 = vmatprep.subr.mxu0 0.0
    %1219 = vmatpush1.msra.mxu0 %v279
    %1220 = vmatprep.subr.mxu0 0.0
    %1221 = vmatpush1.msra.mxu0 0.0
    %1222 = vmatprep.subr.mxu0 0.0
    %1223 = vmatpush1.msra.mxu0 0.0
    %1224 = vmatprep.subr.mxu0 0.0
    %1225 = vmatpush1.msra.mxu0 0.0
    %1226 = vmatprep.subr.mxu0 0.0
    %1227 = vmatpush1.msra.mxu0 0.0
    %1228 = vmatprep.subr.mxu0 0.0
    %1229 = vmatpush1.msra.mxu0 0.0
    %1230 = vmatprep.subr.mxu0 0.0
    %1231 = vmatpush1.msra.mxu0 0.0
    %1232 = vmatprep.subr.mxu0 0.0
    %1233 = vmatpush1.msra.mxu0 0.0
    %1234 = vmatprep.subr.mxu0 0.0
    %1235 = vmatpush1.msra.mxu0 0.0
    %1236 = vmatprep.subr.mxu0 0.0
    %1237 = vmatpush1.msra.mxu0 0.0
    %1238 = vmatprep.subr.mxu0 0.0
    %1239 = vmatpush1.msra.mxu0 0.0
    %1240 = vmatprep.subr.mxu0 0.0
    %1241 = vmatpush1.msra.mxu0 0.0
    %1242 = vmatprep.subr.mxu0 0.0
    %1243 = vmatpush1.msra.mxu0 0.0
    %1244 = vmatprep.subr.mxu0 0.0
    %1245 = vmatpush1.msra.mxu0 0.0
    %1246 = vmatprep.subr.mxu0 0.0
    %1247 = vmatpush1.msra.mxu0 0.0
    %1248 = vmatprep.subr.mxu0 0.0
    %1249 = vmatpush1.msra.mxu0 0.0
    %1250 = vmatprep.subr.mxu0 0.0
    %1251 = vmatpush1.msra.mxu0 0.0
    %1252 = vmatprep.subr.mxu0 0.0
    %1253 = vmatpush1.msra.mxu0 0.0
    %1254 = vmatprep.subr.mxu0 0.0
    %1255 = vmatpush1.msra.mxu0 0.0
    %1256 = vmatprep.subr.mxu0 0.0
    %1257 = vmatpush1.msra.mxu0 0.0
    %1258 = vmatprep.subr.mxu0 0.0
    %1259 = vmatpush1.msra.mxu0 0.0
    %1260 = vmatprep.subr.mxu0 0.0
    %1261 = vmatpush1.msra.mxu0 0.0
    %1262 = vmatprep.subr.mxu0 0.0
    %1263 = vmatpush1.msra.mxu0 0.0
    %1264 = vmatprep.subr.mxu0 0.0
    %1265 = vmatpush1.msra.mxu0 0.0
    %1266 = vmatprep.subr.mxu0 0.0
    %1267 = vmatpush1.msra.mxu0 0.0
    %1268 = vmatprep.subr.mxu0 0.0
    %1269 = vmatpush1.msra.mxu0 0.0
    %1270 = vmatprep.subr.mxu0 0.0
    %1271 = vmatpush1.msra.mxu0 0.0
    %1272 = vmatprep.subr.mxu0 0.0
    %1273 = vmatpush1.msra.mxu0 0.0
    %1274 = vmatprep.subr.mxu0 0.0
    %1275 = vmatpush1.msra.mxu0 0.0
    %1276 = vmatprep.mubr.f32.mxu0 0.0
    %1277 = vmatmul.mubr.f32.gmra.mrb[0].mxu0 %v1210
    %v1278 = vpop.f32.mrb[0].mxu0
    %v1279 = vadd.f32 0.0, %v1278
    %v1280 = vpop.f32.mrb[0].mxu0
    %1281 = vdwg.mxu0
    %1283 = vrot.lane.b32.xlu0 %v1279, 96
    %v1284 = vpop.permute.xlu0 %1283
    %v1286 = vadd.f32 %v1208, %v1284
    %v1287 = vxor.u32 %v1286, 2147483648
    %v1288 = vmul.f32 %v1287, 1.442695
    %v1289 = vpow.pop %v1288
    %v1290 = vadd.f32 %v1289, 1.0
    %v1291 = vrcp.pop %v1290
    %v1292 = vmul.f32 1.0, %v1291
    %v1294 = vrot.slane %v1208, 4
    %v1296 = vadd.f32 %v1294, %v1284
    %v1297 = vxor.u32 %v1296, 2147483648
    %v1298 = vmul.f32 %v1297, 1.442695
    %v1299 = vpow.pop %v1298
    %v1300 = vadd.f32 %v1299, 1.0
    %v1301 = vrcp.pop %v1300
    %v1302 = vmul.f32 1.0, %v1301
    %v1303 = vadd.f32 %v1279, %v512
    %1305 = vrot.lane.b32.xlu0 %v1303, 32
    %v1306 = vpop.permute.xlu0 %1305
    %v1308 = vmul.f32 %v1292, %v1306
    %1309 = vrot.lane.b32.xlu0 %v1208, 96
    %v1310 = vpop.permute.xlu0 %1309
    %v1311 = vrot.slane %v1310, 4
    %1314 = vrot.lane.b32.xlu0 %v1308, 32
    %v1315 = vpop.permute.xlu0 %1314
    %v1317 = vadd.f32 %v1311, %v1315
    %v1318 = vtanh.pop %v1317
    %v1319 = vsub.f32 1.0, %v1302
    %v1320 = vmul.f32 %v1319, %v1318
    %v1321 = vmul.f32 %v1302, %v1073
    %v1322 = vadd.f32 %v1320, %v1321
    %1324 = vset.pattern.permute.xlu0 0
    %1325 = vperm.xlu0 %1324, %v1083
    %v1326 = vpop.permute.xlu0 %1325
    %v1328 = vmul.f32 %v1326, %v1322
    %v1329 = vsub.f32 1.0, %v1083
    %1331 = vset.pattern.permute.xlu0 0
    %1332 = vperm.xlu0 %1331, %v1329
    %v1333 = vpop.permute.xlu0 %1332
    %v1335 = vmul.f32 %v1333, %v1073
    %v1336 = vadd.f32 %v1328, %v1335
    %v1337 = vmul.f32 %v1206, %v1192
    %s1338 = scalar_lea.vmem [#allocation3], 12
    %1339 = vst.msk [vmem:[%s1338] sm:$0xf] %vm549, %v1337
    %v1340 = vmul.f32 %v1336, %v1326
    %s1341 = scalar_lea.vmem [#allocation4], 16
    %1342 = vst.msk [vmem:[%s1341] sm:$0xf] %vm549, %v1340
    %v1343 = vld [vmem:[%s1082] sm:$0xf]
    %v1344 = vld [vmem:[%s1080] sm:$0xf]
    %v1345 = vld [vmem:[%s1207] sm:$0xf]
    %v1347 = vsel %vm296, %v1206, 0
    %1349 = vmatprep.subr.mxu0 0.0
    %1350 = vmatpush1.msra.mxu0 %v272
    %1351 = vmatprep.subr.mxu0 0.0
    %1352 = vmatpush1.msra.mxu0 %v273
    %1353 = vmatprep.subr.mxu0 0.0
    %1354 = vmatpush1.msra.mxu0 %v274
    %1355 = vmatprep.subr.mxu0 0.0
    %1356 = vmatpush1.msra.mxu0 %v275
    %1357 = vmatprep.subr.mxu0 0.0
    %1358 = vmatpush1.msra.mxu0 0.0
    %1359 = vmatprep.subr.mxu0 0.0
    %1360 = vmatpush1.msra.mxu0 0.0
    %1361 = vmatprep.subr.mxu0 0.0
    %1362 = vmatpush1.msra.mxu0 0.0
    %1363 = vmatprep.subr.mxu0 0.0
    %1364 = vmatpush1.msra.mxu0 0.0
    %1365 = vmatprep.subr.mxu0 0.0
    %1366 = vmatpush1.msra.mxu0 0.0
    %1367 = vmatprep.subr.mxu0 0.0
    %1368 = vmatpush1.msra.mxu0 0.0
    %1369 = vmatprep.subr.mxu0 0.0
    %1370 = vmatpush1.msra.mxu0 0.0
    %1371 = vmatprep.subr.mxu0 0.0
    %1372 = vmatpush1.msra.mxu0 0.0
    %1373 = vmatprep.subr.mxu0 0.0
    %1374 = vmatpush1.msra.mxu0 0.0
    %1375 = vmatprep.subr.mxu0 0.0
    %1376 = vmatpush1.msra.mxu0 0.0
    %1377 = vmatprep.subr.mxu0 0.0
    %1378 = vmatpush1.msra.mxu0 0.0
    %1379 = vmatprep.subr.mxu0 0.0
    %1380 = vmatpush1.msra.mxu0 0.0
    %1381 = vmatprep.subr.mxu0 0.0
    %1382 = vmatpush1.msra.mxu0 0.0
    %1383 = vmatprep.subr.mxu0 0.0
    %1384 = vmatpush1.msra.mxu0 0.0
    %1385 = vmatprep.subr.mxu0 0.0
    %1386 = vmatpush1.msra.mxu0 0.0
    %1387 = vmatprep.subr.mxu0 0.0
    %1388 = vmatpush1.msra.mxu0 0.0
    %1389 = vmatprep.subr.mxu0 0.0
    %1390 = vmatpush1.msra.mxu0 0.0
    %1391 = vmatprep.subr.mxu0 0.0
    %1392 = vmatpush1.msra.mxu0 0.0
    %1393 = vmatprep.subr.mxu0 0.0
    %1394 = vmatpush1.msra.mxu0 0.0
    %1395 = vmatprep.subr.mxu0 0.0
    %1396 = vmatpush1.msra.mxu0 0.0
    %1397 = vmatprep.subr.mxu0 0.0
    %1398 = vmatpush1.msra.mxu0 0.0
    %1399 = vmatprep.subr.mxu0 0.0
    %1400 = vmatpush1.msra.mxu0 0.0
    %1401 = vmatprep.subr.mxu0 0.0
    %1402 = vmatpush1.msra.mxu0 0.0
    %1403 = vmatprep.subr.mxu0 0.0
    %1404 = vmatpush1.msra.mxu0 0.0
    %1405 = vmatprep.subr.mxu0 0.0
    %1406 = vmatpush1.msra.mxu0 0.0
    %1407 = vmatprep.subr.mxu0 0.0
    %1408 = vmatpush1.msra.mxu0 0.0
    %1409 = vmatprep.subr.mxu0 0.0
    %1410 = vmatpush1.msra.mxu0 0.0
    %1411 = vmatprep.subr.mxu0 0.0
    %1412 = vmatpush1.msra.mxu0 0.0
    %1413 = vmatprep.mubr.f32.mxu0 0.0
    %1414 = vmatmul.mubr.f32.gmra.mrb[0].mxu0 %v1347
    %v1415 = vpop.f32.mrb[0].mxu0
    %v1416 = vadd.f32 0.0, %v1415
    %v1417 = vpop.f32.mrb[0].mxu0
    %1418 = vdwg.mxu0
    %v1419 = vadd.f32 %v1345, %v1416
    %v1420 = vxor.u32 %v1419, 2147483648
    %v1421 = vmul.f32 %v1420, 1.442695
    %v1422 = vpow.pop %v1421
    %v1423 = vadd.f32 %v1422, 1.0
    %v1424 = vrcp.pop %v1423
    %v1425 = vmul.f32 1.0, %v1424
    %v1426 = vadd.f32 %v1416, %v378
    %1428 = vrot.lane.b32.xlu0 %v1426, 64
    %v1429 = vpop.permute.xlu0 %1428
    %v1431 = vmul.f32 %v1425, %v1429
    %1433 = vrot.lane.b32.xlu0 %v1431, 64
    %v1434 = vpop.permute.xlu0 %1433
    %v1436 = vadd.f32 %v1345, %v1434
    %v1437 = vtanh.pop %v1436
    %v1438 = vsub.f32 1.0, %v1425
    %1440 = vrot.lane.b32.xlu0 %v1437, 96
    %v1441 = vpop.permute.xlu0 %1440
    %v1443 = vmul.f32 %v1438, %v1441
    %1444 = vrot.lane.b32.xlu0 %v1206, 32
    %v1445 = vpop.permute.xlu0 %1444
    %v1447 = vmul.f32 %v1425, %v1445
    %v1448 = vadd.f32 %v1443, %v1447
    %1450 = vset.pattern.permute.xlu0 0
    %1451 = vperm.xlu0 %1450, %v1343
    %v1452 = vpop.permute.xlu0 %1451
    %1455 = vrot.lane.b32.xlu0 %v1448, 96
    %v1456 = vpop.permute.xlu0 %1455
    %v1458 = vmul.f32 %v1452, %v1456
    %v1459 = vsub.f32 1.0, %v1343
    %1461 = vset.pattern.permute.xlu0 0
    %1462 = vperm.xlu0 %1461, %v1459
    %v1463 = vpop.permute.xlu0 %1462
    %v1465 = vmul.f32 %v1463, %v1206
    %v1466 = vadd.f32 %v1458, %v1465
    %v1467 = vld [vmem:[%s1084] sm:$0xff]
    %v1469 = vsel %vm296, %v1336, 0
    %1471 = vmatprep.subr.mxu0 0.0
    %1472 = vmatpush1.msra.mxu0 %v276
    %1473 = vmatprep.subr.mxu0 0.0
    %1474 = vmatpush1.msra.mxu0 %v277
    %1475 = vmatprep.subr.mxu0 0.0
    %1476 = vmatpush1.msra.mxu0 %v278
    %1477 = vmatprep.subr.mxu0 0.0
    %1478 = vmatpush1.msra.mxu0 %v279
    %1479 = vmatprep.subr.mxu0 0.0
    %1480 = vmatpush1.msra.mxu0 0.0
    %1481 = vmatprep.subr.mxu0 0.0
    %1482 = vmatpush1.msra.mxu0 0.0
    %1483 = vmatprep.subr.mxu0 0.0
    %1484 = vmatpush1.msra.mxu0 0.0
    %1485 = vmatprep.subr.mxu0 0.0
    %1486 = vmatpush1.msra.mxu0 0.0
    %1487 = vmatprep.subr.mxu0 0.0
    %1488 = vmatpush1.msra.mxu0 0.0
    %1489 = vmatprep.subr.mxu0 0.0
    %1490 = vmatpush1.msra.mxu0 0.0
    %1491 = vmatprep.subr.mxu0 0.0
    %1492 = vmatpush1.msra.mxu0 0.0
    %1493 = vmatprep.subr.mxu0 0.0
    %1494 = vmatpush1.msra.mxu0 0.0
    %1495 = vmatprep.subr.mxu0 0.0
    %1496 = vmatpush1.msra.mxu0 0.0
    %1497 = vmatprep.subr.mxu0 0.0
    %1498 = vmatpush1.msra.mxu0 0.0
    %1499 = vmatprep.subr.mxu0 0.0
    %1500 = vmatpush1.msra.mxu0 0.0
    %1501 = vmatprep.subr.mxu0 0.0
    %1502 = vmatpush1.msra.mxu0 0.0
    %1503 = vmatprep.subr.mxu0 0.0
    %1504 = vmatpush1.msra.mxu0 0.0
    %1505 = vmatprep.subr.mxu0 0.0
    %1506 = vmatpush1.msra.mxu0 0.0
    %1507 = vmatprep.subr.mxu0 0.0
    %1508 = vmatpush1.msra.mxu0 0.0
    %1509 = vmatprep.subr.mxu0 0.0
    %1510 = vmatpush1.msra.mxu0 0.0
    %1511 = vmatprep.subr.mxu0 0.0
    %1512 = vmatpush1.msra.mxu0 0.0
    %1513 = vmatprep.subr.mxu0 0.0
    %1514 = vmatpush1.msra.mxu0 0.0
    %1515 = vmatprep.subr.mxu0 0.0
    %1516 = vmatpush1.msra.mxu0 0.0
    %1517 = vmatprep.subr.mxu0 0.0
    %1518 = vmatpush1.msra.mxu0 0.0
    %1519 = vmatprep.subr.mxu0 0.0
    %1520 = vmatpush1.msra.mxu0 0.0
    %1521 = vmatprep.subr.mxu0 0.0
    %1522 = vmatpush1.msra.mxu0 0.0
    %1523 = vmatprep.subr.mxu0 0.0
    %1524 = vmatpush1.msra.mxu0 0.0
    %1525 = vmatprep.subr.mxu0 0.0
    %1526 = vmatpush1.msra.mxu0 0.0
    %1527 = vmatprep.subr.mxu0 0.0
    %1528 = vmatpush1.msra.mxu0 0.0
    %1529 = vmatprep.subr.mxu0 0.0
    %1530 = vmatpush1.msra.mxu0 0.0
    %1531 = vmatprep.subr.mxu0 0.0
    %1532 = vmatpush1.msra.mxu0 0.0
    %1533 = vmatprep.subr.mxu0 0.0
    %1534 = vmatpush1.msra.mxu0 0.0
    %1535 = vmatprep.mubr.f32.mxu0 0.0
    %1536 = vmatmul.mubr.f32.gmra.mrb[0].mxu0 %v1469
    %v1537 = vpop.f32.mrb[0].mxu0
    %v1538 = vadd.f32 0.0, %v1537
    %v1539 = vpop.f32.mrb[0].mxu0
    %1540 = vdwg.mxu0
    %1542 = vrot.lane.b32.xlu0 %v1538, 96
    %v1543 = vpop.permute.xlu0 %1542
    %v1545 = vadd.f32 %v1467, %v1543
    %v1546 = vxor.u32 %v1545, 2147483648
    %v1547 = vmul.f32 %v1546, 1.442695
    %v1548 = vpow.pop %v1547
    %v1549 = vadd.f32 %v1548, 1.0
    %v1550 = vrcp.pop %v1549
    %v1551 = vmul.f32 1.0, %v1550
    %v1553 = vrot.slane %v1467, 4
    %v1555 = vadd.f32 %v1553, %v1543
    %v1556 = vxor.u32 %v1555, 2147483648
    %v1557 = vmul.f32 %v1556, 1.442695
    %v1558 = vpow.pop %v1557
    %v1559 = vadd.f32 %v1558, 1.0
    %v1560 = vrcp.pop %v1559
    %v1561 = vmul.f32 1.0, %v1560
    %v1562 = vadd.f32 %v1538, %v512
    %1564 = vrot.lane.b32.xlu0 %v1562, 32
    %v1565 = vpop.permute.xlu0 %1564
    %v1567 = vmul.f32 %v1551, %v1565
    %1568 = vrot.lane.b32.xlu0 %v1467, 96
    %v1569 = vpop.permute.xlu0 %1568
    %v1570 = vrot.slane %v1569, 4
    %1573 = vrot.lane.b32.xlu0 %v1567, 32
    %v1574 = vpop.permute.xlu0 %1573
    %v1576 = vadd.f32 %v1570, %v1574
    %v1577 = vtanh.pop %v1576
    %v1578 = vsub.f32 1.0, %v1561
    %v1579 = vmul.f32 %v1578, %v1577
    %v1580 = vmul.f32 %v1561, %v1336
    %v1581 = vadd.f32 %v1579, %v1580
    %1583 = vset.pattern.permute.xlu0 0
    %1584 = vperm.xlu0 %1583, %v1344
    %v1585 = vpop.permute.xlu0 %1584
    %v1587 = vmul.f32 %v1585, %v1581
    %v1588 = vsub.f32 1.0, %v1344
    %1590 = vset.pattern.permute.xlu0 0
    %1591 = vperm.xlu0 %1590, %v1588
    %v1592 = vpop.permute.xlu0 %1591
    %v1594 = vmul.f32 %v1592, %v1336
    %v1595 = vadd.f32 %v1587, %v1594
    %v1596 = vmul.f32 %v1466, %v1452
    %s1597 = scalar_lea.vmem [#allocation3], 16
    %1598 = vst.msk [vmem:[%s1597] sm:$0xf] %vm549, %v1596
    %v1599 = vmul.f32 %v1595, %v1585
    %s1600 = scalar_lea.vmem [#allocation4], 12
    %1601 = vst.msk [vmem:[%s1600] sm:$0xf] %vm549, %v1599
    %v1602 = vld [vmem:[%s819] sm:$0xf]
    %v1603 = vld [vmem:[%s817] sm:$0xf]
    %v1604 = vld [vmem:[%s944] sm:$0xf]
    %v1606 = vsel %vm296, %v1466, 0
    %1608 = vmatprep.subr.mxu0 0.0
    %1609 = vmatpush1.msra.mxu0 %v272
    %1610 = vmatprep.subr.mxu0 0.0
    %1611 = vmatpush1.msra.mxu0 %v273
    %1612 = vmatprep.subr.mxu0 0.0
    %1613 = vmatpush1.msra.mxu0 %v274
    %1614 = vmatprep.subr.mxu0 0.0
    %1615 = vmatpush1.msra.mxu0 %v275
    %1616 = vmatprep.subr.mxu0 0.0
    %1617 = vmatpush1.msra.mxu0 0.0
    %1618 = vmatprep.subr.mxu0 0.0
    %1619 = vmatpush1.msra.mxu0 0.0
    %1620 = vmatprep.subr.mxu0 0.0
    %1621 = vmatpush1.msra.mxu0 0.0
    %1622 = vmatprep.subr.mxu0 0.0
    %1623 = vmatpush1.msra.mxu0 0.0
    %1624 = vmatprep.subr.mxu0 0.0
    %1625 = vmatpush1.msra.mxu0 0.0
    %1626 = vmatprep.subr.mxu0 0.0
    %1627 = vmatpush1.msra.mxu0 0.0
    %1628 = vmatprep.subr.mxu0 0.0
    %1629 = vmatpush1.msra.mxu0 0.0
    %1630 = vmatprep.subr.mxu0 0.0
    %1631 = vmatpush1.msra.mxu0 0.0
    %1632 = vmatprep.subr.mxu0 0.0
    %1633 = vmatpush1.msra.mxu0 0.0
    %1634 = vmatprep.subr.mxu0 0.0
    %1635 = vmatpush1.msra.mxu0 0.0
    %1636 = vmatprep.subr.mxu0 0.0
    %1637 = vmatpush1.msra.mxu0 0.0
    %1638 = vmatprep.subr.mxu0 0.0
    %1639 = vmatpush1.msra.mxu0 0.0
    %1640 = vmatprep.subr.mxu0 0.0
    %1641 = vmatpush1.msra.mxu0 0.0
    %1642 = vmatprep.subr.mxu0 0.0
    %1643 = vmatpush1.msra.mxu0 0.0
    %1644 = vmatprep.subr.mxu0 0.0
    %1645 = vmatpush1.msra.mxu0 0.0
    %1646 = vmatprep.subr.mxu0 0.0
    %1647 = vmatpush1.msra.mxu0 0.0
    %1648 = vmatprep.subr.mxu0 0.0
    %1649 = vmatpush1.msra.mxu0 0.0
    %1650 = vmatprep.subr.mxu0 0.0
    %1651 = vmatpush1.msra.mxu0 0.0
    %1652 = vmatprep.subr.mxu0 0.0
    %1653 = vmatpush1.msra.mxu0 0.0
    %1654 = vmatprep.subr.mxu0 0.0
    %1655 = vmatpush1.msra.mxu0 0.0
    %1656 = vmatprep.subr.mxu0 0.0
    %1657 = vmatpush1.msra.mxu0 0.0
    %1658 = vmatprep.subr.mxu0 0.0
    %1659 = vmatpush1.msra.mxu0 0.0
    %1660 = vmatprep.subr.mxu0 0.0
    %1661 = vmatpush1.msra.mxu0 0.0
    %1662 = vmatprep.subr.mxu0 0.0
    %1663 = vmatpush1.msra.mxu0 0.0
    %1664 = vmatprep.subr.mxu0 0.0
    %1665 = vmatpush1.msra.mxu0 0.0
    %1666 = vmatprep.subr.mxu0 0.0
    %1667 = vmatpush1.msra.mxu0 0.0
    %1668 = vmatprep.subr.mxu0 0.0
    %1669 = vmatpush1.msra.mxu0 0.0
    %1670 = vmatprep.subr.mxu0 0.0
    %1671 = vmatpush1.msra.mxu0 0.0
    %1672 = vmatprep.mubr.f32.mxu0 0.0
    %1673 = vmatmul.mubr.f32.gmra.mrb[0].mxu0 %v1606
    %v1674 = vpop.f32.mrb[0].mxu0
    %v1675 = vadd.f32 0.0, %v1674
    %v1676 = vpop.f32.mrb[0].mxu0
    %1677 = vdwg.mxu0
    %v1678 = vadd.f32 %v1604, %v1675
    %v1679 = vxor.u32 %v1678, 2147483648
    %v1680 = vmul.f32 %v1679, 1.442695
    %v1681 = vpow.pop %v1680
    %v1682 = vadd.f32 %v1681, 1.0
    %v1683 = vrcp.pop %v1682
    %v1684 = vmul.f32 1.0, %v1683
    %v1685 = vadd.f32 %v1675, %v378
    %1687 = vrot.lane.b32.xlu0 %v1685, 64
    %v1688 = vpop.permute.xlu0 %1687
    %v1690 = vmul.f32 %v1684, %v1688
    %1692 = vrot.lane.b32.xlu0 %v1690, 64
    %v1693 = vpop.permute.xlu0 %1692
    %v1695 = vadd.f32 %v1604, %v1693
    %v1696 = vtanh.pop %v1695
    %v1697 = vsub.f32 1.0, %v1684
    %1699 = vrot.lane.b32.xlu0 %v1696, 96
    %v1700 = vpop.permute.xlu0 %1699
    %v1702 = vmul.f32 %v1697, %v1700
    %1703 = vrot.lane.b32.xlu0 %v1466, 32
    %v1704 = vpop.permute.xlu0 %1703
    %v1706 = vmul.f32 %v1684, %v1704
    %v1707 = vadd.f32 %v1702, %v1706
    %1709 = vset.pattern.permute.xlu0 0
    %1710 = vperm.xlu0 %1709, %v1602
    %v1711 = vpop.permute.xlu0 %1710
    %1714 = vrot.lane.b32.xlu0 %v1707, 96
    %v1715 = vpop.permute.xlu0 %1714
    %v1717 = vmul.f32 %v1711, %v1715
    %v1718 = vsub.f32 1.0, %v1602
    %1720 = vset.pattern.permute.xlu0 0
    %1721 = vperm.xlu0 %1720, %v1718
    %v1722 = vpop.permute.xlu0 %1721
    %v1724 = vmul.f32 %v1722, %v1466
    %v1725 = vadd.f32 %v1717, %v1724
    %v1726 = vld [vmem:[%s821] sm:$0xff]
    %v1728 = vsel %vm296, %v1595, 0
    %1730 = vmatprep.subr.mxu0 0.0
    %1731 = vmatpush1.msra.mxu0 %v276
    %1732 = vmatprep.subr.mxu0 0.0
    %1733 = vmatpush1.msra.mxu0 %v277
    %1734 = vmatprep.subr.mxu0 0.0
    %1735 = vmatpush1.msra.mxu0 %v278
    %1736 = vmatprep.subr.mxu0 0.0
    %1737 = vmatpush1.msra.mxu0 %v279
    %1738 = vmatprep.subr.mxu0 0.0
    %1739 = vmatpush1.msra.mxu0 0.0
    %1740 = vmatprep.subr.mxu0 0.0
    %1741 = vmatpush1.msra.mxu0 0.0
    %1742 = vmatprep.subr.mxu0 0.0
    %1743 = vmatpush1.msra.mxu0 0.0
    %1744 = vmatprep.subr.mxu0 0.0
    %1745 = vmatpush1.msra.mxu0 0.0
    %1746 = vmatprep.subr.mxu0 0.0
    %1747 = vmatpush1.msra.mxu0 0.0
    %1748 = vmatprep.subr.mxu0 0.0
    %1749 = vmatpush1.msra.mxu0 0.0
    %1750 = vmatprep.subr.mxu0 0.0
    %1751 = vmatpush1.msra.mxu0 0.0
    %1752 = vmatprep.subr.mxu0 0.0
    %1753 = vmatpush1.msra.mxu0 0.0
    %1754 = vmatprep.subr.mxu0 0.0
    %1755 = vmatpush1.msra.mxu0 0.0
    %1756 = vmatprep.subr.mxu0 0.0
    %1757 = vmatpush1.msra.mxu0 0.0
    %1758 = vmatprep.subr.mxu0 0.0
    %1759 = vmatpush1.msra.mxu0 0.0
    %1760 = vmatprep.subr.mxu0 0.0
    %1761 = vmatpush1.msra.mxu0 0.0
    %1762 = vmatprep.subr.mxu0 0.0
    %1763 = vmatpush1.msra.mxu0 0.0
    %1764 = vmatprep.subr.mxu0 0.0
    %1765 = vmatpush1.msra.mxu0 0.0
    %1766 = vmatprep.subr.mxu0 0.0
    %1767 = vmatpush1.msra.mxu0 0.0
    %1768 = vmatprep.subr.mxu0 0.0
    %1769 = vmatpush1.msra.mxu0 0.0
    %1770 = vmatprep.subr.mxu0 0.0
    %1771 = vmatpush1.msra.mxu0 0.0
    %1772 = vmatprep.subr.mxu0 0.0
    %1773 = vmatpush1.msra.mxu0 0.0
    %1774 = vmatprep.subr.mxu0 0.0
    %1775 = vmatpush1.msra.mxu0 0.0
    %1776 = vmatprep.subr.mxu0 0.0
    %1777 = vmatpush1.msra.mxu0 0.0
    %1778 = vmatprep.subr.mxu0 0.0
    %1779 = vmatpush1.msra.mxu0 0.0
    %1780 = vmatprep.subr.mxu0 0.0
    %1781 = vmatpush1.msra.mxu0 0.0
    %1782 = vmatprep.subr.mxu0 0.0
    %1783 = vmatpush1.msra.mxu0 0.0
    %1784 = vmatprep.subr.mxu0 0.0
    %1785 = vmatpush1.msra.mxu0 0.0
    %1786 = vmatprep.subr.mxu0 0.0
    %1787 = vmatpush1.msra.mxu0 0.0
    %1788 = vmatprep.subr.mxu0 0.0
    %1789 = vmatpush1.msra.mxu0 0.0
    %1790 = vmatprep.subr.mxu0 0.0
    %1791 = vmatpush1.msra.mxu0 0.0
    %1792 = vmatprep.subr.mxu0 0.0
    %1793 = vmatpush1.msra.mxu0 0.0
    %1794 = vmatprep.mubr.f32.mxu0 0.0
    %1795 = vmatmul.mubr.f32.gmra.mrb[0].mxu0 %v1728
    %v1796 = vpop.f32.mrb[0].mxu0
    %v1797 = vadd.f32 0.0, %v1796
    %v1798 = vpop.f32.mrb[0].mxu0
    %1799 = vdwg.mxu0
    %1801 = vrot.lane.b32.xlu0 %v1797, 96
    %v1802 = vpop.permute.xlu0 %1801
    %v1804 = vadd.f32 %v1726, %v1802
    %v1805 = vxor.u32 %v1804, 2147483648
    %v1806 = vmul.f32 %v1805, 1.442695
    %v1807 = vpow.pop %v1806
    %v1808 = vadd.f32 %v1807, 1.0
    %v1809 = vrcp.pop %v1808
    %v1810 = vmul.f32 1.0, %v1809
    %v1812 = vrot.slane %v1726, 4
    %v1814 = vadd.f32 %v1812, %v1802
    %v1815 = vxor.u32 %v1814, 2147483648
    %v1816 = vmul.f32 %v1815, 1.442695
    %v1817 = vpow.pop %v1816
    %v1818 = vadd.f32 %v1817, 1.0
    %v1819 = vrcp.pop %v1818
    %v1820 = vmul.f32 1.0, %v1819
    %v1821 = vadd.f32 %v1797, %v512
    %1823 = vrot.lane.b32.xlu0 %v1821, 32
    %v1824 = vpop.permute.xlu0 %1823
    %v1826 = vmul.f32 %v1810, %v1824
    %1827 = vrot.lane.b32.xlu0 %v1726, 96
    %v1828 = vpop.permute.xlu0 %1827
    %v1829 = vrot.slane %v1828, 4
    %1832 = vrot.lane.b32.xlu0 %v1826, 32
    %v1833 = vpop.permute.xlu0 %1832
    %v1835 = vadd.f32 %v1829, %v1833
    %v1836 = vtanh.pop %v1835
    %v1837 = vsub.f32 1.0, %v1820
    %v1838 = vmul.f32 %v1837, %v1836
    %v1839 = vmul.f32 %v1820, %v1595
    %v1840 = vadd.f32 %v1838, %v1839
    %1842 = vset.pattern.permute.xlu0 0
    %1843 = vperm.xlu0 %1842, %v1603
    %v1844 = vpop.permute.xlu0 %1843
    %v1846 = vmul.f32 %v1844, %v1840
    %v1847 = vsub.f32 1.0, %v1603
    %1849 = vset.pattern.permute.xlu0 0
    %1850 = vperm.xlu0 %1849, %v1847
    %v1851 = vpop.permute.xlu0 %1850
    %v1853 = vmul.f32 %v1851, %v1595
    %v1854 = vadd.f32 %v1846, %v1853
    %v1855 = vmul.f32 %v1725, %v1711
    %s1856 = scalar_lea.vmem [#allocation3], 20
    %1857 = vst.msk [vmem:[%s1856] sm:$0xf] %vm549, %v1855
    %v1858 = vmul.f32 %v1854, %v1844
    %s1859 = scalar_lea.vmem [#allocation4], 8
    %1860 = vst.msk [vmem:[%s1859] sm:$0xf] %vm549, %v1858
    %v1861 = vld [vmem:[%s556] sm:$0xf]
    %v1862 = vld [vmem:[%s554] sm:$0xf]
    %v1863 = vld [vmem:[%s681] sm:$0xf]
    %v1865 = vsel %vm296, %v1725, 0
    %1867 = vmatprep.subr.mxu0 0.0
    %1868 = vmatpush1.msra.mxu0 %v272
    %1869 = vmatprep.subr.mxu0 0.0
    %1870 = vmatpush1.msra.mxu0 %v273
    %1871 = vmatprep.subr.mxu0 0.0
    %1872 = vmatpush1.msra.mxu0 %v274
    %1873 = vmatprep.subr.mxu0 0.0
    %1874 = vmatpush1.msra.mxu0 %v275
    %1875 = vmatprep.subr.mxu0 0.0
    %1876 = vmatpush1.msra.mxu0 0.0
    %1877 = vmatprep.subr.mxu0 0.0
    %1878 = vmatpush1.msra.mxu0 0.0
    %1879 = vmatprep.subr.mxu0 0.0
    %1880 = vmatpush1.msra.mxu0 0.0
    %1881 = vmatprep.subr.mxu0 0.0
    %1882 = vmatpush1.msra.mxu0 0.0
    %1883 = vmatprep.subr.mxu0 0.0
    %1884 = vmatpush1.msra.mxu0 0.0
    %1885 = vmatprep.subr.mxu0 0.0
    %1886 = vmatpush1.msra.mxu0 0.0
    %1887 = vmatprep.subr.mxu0 0.0
    %1888 = vmatpush1.msra.mxu0 0.0
    %1889 = vmatprep.subr.mxu0 0.0
    %1890 = vmatpush1.msra.mxu0 0.0
    %1891 = vmatprep.subr.mxu0 0.0
    %1892 = vmatpush1.msra.mxu0 0.0
    %1893 = vmatprep.subr.mxu0 0.0
    %1894 = vmatpush1.msra.mxu0 0.0
    %1895 = vmatprep.subr.mxu0 0.0
    %1896 = vmatpush1.msra.mxu0 0.0
    %1897 = vmatprep.subr.mxu0 0.0
    %1898 = vmatpush1.msra.mxu0 0.0
    %1899 = vmatprep.subr.mxu0 0.0
    %1900 = vmatpush1.msra.mxu0 0.0
    %1901 = vmatprep.subr.mxu0 0.0
    %1902 = vmatpush1.msra.mxu0 0.0
    %1903 = vmatprep.subr.mxu0 0.0
    %1904 = vmatpush1.msra.mxu0 0.0
    %1905 = vmatprep.subr.mxu0 0.0
    %1906 = vmatpush1.msra.mxu0 0.0
    %1907 = vmatprep.subr.mxu0 0.0
    %1908 = vmatpush1.msra.mxu0 0.0
    %1909 = vmatprep.subr.mxu0 0.0
    %1910 = vmatpush1.msra.mxu0 0.0
    %1911 = vmatprep.subr.mxu0 0.0
    %1912 = vmatpush1.msra.mxu0 0.0
    %1913 = vmatprep.subr.mxu0 0.0
    %1914 = vmatpush1.msra.mxu0 0.0
    %1915 = vmatprep.subr.mxu0 0.0
    %1916 = vmatpush1.msra.mxu0 0.0
    %1917 = vmatprep.subr.mxu0 0.0
    %1918 = vmatpush1.msra.mxu0 0.0
    %1919 = vmatprep.subr.mxu0 0.0
    %1920 = vmatpush1.msra.mxu0 0.0
    %1921 = vmatprep.subr.mxu0 0.0
    %1922 = vmatpush1.msra.mxu0 0.0
    %1923 = vmatprep.subr.mxu0 0.0
    %1924 = vmatpush1.msra.mxu0 0.0
    %1925 = vmatprep.subr.mxu0 0.0
    %1926 = vmatpush1.msra.mxu0 0.0
    %1927 = vmatprep.subr.mxu0 0.0
    %1928 = vmatpush1.msra.mxu0 0.0
    %1929 = vmatprep.subr.mxu0 0.0
    %1930 = vmatpush1.msra.mxu0 0.0
    %1931 = vmatprep.mubr.f32.mxu0 0.0
    %1932 = vmatmul.mubr.f32.gmra.mrb[0].mxu0 %v1865
    %v1933 = vpop.f32.mrb[0].mxu0
    %v1934 = vadd.f32 0.0, %v1933
    %v1935 = vpop.f32.mrb[0].mxu0
    %1936 = vdwg.mxu0
    %v1937 = vadd.f32 %v1863, %v1934
    %v1938 = vxor.u32 %v1937, 2147483648
    %v1939 = vmul.f32 %v1938, 1.442695
    %v1940 = vpow.pop %v1939
    %v1941 = vadd.f32 %v1940, 1.0
    %v1942 = vrcp.pop %v1941
    %v1943 = vmul.f32 1.0, %v1942
    %v1944 = vadd.f32 %v1934, %v378
    %1946 = vrot.lane.b32.xlu0 %v1944, 64
    %v1947 = vpop.permute.xlu0 %1946
    %v1949 = vmul.f32 %v1943, %v1947
    %1951 = vrot.lane.b32.xlu0 %v1949, 64
    %v1952 = vpop.permute.xlu0 %1951
    %v1954 = vadd.f32 %v1863, %v1952
    %v1955 = vtanh.pop %v1954
    %v1956 = vsub.f32 1.0, %v1943
    %1958 = vrot.lane.b32.xlu0 %v1955, 96
    %v1959 = vpop.permute.xlu0 %1958
    %v1961 = vmul.f32 %v1956, %v1959
    %1962 = vrot.lane.b32.xlu0 %v1725, 32
    %v1963 = vpop.permute.xlu0 %1962
    %v1965 = vmul.f32 %v1943, %v1963
    %v1966 = vadd.f32 %v1961, %v1965
    %1968 = vset.pattern.permute.xlu0 0
    %1969 = vperm.xlu0 %1968, %v1861
    %v1970 = vpop.permute.xlu0 %1969
    %1973 = vrot.lane.b32.xlu0 %v1966, 96
    %v1974 = vpop.permute.xlu0 %1973
    %v1976 = vmul.f32 %v1970, %v1974
    %v1977 = vsub.f32 1.0, %v1861
    %1979 = vset.pattern.permute.xlu0 0
    %1980 = vperm.xlu0 %1979, %v1977
    %v1981 = vpop.permute.xlu0 %1980
    %v1983 = vmul.f32 %v1981, %v1725
    %v1984 = vadd.f32 %v1976, %v1983
    %v1985 = vld [vmem:[%s558] sm:$0xff]
    %v1987 = vsel %vm296, %v1854, 0
    %1989 = vmatprep.subr.mxu0 0.0
    %1990 = vmatpush1.msra.mxu0 %v276
    %1991 = vmatprep.subr.mxu0 0.0
    %1992 = vmatpush1.msra.mxu0 %v277
    %1993 = vmatprep.subr.mxu0 0.0
    %1994 = vmatpush1.msra.mxu0 %v278
    %1995 = vmatprep.subr.mxu0 0.0
    %1996 = vmatpush1.msra.mxu0 %v279
    %1997 = vmatprep.subr.mxu0 0.0
    %1998 = vmatpush1.msra.mxu0 0.0
    %1999 = vmatprep.subr.mxu0 0.0
    %2000 = vmatpush1.msra.mxu0 0.0
    %2001 = vmatprep.subr.mxu0 0.0
    %2002 = vmatpush1.msra.mxu0 0.0
    %2003 = vmatprep.subr.mxu0 0.0
    %2004 = vmatpush1.msra.mxu0 0.0
    %2005 = vmatprep.subr.mxu0 0.0
    %2006 = vmatpush1.msra.mxu0 0.0
    %2007 = vmatprep.subr.mxu0 0.0
    %2008 = vmatpush1.msra.mxu0 0.0
    %2009 = vmatprep.subr.mxu0 0.0
    %2010 = vmatpush1.msra.mxu0 0.0
    %2011 = vmatprep.subr.mxu0 0.0
    %2012 = vmatpush1.msra.mxu0 0.0
    %2013 = vmatprep.subr.mxu0 0.0
    %2014 = vmatpush1.msra.mxu0 0.0
    %2015 = vmatprep.subr.mxu0 0.0
    %2016 = vmatpush1.msra.mxu0 0.0
    %2017 = vmatprep.subr.mxu0 0.0
    %2018 = vmatpush1.msra.mxu0 0.0
    %2019 = vmatprep.subr.mxu0 0.0
    %2020 = vmatpush1.msra.mxu0 0.0
    %2021 = vmatprep.subr.mxu0 0.0
    %2022 = vmatpush1.msra.mxu0 0.0
    %2023 = vmatprep.subr.mxu0 0.0
    %2024 = vmatpush1.msra.mxu0 0.0
    %2025 = vmatprep.subr.mxu0 0.0
    %2026 = vmatpush1.msra.mxu0 0.0
    %2027 = vmatprep.subr.mxu0 0.0
    %2028 = vmatpush1.msra.mxu0 0.0
    %2029 = vmatprep.subr.mxu0 0.0
    %2030 = vmatpush1.msra.mxu0 0.0
    %2031 = vmatprep.subr.mxu0 0.0
    %2032 = vmatpush1.msra.mxu0 0.0
    %2033 = vmatprep.subr.mxu0 0.0
    %2034 = vmatpush1.msra.mxu0 0.0
    %2035 = vmatprep.subr.mxu0 0.0
    %2036 = vmatpush1.msra.mxu0 0.0
    %2037 = vmatprep.subr.mxu0 0.0
    %2038 = vmatpush1.msra.mxu0 0.0
    %2039 = vmatprep.subr.mxu0 0.0
    %2040 = vmatpush1.msra.mxu0 0.0
    %2041 = vmatprep.subr.mxu0 0.0
    %2042 = vmatpush1.msra.mxu0 0.0
    %2043 = vmatprep.subr.mxu0 0.0
    %2044 = vmatpush1.msra.mxu0 0.0
    %2045 = vmatprep.subr.mxu0 0.0
    %2046 = vmatpush1.msra.mxu0 0.0
    %2047 = vmatprep.subr.mxu0 0.0
    %2048 = vmatpush1.msra.mxu0 0.0
    %2049 = vmatprep.subr.mxu0 0.0
    %2050 = vmatpush1.msra.mxu0 0.0
    %2051 = vmatprep.subr.mxu0 0.0
    %2052 = vmatpush1.msra.mxu0 0.0
    %2053 = vmatprep.mubr.f32.mxu0 0.0
    %2054 = vmatmul.mubr.f32.gmra.mrb[0].mxu0 %v1987
    %v2055 = vpop.f32.mrb[0].mxu0
    %v2056 = vadd.f32 0.0, %v2055
    %v2057 = vpop.f32.mrb[0].mxu0
    %2058 = vdwg.mxu0
    %2060 = vrot.lane.b32.xlu0 %v2056, 96
    %v2061 = vpop.permute.xlu0 %2060
    %v2063 = vadd.f32 %v1985, %v2061
    %v2064 = vxor.u32 %v2063, 2147483648
    %v2065 = vmul.f32 %v2064, 1.442695
    %v2066 = vpow.pop %v2065
    %v2067 = vadd.f32 %v2066, 1.0
    %v2068 = vrcp.pop %v2067
    %v2069 = vmul.f32 1.0, %v2068
    %v2071 = vrot.slane %v1985, 4
    %v2073 = vadd.f32 %v2071, %v2061
    %v2074 = vxor.u32 %v2073, 2147483648
    %v2075 = vmul.f32 %v2074, 1.442695
    %v2076 = vpow.pop %v2075
    %v2077 = vadd.f32 %v2076, 1.0
    %v2078 = vrcp.pop %v2077
    %v2079 = vmul.f32 1.0, %v2078
    %v2080 = vadd.f32 %v2056, %v512
    %2082 = vrot.lane.b32.xlu0 %v2080, 32
    %v2083 = vpop.permute.xlu0 %2082
    %v2085 = vmul.f32 %v2069, %v2083
    %2086 = vrot.lane.b32.xlu0 %v1985, 96
    %v2087 = vpop.permute.xlu0 %2086
    %v2088 = vrot.slane %v2087, 4
    %2091 = vrot.lane.b32.xlu0 %v2085, 32
    %v2092 = vpop.permute.xlu0 %2091
    %v2094 = vadd.f32 %v2088, %v2092
    %v2095 = vtanh.pop %v2094
    %v2096 = vsub.f32 1.0, %v2079
    %v2097 = vmul.f32 %v2096, %v2095
    %v2098 = vmul.f32 %v2079, %v1854
    %v2099 = vadd.f32 %v2097, %v2098
    %2101 = vset.pattern.permute.xlu0 0
    %2102 = vperm.xlu0 %2101, %v1862
    %v2103 = vpop.permute.xlu0 %2102
    %v2105 = vmul.f32 %v2103, %v2099
    %v2106 = vsub.f32 1.0, %v1862
    %2108 = vset.pattern.permute.xlu0 0
    %2109 = vperm.xlu0 %2108, %v2106
    %v2110 = vpop.permute.xlu0 %2109
    %v2112 = vmul.f32 %v2110, %v1854
    %v2113 = vadd.f32 %v2105, %v2112
    %v2114 = vmul.f32 %v1984, %v1970
    %s2115 = scalar_lea.vmem [#allocation3], 24
    %2116 = vst.msk [vmem:[%s2115] sm:$0xf] %vm549, %v2114
    %v2117 = vmul.f32 %v2113, %v2103
    %s2118 = scalar_lea.vmem [#allocation4], 4
    %2119 = vst.msk [vmem:[%s2118] sm:$0xf] %vm549, %v2117
    %v2120 = vld [vmem:[%s293] sm:$0xf]
    %v2121 = vld [vmem:[%s1] sm:$0xf]
    %v2122 = vld [vmem:[%s418] sm:$0xf]
    %v2124 = vsel %vm296, %v1984, 0
    %2126 = vmatprep.subr.mxu0 0.0
    %2127 = vmatpush1.msra.mxu0 %v272
    %2128 = vmatprep.subr.mxu0 0.0
    %2129 = vmatpush1.msra.mxu0 %v273
    %2130 = vmatprep.subr.mxu0 0.0
    %2131 = vmatpush1.msra.mxu0 %v274
    %2132 = vmatprep.subr.mxu0 0.0
    %2133 = vmatpush1.msra.mxu0 %v275
    %2134 = vmatprep.subr.mxu0 0.0
    %2135 = vmatpush1.msra.mxu0 0.0
    %2136 = vmatprep.subr.mxu0 0.0
    %2137 = vmatpush1.msra.mxu0 0.0
    %2138 = vmatprep.subr.mxu0 0.0
    %2139 = vmatpush1.msra.mxu0 0.0
    %2140 = vmatprep.subr.mxu0 0.0
    %2141 = vmatpush1.msra.mxu0 0.0
    %2142 = vmatprep.subr.mxu0 0.0
    %2143 = vmatpush1.msra.mxu0 0.0
    %2144 = vmatprep.subr.mxu0 0.0
    %2145 = vmatpush1.msra.mxu0 0.0
    %2146 = vmatprep.subr.mxu0 0.0
    %2147 = vmatpush1.msra.mxu0 0.0
    %2148 = vmatprep.subr.mxu0 0.0
    %2149 = vmatpush1.msra.mxu0 0.0
    %2150 = vmatprep.subr.mxu0 0.0
    %2151 = vmatpush1.msra.mxu0 0.0
    %2152 = vmatprep.subr.mxu0 0.0
    %2153 = vmatpush1.msra.mxu0 0.0
    %2154 = vmatprep.subr.mxu0 0.0
    %2155 = vmatpush1.msra.mxu0 0.0
    %2156 = vmatprep.subr.mxu0 0.0
    %2157 = vmatpush1.msra.mxu0 0.0
    %2158 = vmatprep.subr.mxu0 0.0
    %2159 = vmatpush1.msra.mxu0 0.0
    %2160 = vmatprep.subr.mxu0 0.0
    %2161 = vmatpush1.msra.mxu0 0.0
    %2162 = vmatprep.subr.mxu0 0.0
    %2163 = vmatpush1.msra.mxu0 0.0
    %2164 = vmatprep.subr.mxu0 0.0
    %2165 = vmatpush1.msra.mxu0 0.0
    %2166 = vmatprep.subr.mxu0 0.0
    %2167 = vmatpush1.msra.mxu0 0.0
    %2168 = vmatprep.subr.mxu0 0.0
    %2169 = vmatpush1.msra.mxu0 0.0
    %2170 = vmatprep.subr.mxu0 0.0
    %2171 = vmatpush1.msra.mxu0 0.0
    %2172 = vmatprep.subr.mxu0 0.0
    %2173 = vmatpush1.msra.mxu0 0.0
    %2174 = vmatprep.subr.mxu0 0.0
    %2175 = vmatpush1.msra.mxu0 0.0
    %2176 = vmatprep.subr.mxu0 0.0
    %2177 = vmatpush1.msra.mxu0 0.0
    %2178 = vmatprep.subr.mxu0 0.0
    %2179 = vmatpush1.msra.mxu0 0.0
    %2180 = vmatprep.subr.mxu0 0.0
    %2181 = vmatpush1.msra.mxu0 0.0
    %2182 = vmatprep.subr.mxu0 0.0
    %2183 = vmatpush1.msra.mxu0 0.0
    %2184 = vmatprep.subr.mxu0 0.0
    %2185 = vmatpush1.msra.mxu0 0.0
    %2186 = vmatprep.subr.mxu0 0.0
    %2187 = vmatpush1.msra.mxu0 0.0
    %2188 = vmatprep.subr.mxu0 0.0
    %2189 = vmatpush1.msra.mxu0 0.0
    %2190 = vmatprep.mubr.f32.mxu0 0.0
    %2191 = vmatmul.mubr.f32.gmra.mrb[0].mxu0 %v2124
    %v2192 = vpop.f32.mrb[0].mxu0
    %v2193 = vadd.f32 0.0, %v2192
    %v2194 = vpop.f32.mrb[0].mxu0
    %2195 = vdwg.mxu0
    %v2196 = vadd.f32 %v2122, %v2193
    %v2197 = vxor.u32 %v2196, 2147483648
    %v2198 = vmul.f32 %v2197, 1.442695
    %v2199 = vpow.pop %v2198
    %v2200 = vadd.f32 %v2199, 1.0
    %v2201 = vrcp.pop %v2200
    %v2202 = vmul.f32 1.0, %v2201
    %v2203 = vadd.f32 %v2193, %v378
    %2205 = vrot.lane.b32.xlu0 %v2203, 64
    %v2206 = vpop.permute.xlu0 %2205
    %v2208 = vmul.f32 %v2202, %v2206
    %2210 = vrot.lane.b32.xlu0 %v2208, 64
    %v2211 = vpop.permute.xlu0 %2210
    %v2213 = vadd.f32 %v2122, %v2211
    %v2214 = vtanh.pop %v2213
    %v2215 = vsub.f32 1.0, %v2202
    %2217 = vrot.lane.b32.xlu0 %v2214, 96
    %v2218 = vpop.permute.xlu0 %2217
    %v2220 = vmul.f32 %v2215, %v2218
    %2221 = vrot.lane.b32.xlu0 %v1984, 32
    %v2222 = vpop.permute.xlu0 %2221
    %v2224 = vmul.f32 %v2202, %v2222
    %v2225 = vadd.f32 %v2220, %v2224
    %2227 = vset.pattern.permute.xlu0 0
    %2228 = vperm.xlu0 %2227, %v2120
    %v2229 = vpop.permute.xlu0 %2228
    %2232 = vrot.lane.b32.xlu0 %v2225, 96
    %v2233 = vpop.permute.xlu0 %2232
    %v2235 = vmul.f32 %v2229, %v2233
    %v2236 = vsub.f32 1.0, %v2120
    %2238 = vset.pattern.permute.xlu0 0
    %2239 = vperm.xlu0 %2238, %v2236
    %v2240 = vpop.permute.xlu0 %2239
    %v2242 = vmul.f32 %v2240, %v1984
    %v2243 = vadd.f32 %v2235, %v2242
    %v2244 = vld [vmem:[#allocation2] sm:$0xff]
    %v2246 = vsel %vm296, %v2113, 0
    %2248 = vmatprep.subr.mxu0 0.0
    %2249 = vmatpush1.msra.mxu0 %v276
    %2250 = vmatprep.subr.mxu0 0.0
    %2251 = vmatpush1.msra.mxu0 %v277
    %2252 = vmatprep.subr.mxu0 0.0
    %2253 = vmatpush1.msra.mxu0 %v278
    %2254 = vmatprep.subr.mxu0 0.0
    %2255 = vmatpush1.msra.mxu0 %v279
    %2256 = vmatprep.subr.mxu0 0.0
    %2257 = vmatpush1.msra.mxu0 0.0
    %2258 = vmatprep.subr.mxu0 0.0
    %2259 = vmatpush1.msra.mxu0 0.0
    %2260 = vmatprep.subr.mxu0 0.0
    %2261 = vmatpush1.msra.mxu0 0.0
    %2262 = vmatprep.subr.mxu0 0.0
    %2263 = vmatpush1.msra.mxu0 0.0
    %2264 = vmatprep.subr.mxu0 0.0
    %2265 = vmatpush1.msra.mxu0 0.0
    %2266 = vmatprep.subr.mxu0 0.0
    %2267 = vmatpush1.msra.mxu0 0.0
    %2268 = vmatprep.subr.mxu0 0.0
    %2269 = vmatpush1.msra.mxu0 0.0
    %2270 = vmatprep.subr.mxu0 0.0
    %2271 = vmatpush1.msra.mxu0 0.0
    %2272 = vmatprep.subr.mxu0 0.0
    %2273 = vmatpush1.msra.mxu0 0.0
    %2274 = vmatprep.subr.mxu0 0.0
    %2275 = vmatpush1.msra.mxu0 0.0
    %2276 = vmatprep.subr.mxu0 0.0
    %2277 = vmatpush1.msra.mxu0 0.0
    %2278 = vmatprep.subr.mxu0 0.0
    %2279 = vmatpush1.msra.mxu0 0.0
    %2280 = vmatprep.subr.mxu0 0.0
    %2281 = vmatpush1.msra.mxu0 0.0
    %2282 = vmatprep.subr.mxu0 0.0
    %2283 = vmatpush1.msra.mxu0 0.0
    %2284 = vmatprep.subr.mxu0 0.0
    %2285 = vmatpush1.msra.mxu0 0.0
    %2286 = vmatprep.subr.mxu0 0.0
    %2287 = vmatpush1.msra.mxu0 0.0
    %2288 = vmatprep.subr.mxu0 0.0
    %2289 = vmatpush1.msra.mxu0 0.0
    %2290 = vmatprep.subr.mxu0 0.0
    %2291 = vmatpush1.msra.mxu0 0.0
    %2292 = vmatprep.subr.mxu0 0.0
    %2293 = vmatpush1.msra.mxu0 0.0
    %2294 = vmatprep.subr.mxu0 0.0
    %2295 = vmatpush1.msra.mxu0 0.0
    %2296 = vmatprep.subr.mxu0 0.0
    %2297 = vmatpush1.msra.mxu0 0.0
    %2298 = vmatprep.subr.mxu0 0.0
    %2299 = vmatpush1.msra.mxu0 0.0
    %2300 = vmatprep.subr.mxu0 0.0
    %2301 = vmatpush1.msra.mxu0 0.0
    %2302 = vmatprep.subr.mxu0 0.0
    %2303 = vmatpush1.msra.mxu0 0.0
    %2304 = vmatprep.subr.mxu0 0.0
    %2305 = vmatpush1.msra.mxu0 0.0
    %2306 = vmatprep.subr.mxu0 0.0
    %2307 = vmatpush1.msra.mxu0 0.0
    %2308 = vmatprep.subr.mxu0 0.0
    %2309 = vmatpush1.msra.mxu0 0.0
    %2310 = vmatprep.subr.mxu0 0.0
    %2311 = vmatpush1.msra.mxu0 0.0
    %2312 = vmatprep.mubr.f32.mxu0 0.0
    %2313 = vmatmul.mubr.f32.gmra.mrb[0].mxu0 %v2246
    %v2314 = vpop.f32.mrb[0].mxu0
    %v2315 = vadd.f32 0.0, %v2314
    %v2316 = vpop.f32.mrb[0].mxu0
    %2317 = vdwg.mxu0
    %2319 = vrot.lane.b32.xlu0 %v2315, 96
    %v2320 = vpop.permute.xlu0 %2319
    %v2322 = vadd.f32 %v2244, %v2320
    %v2323 = vxor.u32 %v2322, 2147483648
    %v2324 = vmul.f32 %v2323, 1.442695
    %v2325 = vpow.pop %v2324
    %v2326 = vadd.f32 %v2325, 1.0
    %v2327 = vrcp.pop %v2326
    %v2328 = vmul.f32 1.0, %v2327
    %v2330 = vrot.slane %v2244, 4
    %v2332 = vadd.f32 %v2330, %v2320
    %v2333 = vxor.u32 %v2332, 2147483648
    %v2334 = vmul.f32 %v2333, 1.442695
    %v2335 = vpow.pop %v2334
    %v2336 = vadd.f32 %v2335, 1.0
    %v2337 = vrcp.pop %v2336
    %v2338 = vmul.f32 1.0, %v2337
    %v2339 = vadd.f32 %v2315, %v512
    %2341 = vrot.lane.b32.xlu0 %v2339, 32
    %v2342 = vpop.permute.xlu0 %2341
    %v2344 = vmul.f32 %v2328, %v2342
    %2345 = vrot.lane.b32.xlu0 %v2244, 96
    %v2346 = vpop.permute.xlu0 %2345
    %v2347 = vrot.slane %v2346, 4
    %2350 = vrot.lane.b32.xlu0 %v2344, 32
    %v2351 = vpop.permute.xlu0 %2350
    %v2353 = vadd.f32 %v2347, %v2351
    %v2354 = vtanh.pop %v2353
    %v2355 = vsub.f32 1.0, %v2338
    %v2356 = vmul.f32 %v2355, %v2354
    %v2357 = vmul.f32 %v2338, %v2113
    %v2358 = vadd.f32 %v2356, %v2357
    %2360 = vset.pattern.permute.xlu0 0
    %2361 = vperm.xlu0 %2360, %v2121
    %v2362 = vpop.permute.xlu0 %2361
    %v2364 = vmul.f32 %v2362, %v2358
    %v2365 = vsub.f32 1.0, %v2121
    %2367 = vset.pattern.permute.xlu0 0
    %2368 = vperm.xlu0 %2367, %v2365
    %v2369 = vpop.permute.xlu0 %2368
    %v2371 = vmul.f32 %v2369, %v2113
    %v2372 = vadd.f32 %v2364, %v2371
    %v2373 = vmul.f32 %v2243, %v2229
    %s2374 = scalar_lea.vmem [#allocation3], 28
    %2375 = vst.msk [vmem:[%s2374] sm:$0xf] %vm549, %v2373
    %v2376 = vmul.f32 %v2372, %v2362
    %2377 = vst.msk [vmem:[#allocation4] sm:$0xf] %vm549, %v2376
    %v2378 = vld [vmem:[#allocation3] sm:$0xf]
    %v2379 = vld [vmem:[#allocation3 + $0x4] sm:$0xf]
    %v2380 = vld [vmem:[#allocation3 + $0x8] sm:$0xf]
    %v2381 = vld [vmem:[#allocation3 + $0xc] sm:$0xf]
    %v2382 = vld [vmem:[#allocation3 + $0x10] sm:$0xf]
    %v2383 = vld [vmem:[#allocation3 + $0x14] sm:$0xf]
    %v2384 = vld [vmem:[#allocation3 + $0x18] sm:$0xf]
    %v2385 = vld [vmem:[#allocation3 + $0x1c] sm:$0xf]
    %v2386 = vld [vmem:[#allocation4] sm:$0xf]
    %v2387 = vld [vmem:[#allocation4 + $0x4] sm:$0xf]
    %v2388 = vld [vmem:[#allocation4 + $0x8] sm:$0xf]
    %v2389 = vld [vmem:[#allocation4 + $0xc] sm:$0xf]
    %v2390 = vld [vmem:[#allocation4 + $0x10] sm:$0xf]
    %v2391 = vld [vmem:[#allocation4 + $0x14] sm:$0xf]
    %v2392 = vld [vmem:[#allocation4 + $0x18] sm:$0xf]
    %v2393 = vld [vmem:[#allocation4 + $0x1c] sm:$0xf]
    %v2394 = vld [vmem:[#allocation10] sm:$0xff]
    %v2395 = vld [vmem:[#allocation10 + $0x8] sm:$0xff]
    %v2396 = vld [vmem:[#allocation10 + $0x10] sm:$0xff]
    %v2397 = vld [vmem:[#allocation10 + $0x18] sm:$0xff]
    %v2398 = vld [vmem:[#allocation11] sm:$0xff]
    %v2399 = vld [vmem:[#allocation11 + $0x8] sm:$0xff]
    %v2400 = vld [vmem:[#allocation11 + $0x10] sm:$0xff]
    %v2401 = vld [vmem:[#allocation11 + $0x18] sm:$0xff]
    %v2410 = vcombine.low %v2386, %v2387
    %v2411 = vcombine.low %v2388, %v2389
    %v2412 = vcombine.low %v2390, %v2391
    %v2413 = vcombine.low %v2392, %v2393
    %v2414 = vsel %vm296, %v2410, 0
    %v2416 = vsel %vm296, %v2411, 0
    %v2418 = vsel %vm296, %v2412, 0
    %v2420 = vsel %vm296, %v2413, 0
    %2422 = vmatprep.subr.mxu0 0.0
    %2423 = vmatpush1.msra.mxu0 %v2398
    %2424 = vmatprep.subr.mxu0 0.0
    %2425 = vmatpush1.msra.mxu0 %v2399
    %2426 = vmatprep.subr.mxu0 0.0
    %2427 = vmatpush1.msra.mxu0 %v2400
    %2428 = vmatprep.subr.mxu0 0.0
    %2429 = vmatpush1.msra.mxu0 %v2401
    %2430 = vmatprep.subr.mxu0 0.0
    %2431 = vmatpush1.msra.mxu0 0.0
    %2432 = vmatprep.subr.mxu0 0.0
    %2433 = vmatpush1.msra.mxu0 0.0
    %2434 = vmatprep.subr.mxu0 0.0
    %2435 = vmatpush1.msra.mxu0 0.0
    %2436 = vmatprep.subr.mxu0 0.0
    %2437 = vmatpush1.msra.mxu0 0.0
    %2438 = vmatprep.subr.mxu0 0.0
    %2439 = vmatpush1.msra.mxu0 0.0
    %2440 = vmatprep.subr.mxu0 0.0
    %2441 = vmatpush1.msra.mxu0 0.0
    %2442 = vmatprep.subr.mxu0 0.0
    %2443 = vmatpush1.msra.mxu0 0.0
    %2444 = vmatprep.subr.mxu0 0.0
    %2445 = vmatpush1.msra.mxu0 0.0
    %2446 = vmatprep.subr.mxu0 0.0
    %2447 = vmatpush1.msra.mxu0 0.0
    %2448 = vmatprep.subr.mxu0 0.0
    %2449 = vmatpush1.msra.mxu0 0.0
    %2450 = vmatprep.subr.mxu0 0.0
    %2451 = vmatpush1.msra.mxu0 0.0
    %2452 = vmatprep.subr.mxu0 0.0
    %2453 = vmatpush1.msra.mxu0 0.0
    %2454 = vmatprep.subr.mxu0 0.0
    %2455 = vmatpush1.msra.mxu0 0.0
    %2456 = vmatprep.subr.mxu0 0.0
    %2457 = vmatpush1.msra.mxu0 0.0
    %2458 = vmatprep.subr.mxu0 0.0
    %2459 = vmatpush1.msra.mxu0 0.0
    %2460 = vmatprep.subr.mxu0 0.0
    %2461 = vmatpush1.msra.mxu0 0.0
    %2462 = vmatprep.subr.mxu0 0.0
    %2463 = vmatpush1.msra.mxu0 0.0
    %2464 = vmatprep.subr.mxu0 0.0
    %2465 = vmatpush1.msra.mxu0 0.0
    %2466 = vmatprep.subr.mxu0 0.0
    %2467 = vmatpush1.msra.mxu0 0.0
    %2468 = vmatprep.subr.mxu0 0.0
    %2469 = vmatpush1.msra.mxu0 0.0
    %2470 = vmatprep.subr.mxu0 0.0
    %2471 = vmatpush1.msra.mxu0 0.0
    %2472 = vmatprep.subr.mxu0 0.0
    %2473 = vmatpush1.msra.mxu0 0.0
    %2474 = vmatprep.subr.mxu0 0.0
    %2475 = vmatpush1.msra.mxu0 0.0
    %2476 = vmatprep.subr.mxu0 0.0
    %2477 = vmatpush1.msra.mxu0 0.0
    %2478 = vmatprep.subr.mxu0 0.0
    %2479 = vmatpush1.msra.mxu0 0.0
    %2480 = vmatprep.subr.mxu0 0.0
    %2481 = vmatpush1.msra.mxu0 0.0
    %2482 = vmatprep.subr.mxu0 0.0
    %2483 = vmatpush1.msra.mxu0 0.0
    %2484 = vmatprep.subr.mxu0 0.0
    %2485 = vmatpush1.msra.mxu0 0.0
    %2486 = vmatprep.mubr.f32.mxu0 0.0
    %2487 = vmatmul.mubr.f32.gmra.mrb[0].mxu0 %v2414
    %v2488 = vpop.f32.mrb[0].mxu0
    %v2489 = vadd.f32 0.0, %v2488
    %v2490 = vpop.f32.mrb[0].mxu0
    %2491 = vmatprep.mubr.f32.mxu0 0.0
    %2492 = vmatmul.mubr.f32.gmra.mrb[0].mxu0 %v2416
    %v2493 = vpop.f32.mrb[0].mxu0
    %v2494 = vadd.f32 0.0, %v2493
    %v2495 = vpop.f32.mrb[0].mxu0
    %2496 = vmatprep.mubr.f32.mxu0 0.0
    %2497 = vmatmul.mubr.f32.gmra.mrb[0].mxu0 %v2418
    %v2498 = vpop.f32.mrb[0].mxu0
    %v2499 = vadd.f32 0.0, %v2498
    %v2500 = vpop.f32.mrb[0].mxu0
    %2501 = vmatprep.mubr.f32.mxu0 0.0
    %2502 = vmatmul.mubr.f32.gmra.mrb[0].mxu0 %v2420
    %v2503 = vpop.f32.mrb[0].mxu0
    %v2504 = vadd.f32 0.0, %v2503
    %v2505 = vpop.f32.mrb[0].mxu0
    %2506 = vdwg.mxu0
    %v2515 = vcombine.low %v2378, %v2379
    %v2516 = vcombine.low %v2380, %v2381
    %v2517 = vcombine.low %v2382, %v2383
    %v2518 = vcombine.low %v2384, %v2385
    %v2519 = vsel %vm296, %v2515, 0
    %v2521 = vsel %vm296, %v2516, 0
    %v2523 = vsel %vm296, %v2517, 0
    %v2525 = vsel %vm296, %v2518, 0
    %2527 = vmatprep.subr.mxu0 0.0
    %2528 = vmatpush1.msra.mxu0 %v2394
    %2529 = vmatprep.subr.mxu0 0.0
    %2530 = vmatpush1.msra.mxu0 %v2395
    %2531 = vmatprep.subr.mxu0 0.0
    %2532 = vmatpush1.msra.mxu0 %v2396
    %2533 = vmatprep.subr.mxu0 0.0
    %2534 = vmatpush1.msra.mxu0 %v2397
    %2535 = vmatprep.subr.mxu0 0.0
    %2536 = vmatpush1.msra.mxu0 0.0
    %2537 = vmatprep.subr.mxu0 0.0
    %2538 = vmatpush1.msra.mxu0 0.0
    %2539 = vmatprep.subr.mxu0 0.0
    %2540 = vmatpush1.msra.mxu0 0.0
    %2541 = vmatprep.subr.mxu0 0.0
    %2542 = vmatpush1.msra.mxu0 0.0
    %2543 = vmatprep.subr.mxu0 0.0
    %2544 = vmatpush1.msra.mxu0 0.0
    %2545 = vmatprep.subr.mxu0 0.0
    %2546 = vmatpush1.msra.mxu0 0.0
    %2547 = vmatprep.subr.mxu0 0.0
    %2548 = vmatpush1.msra.mxu0 0.0
    %2549 = vmatprep.subr.mxu0 0.0
    %2550 = vmatpush1.msra.mxu0 0.0
    %2551 = vmatprep.subr.mxu0 0.0
    %2552 = vmatpush1.msra.mxu0 0.0
    %2553 = vmatprep.subr.mxu0 0.0
    %2554 = vmatpush1.msra.mxu0 0.0
    %2555 = vmatprep.subr.mxu0 0.0
    %2556 = vmatpush1.msra.mxu0 0.0
    %2557 = vmatprep.subr.mxu0 0.0
    %2558 = vmatpush1.msra.mxu0 0.0
    %2559 = vmatprep.subr.mxu0 0.0
    %2560 = vmatpush1.msra.mxu0 0.0
    %2561 = vmatprep.subr.mxu0 0.0
    %2562 = vmatpush1.msra.mxu0 0.0
    %2563 = vmatprep.subr.mxu0 0.0
    %2564 = vmatpush1.msra.mxu0 0.0
    %2565 = vmatprep.subr.mxu0 0.0
    %2566 = vmatpush1.msra.mxu0 0.0
    %2567 = vmatprep.subr.mxu0 0.0
    %2568 = vmatpush1.msra.mxu0 0.0
    %2569 = vmatprep.subr.mxu0 0.0
    %2570 = vmatpush1.msra.mxu0 0.0
    %2571 = vmatprep.subr.mxu0 0.0
    %2572 = vmatpush1.msra.mxu0 0.0
    %2573 = vmatprep.subr.mxu0 0.0
    %2574 = vmatpush1.msra.mxu0 0.0
    %2575 = vmatprep.subr.mxu0 0.0
    %2576 = vmatpush1.msra.mxu0 0.0
    %2577 = vmatprep.subr.mxu0 0.0
    %2578 = vmatpush1.msra.mxu0 0.0
    %2579 = vmatprep.subr.mxu0 0.0
    %2580 = vmatpush1.msra.mxu0 0.0
    %2581 = vmatprep.subr.mxu0 0.0
    %2582 = vmatpush1.msra.mxu0 0.0
    %2583 = vmatprep.subr.mxu0 0.0
    %2584 = vmatpush1.msra.mxu0 0.0
    %2585 = vmatprep.subr.mxu0 0.0
    %2586 = vmatpush1.msra.mxu0 0.0
    %2587 = vmatprep.subr.mxu0 0.0
    %2588 = vmatpush1.msra.mxu0 0.0
    %2589 = vmatprep.subr.mxu0 0.0
    %2590 = vmatpush1.msra.mxu0 0.0
    %2591 = vmatprep.mubr.f32.mxu0 0.0
    %2592 = vmatmul.mubr.f32.gmra.mrb[0].mxu0 %v2519
    %v2593 = vpop.f32.mrb[0].mxu0
    %v2594 = vadd.f32 %v2489, %v2593
    %v2595 = vpop.f32.mrb[0].mxu0
    %2596 = vmatprep.mubr.f32.mxu0 0.0
    %2597 = vmatmul.mubr.f32.gmra.mrb[0].mxu0 %v2521
    %v2598 = vpop.f32.mrb[0].mxu0
    %v2599 = vadd.f32 %v2494, %v2598
    %v2600 = vpop.f32.mrb[0].mxu0
    %2601 = vmatprep.mubr.f32.mxu0 0.0
    %2602 = vmatmul.mubr.f32.gmra.mrb[0].mxu0 %v2523
    %v2603 = vpop.f32.mrb[0].mxu0
    %v2604 = vadd.f32 %v2499, %v2603
    %v2605 = vpop.f32.mrb[0].mxu0
    %2606 = vmatprep.mubr.f32.mxu0 0.0
    %2607 = vmatmul.mubr.f32.gmra.mrb[0].mxu0 %v2525
    %v2608 = vpop.f32.mrb[0].mxu0
    %v2609 = vadd.f32 %v2504, %v2608
    %v2610 = vpop.f32.mrb[0].mxu0
    %2611 = vdwg.mxu0
    %v2612 = vld [vmem:[%s11] sm:$0x1]
    %v2614 = vlaneseq
    %v2615 = vshrl.u32 %v2614, 7
    %v2616 = vsub.s32 0, %v2615
    %v2617 = vrot.slane %v2612, %v2616
    %v2619 = vadd.f32 %v2594, %v2617
    %v2620 = vadd.f32 %v2599, %v2617
    %v2621 = vadd.f32 %v2604, %v2617
    %v2622 = vadd.f32 %v2609, %v2617
    %v2623 = vtanh.pop %v2619
    %v2624 = vtanh.pop %v2620
    %v2625 = vtanh.pop %v2621
    %v2626 = vtanh.pop %v2622
    %v2631 = vcombine.high %v2623, %v2623
    %v2632 = vcombine.high %v2624, %v2624
    %v2633 = vcombine.high %v2625, %v2625
    %v2634 = vcombine.high %v2626, %v2626
    %v2639 = vld [vmem:[%s12] sm:$0x1]
    %v2641 = vlaneseq
    %v2642 = vshrl.u32 %v2641, 7
    %v2643 = vsub.s32 0, %v2642
    %v2644 = vrot.slane %v2639, %v2643
    %v2646 = vmul.f32 %v2623, %v2644
    %v2647 = vmul.f32 %v2631, %v2644
    %v2648 = vmul.f32 %v2624, %v2644
    %v2649 = vmul.f32 %v2632, %v2644
    %v2650 = vmul.f32 %v2625, %v2644
    %v2651 = vmul.f32 %v2633, %v2644
    %v2652 = vmul.f32 %v2626, %v2644
    %v2653 = vmul.f32 %v2634, %v2644
    %vm2654 = vcmask 519168
    %v2655 = vsel %vm2654, %v2646, 0.0
    %2656 = vadd.xlane.f32.xlu0 %v2655
    %v2657 = vpop.xlane.xlu0 %2656
    %v2658 = vsel %vm2654, %v2647, 0.0
    %2659 = vadd.xlane.f32.xlu0 %v2658
    %v2660 = vpop.xlane.xlu0 %2659
    %v2661 = vsel %vm2654, %v2648, 0.0
    %2662 = vadd.xlane.f32.xlu0 %v2661
    %v2663 = vpop.xlane.xlu0 %2662
    %v2664 = vsel %vm2654, %v2649, 0.0
    %2665 = vadd.xlane.f32.xlu0 %v2664
    %v2666 = vpop.xlane.xlu0 %2665
    %v2667 = vsel %vm2654, %v2650, 0.0
    %2668 = vadd.xlane.f32.xlu0 %v2667
    %v2669 = vpop.xlane.xlu0 %2668
    %v2670 = vsel %vm2654, %v2651, 0.0
    %2671 = vadd.xlane.f32.xlu0 %v2670
    %v2672 = vpop.xlane.xlu0 %2671
    %v2673 = vsel %vm2654, %v2652, 0.0
    %2674 = vadd.xlane.f32.xlu0 %v2673
    %v2675 = vpop.xlane.xlu0 %2674
    %v2676 = vsel %vm2654, %v2653, 0.0
    %2677 = vadd.xlane.f32.xlu0 %v2676
    %v2678 = vpop.xlane.xlu0 %2677
    %v2679 = vld [vmem:[%s0] sm:$0xff]
    %vm2680 = vcmp.gt.f32.partialorder %v2679, 0.0
    %v2689 = vlaneseq
    %v2690 = vand.u32 %v2689, 127
    %v2691 = vlaneseq
    %v2692 = vshrl.u32 %v2691, 7
    %v2693 = vsub.s32 %v2690, %v2692
    %v2694 = vrot.slane %v2657, %v2693
    %v2695 = vlaneseq
    %v2696 = vshrl.u32 %v2695, 7
    %v2697 = vsub.s32 %v2690, %v2696
    %v2698 = vrot.slane %v2660, %v2697
    %v2699 = vlaneseq
    %v2700 = vshrl.u32 %v2699, 7
    %v2701 = vsub.s32 %v2690, %v2700
    %v2702 = vrot.slane %v2663, %v2701
    %v2703 = vlaneseq
    %v2704 = vshrl.u32 %v2703, 7
    %v2705 = vsub.s32 %v2690, %v2704
    %v2706 = vrot.slane %v2666, %v2705
    %v2707 = vlaneseq
    %v2708 = vshrl.u32 %v2707, 7
    %v2709 = vsub.s32 %v2690, %v2708
    %v2710 = vrot.slane %v2669, %v2709
    %v2711 = vlaneseq
    %v2712 = vshrl.u32 %v2711, 7
    %v2713 = vsub.s32 %v2690, %v2712
    %v2714 = vrot.slane %v2672, %v2713
    %v2715 = vlaneseq
    %v2716 = vshrl.u32 %v2715, 7
    %v2717 = vsub.s32 %v2690, %v2716
    %v2718 = vrot.slane %v2675, %v2717
    %v2719 = vlaneseq
    %v2720 = vshrl.u32 %v2719, 7
    %v2721 = vsub.s32 %v2690, %v2720
    %v2722 = vrot.slane %v2678, %v2721
    %vm2723 = vcmask 1041409
    %v2724 = vsel %vm2723, %v2698, %v2694
    %vm2725 = vcmask 1042434
    %v2726 = vsel %vm2725, %v2702, %v2724
    %vm2727 = vcmask 1043459
    %v2728 = vsel %vm2727, %v2706, %v2726
    %vm2729 = vcmask 1044484
    %v2730 = vsel %vm2729, %v2710, %v2728
    %vm2731 = vcmask 1045509
    %v2732 = vsel %vm2731, %v2714, %v2730
    %vm2733 = vcmask 1046534
    %v2734 = vsel %vm2733, %v2718, %v2732
    %vm2735 = vcmask 1047559
    %v2736 = vsel %vm2735, %v2722, %v2734
    %v2738 = vsel %vm2680, %v2736, -1e+30
    %vm2739 = vcmask 31744
    %v2740 = vsel %vm2739, %v2738, -inf
    %v2741 = vrot.slane %v2740, 4
    %v2742 = vmax.f32 %v2740, %v2741
    %v2743 = vrot.slane %v2742, 2
    %v2744 = vmax.f32 %v2742, %v2743
    %v2745 = vrot.slane %v2744, 1
    %v2746 = vmax.f32 %v2744, %v2745
    %v2747 = vsub.f32 %v2738, %v2746
    %v2748 = vmul.f32 %v2747, 1.442695
    %v2749 = vpow.pop %v2748
    %v2750 = vsel %vm2739, %v2749, 0.0
    %v2751 = vrot.slane %v2750, 4
    %v2752 = vadd.f32 %v2750, %v2751
    %v2753 = vrot.slane %v2752, 2
    %v2754 = vadd.f32 %v2752, %v2753
    %v2755 = vrot.slane %v2754, 1
    %v2756 = vadd.f32 %v2754, %v2755
    %v2757 = vrcp.pop %v2756
    %v2758 = vmul.f32 %v2749, %v2757
    %v2759 = vlaneseq
    %v2760 = vshrl.u32 %v2759, 7
    %v2761 = vsub.s32 0, %v2760
    %v2762 = vrot.slane %v2758, %v2761
    %2764 = vbcast.lane.b32.xlu0 %v2762, 256
    %v2765 = vpop.permute.xlu0 %2764
    %v2766 = vlaneseq
    %v2767 = vshrl.u32 %v2766, 7
    %v2768 = vsub.s32 1, %v2767
    %v2769 = vrot.slane %v2758, %v2768
    %2771 = vbcast.lane.b32.xlu0 %v2769, 256
    %v2772 = vpop.permute.xlu0 %2771
    %v2773 = vlaneseq
    %v2774 = vshrl.u32 %v2773, 7
    %v2775 = vsub.s32 2, %v2774
    %v2776 = vrot.slane %v2758, %v2775
    %2778 = vbcast.lane.b32.xlu0 %v2776, 256
    %v2779 = vpop.permute.xlu0 %2778
    %v2780 = vlaneseq
    %v2781 = vshrl.u32 %v2780, 7
    %v2782 = vsub.s32 3, %v2781
    %v2783 = vrot.slane %v2758, %v2782
    %2785 = vbcast.lane.b32.xlu0 %v2783, 256
    %v2786 = vpop.permute.xlu0 %2785
    %v2787 = vlaneseq
    %v2788 = vshrl.u32 %v2787, 7
    %v2789 = vsub.s32 4, %v2788
    %v2790 = vrot.slane %v2758, %v2789
    %2792 = vbcast.lane.b32.xlu0 %v2790, 256
    %v2793 = vpop.permute.xlu0 %2792
    %v2794 = vlaneseq
    %v2795 = vshrl.u32 %v2794, 7
    %v2796 = vsub.s32 5, %v2795
    %v2797 = vrot.slane %v2758, %v2796
    %2799 = vbcast.lane.b32.xlu0 %v2797, 256
    %v2800 = vpop.permute.xlu0 %2799
    %v2801 = vlaneseq
    %v2802 = vshrl.u32 %v2801, 7
    %v2803 = vsub.s32 6, %v2802
    %v2804 = vrot.slane %v2758, %v2803
    %2806 = vbcast.lane.b32.xlu0 %v2804, 256
    %v2807 = vpop.permute.xlu0 %2806
    %v2808 = vlaneseq
    %v2809 = vshrl.u32 %v2808, 7
    %v2810 = vsub.s32 7, %v2809
    %v2811 = vrot.slane %v2758, %v2810
    %2813 = vbcast.lane.b32.xlu0 %v2811, 256
    %v2814 = vpop.permute.xlu0 %2813
    %v2815 = vadd.f32 %v2378, %v2386
    %v2816 = vadd.f32 %v2379, %v2387
    %v2817 = vadd.f32 %v2380, %v2388
    %v2818 = vadd.f32 %v2381, %v2389
    %v2819 = vadd.f32 %v2382, %v2390
    %v2820 = vadd.f32 %v2383, %v2391
    %v2821 = vadd.f32 %v2384, %v2392
    %v2822 = vadd.f32 %v2385, %v2393
    %v2823 = vmul.f32 %v2765, %v2815
    %v2824 = vmul.f32 %v2772, %v2816
    %v2825 = vmul.f32 %v2779, %v2817
    %v2826 = vmul.f32 %v2786, %v2818
    %v2827 = vmul.f32 %v2793, %v2819
    %v2828 = vmul.f32 %v2800, %v2820
    %v2829 = vmul.f32 %v2807, %v2821
    %v2830 = vmul.f32 %v2814, %v2822
    %v2831 = vsel %vm549, %v2823, 0.0
    %v2832 = vsel %vm549, %v2824, 0.0
    %v2833 = vadd.f32 %v2831, %v2832
    %v2834 = vsel %vm549, %v2825, 0.0
    %v2835 = vadd.f32 %v2833, %v2834
    %v2836 = vsel %vm549, %v2826, 0.0
    %v2837 = vadd.f32 %v2835, %v2836
    %v2838 = vsel %vm549, %v2827, 0.0
    %v2839 = vadd.f32 %v2837, %v2838
    %v2840 = vsel %vm549, %v2828, 0.0
    %v2841 = vadd.f32 %v2839, %v2840
    %v2842 = vsel %vm549, %v2829, 0.0
    %v2843 = vadd.f32 %v2841, %v2842
    %v2844 = vsel %vm549, %v2830, 0.0
    %v2845 = vadd.f32 %v2843, %v2844
    %2846 = vst.msk [vmem:[#allocation13] sm:$0xf] %vm549, %v2845
    %2847 = vxpose.xlu0.b32.start [1/16] %v2758, 128
    %2848 = vxpose.xlu0.b32.cont [2/16] 0.0, 128
    %2849 = vxpose.xlu0.b32.cont [3/16] 0.0, 128
    %2850 = vxpose.xlu0.b32.cont [4/16] 0.0, 128
    %2851 = vxpose.xlu0.b32.cont [5/16] 0.0, 128
    %2852 = vxpose.xlu0.b32.cont [6/16] 0.0, 128
    %2853 = vxpose.xlu0.b32.cont [7/16] 0.0, 128
    %2854 = vxpose.xlu0.b32.cont [8/16] 0.0, 128
    %2855 = vxpose.xlu0.b32.cont [9/16] 0.0, 128
    %2856 = vxpose.xlu0.b32.cont [10/16] 0.0, 128
    %2857 = vxpose.xlu0.b32.cont [11/16] 0.0, 128
    %2858 = vxpose.xlu0.b32.cont [12/16] 0.0, 128
    %2859 = vxpose.xlu0.b32.cont [13/16] 0.0, 128
    %2860 = vxpose.xlu0.b32.cont [14/16] 0.0, 128
    %2861 = vxpose.xlu0.b32.cont [15/16] 0.0, 128
    %2862 = vxpose.xlu0.b32.end [16/16] 0.0, 128
    %v2863 = vpop.trf.xlu0
    %v2864 = vpop.trf.xlu0
    %v2865 = vpop.trf.xlu0
    %v2866 = vpop.trf.xlu0
    %v2867 = vpop.trf.xlu0
    %v2868 = vpop.trf.xlu0
    %v2869 = vpop.trf.xlu0
    %v2870 = vpop.trf.xlu0
    %v2871 = vpop.trf.xlu0
    %v2872 = vpop.trf.xlu0
    %v2873 = vpop.trf.xlu0
    %v2874 = vpop.trf.xlu0
    %v2875 = vpop.trf.xlu0
    %v2876 = vpop.trf.xlu0
    %v2877 = vpop.trf.xlu0
    %v2878 = vpop.trf.xlu0
    %vm2879 = vcmask 60416
    %2880 = vst.msk [vmem:[#allocation14] sm:$0xf] %vm2879, %v2863
    // Predicated region
    $region70: #{tpu_custom_call.1} parent=1 // pred_check
      _
    $region71: #{tpu_custom_call.1} parent=1 // pred_check_branch
      %2882 = sbr.rel (0) target = $region73
    $region72: #{tpu_custom_call.1} parent=1 // pred_region
      %s2884 = ssub.s32 64, 64
      %2885 = vsyncadd [#allocation7], %s2884
      %s2887 = sshll.u32 [#allocation13], 4
      %s2888 = int_to_ptr.vmem [resolvable:$true] %s2887
      %2890 = dma.vmem_to_hbm [thread:$0]  %s2888, 64, %s13, [#allocation7]
    $region73: #{tpu_custom_call.1} parent=1 // pred_fallthru
      _
    // Predicated region
    $region74: #{tpu_custom_call.1} parent=1 // pred_check
      _
    $region75: #{tpu_custom_call.1} parent=1 // pred_check_branch
      %2892 = sbr.rel (0) target = $region77
    $region76: #{tpu_custom_call.1} parent=1 // pred_region
      %s2894 = ssub.s32 64, 64
      %2895 = vsyncadd [#allocation15], %s2894
      %s2897 = sshll.u32 [#allocation14], 4
      %s2898 = int_to_ptr.vmem [resolvable:$true] %s2897
      %2900 = dma.vmem_to_hbm [thread:$0]  %s2898, 64, %s14, [#allocation15]
    $region77: #{tpu_custom_call.1} parent=1 // pred_fallthru
      _
    // Predicated region
    $region78: #{tpu_custom_call.1} parent=1 // pred_check
      _
    $region79: #{tpu_custom_call.1} parent=1 // pred_check_branch
      %2902 = sbr.rel (0) target = $region81
    $region80: #{tpu_custom_call.1} parent=1 // pred_region
      %2903 = dma.done [#allocation7], 64
    $region81: #{tpu_custom_call.1} parent=1 // pred_fallthru
      _
    // Predicated region
    $region82: #{tpu_custom_call.1} parent=1 // pred_check
      _
    $region83: #{tpu_custom_call.1} parent=1 // pred_check_branch
      %2905 = sbr.rel (0) target = $region85
    $region84: #{tpu_custom_call.1} parent=1 // pred_region
      %2906 = dma.done [#allocation15], 64
    $region85: #{tpu_custom_call.1} parent=1 // pred_fallthru
      _
    %2907 = vsyncpa [#allocation6], 1
    %2908 = vsyncpa [#allocation9], 1
    %2909 = vsyncpa [#allocation12], 1
    %2910 = vsyncpa [#allocation7], 1
    %2911 = vsyncpa [#allocation15], 1

</llo_original>
